<compile_context>
chip_gen: v5e
topology: v5e:2x2
jax: 0.10.0
libtpu: 0.0.40
codegen_flags: <defaults>
</compile_context>

<pallas_src>
import functools

import jax
import jax.numpy as jnp
from jax.experimental import pallas as pl
from jax.experimental.pallas import tpu as pltpu

EPS = 1e-5          # PyTorch BatchNorm default eps
G = 32              # CIFAR spatial side -> "full grid" row layout r = b*G*G + h*G + w
CH = 128            # row-chunk size for every in-kernel pass
C1 = 8              # conv1 channels kept per row (6 real, padded to 8)
C2 = 16             # conv2 channels
KIN1 = 16           # packed conv1 LHS width: 5 horizontal taps * 3 ch = 15 -> 16
KIN2 = 48           # packed conv2 LHS width: 5 horizontal taps * 8 ch = 40 -> 48
NFC = 128           # lane-padded width for FC weights / logits

# Row padding beyond M = B*G*G (all multiples of CH), sized so every shifted
# read stays in bounds:
#   conv1 accumulate reads packed input at +32*i (i<5)      -> +128
#   pool1+pack pass reads act1 windows of 176 rows          -> +48
#   conv2 accumulate reads packed a1 at +64*i (i<5)         -> +256
#   pool2 pass reads act2 windows of 200 rows               -> +72
PAD_ACC2 = 128                 # act2 rows beyond M
PAD_OUT1 = PAD_ACC2 + 256      # = 384, packed-a1 rows beyond M
PAD_ACC1 = PAD_OUT1 + 128      # = 512, act1 rows beyond M (>= PAD_OUT1 + 48)
PAD_IN1 = PAD_ACC1 + 128       # = 640, packed-input rows beyond M


@functools.lru_cache(maxsize=None)
def _vmem_limit():
    # Leave headroom on v7x (64 MiB/core) while keeping a larger limit on
    # v5e/v6e (128 MiB/core).
    try:
        cap = pltpu.get_tpu_info().vmem_capacity_bytes
    except Exception:
        cap = 64 * 1024 * 1024
    return (int(cap) * 3) // 4


def _vmem():
    return pl.BlockSpec(memory_space=pltpu.MemorySpace.VMEM)


# ----------------------------- fused conv kernel ----------------------------

def _convnet_kernel(xp_ref, w1_ref, w2_ref, gb1_ref, gb2_ref, o_ref,
                    act1_ref, a1p_ref, act2_ref, *, batch):
    """conv1+bn1+relu+pool1 -> conv2+bn2+relu+pool2, all slabs VMEM resident.

    xp_ref:   (M+PAD_IN1, 16)  bf16  horizontally tap-packed input, full grid
    w1_ref:   (5, 16, 128)     bf16  conv1 per-vertical-tap packed weights
    w2_ref:   (5, 48, 128)     bf16  conv2 per-vertical-tap packed weights
    gb1_ref:  (2, 8)   f32           bn1 gamma / beta (zero padded)
    gb2_ref:  (2, 16)  f32           bn2 gamma / beta
    o_ref:    (M, 16)  bf16          pooled conv2 output, full-grid rows
    act1_ref: (M+PAD_ACC1, 8)  f32   scratch: masked conv1 pre-BN activations
    a1p_ref:  (M+PAD_OUT1, 48) bf16  scratch: pooled conv1, packed for conv2
    act2_ref: (M+PAD_ACC2, 16) f32   scratch: masked conv2 pre-BN activations
    """
    M = batch * G * G
    n_acc1 = M + PAD_ACC1
    n_out1 = M + PAD_OUT1
    n_acc2 = M + PAD_ACC2

    def row_coords(r0, width):
        r = r0 + jax.lax.broadcasted_iota(jnp.int32, (CH, width), 0)
        return r, (r >> 5) & (G - 1), r & (G - 1)

    def bn_affine(s, ss, gb_ref, inv_n):
        mean = s * inv_n
        var = jnp.maximum(ss * inv_n - mean * mean, 0.0)   # biased var (torch)
        scale = gb_ref[0:1, :] * jax.lax.rsqrt(var + EPS)
        shift = gb_ref[1:2, :] - mean * scale
        return scale, shift

    # -------- conv1: 5 tap-packed K=16 matmuls, value-carried accumulation --
    def conv1_chunk(c, carry):
        s, ss = carry
        r0 = pl.multiple_of(c * CH, CH)
        acc = jnp.dot(xp_ref[pl.ds(r0, CH), :], w1_ref[0],
                      preferred_element_type=jnp.float32)
        for i in range(1, 5):
            acc = acc + jnp.dot(xp_ref[pl.ds(r0 + 32 * i, CH), :], w1_ref[i],
                                preferred_element_type=jnp.float32)
        acc = acc[:, :C1]
        r, h, w = row_coords(r0, C1)
        acc = acc * ((r < M) & (h < 28) & (w < 28)).astype(jnp.float32)
        act1_ref[pl.ds(r0, CH), :] = acc                    # one store per chunk
        return (s + jnp.sum(acc, axis=0, keepdims=True),
                ss + jnp.sum(acc * acc, axis=0, keepdims=True))

    zero1 = jnp.zeros((1, C1), jnp.float32)
    s1, ss1 = jax.lax.fori_loop(0, n_acc1 // CH, conv1_chunk, (zero1, zero1))
    scale1, shift1 = bn_affine(s1, ss1, gb1_ref, 1.0 / (batch * 28 * 28))

    # -------- bn1 + relu + 2x2 maxpool + horizontal repack for conv2 --------
    def pool1_chunk(c, carry):
        r0 = pl.multiple_of(c * CH, CH)
        a = act1_ref[pl.ds(r0, CH + 48), :]
        a = jnp.maximum(a * scale1 + shift1, 0.0)
        n = CH + 8
        p = jnp.maximum(jnp.maximum(a[0:n], a[1:n + 1]),
                        jnp.maximum(a[32:n + 32], a[33:n + 33]))
        pieces = [p[2 * j:2 * j + CH, :] for j in range(5)]
        pieces.append(jnp.zeros((CH, KIN2 - 5 * C1), jnp.float32))
        a1p_ref[pl.ds(r0, CH), :] = (
            jnp.concatenate(pieces, axis=1).astype(jnp.bfloat16))
        return carry

    jax.lax.fori_loop(0, n_out1 // CH, pool1_chunk, 0)

    # -------- conv2 on the stride-2 subgrid: 5 tap-packed K=48 matmuls -------
    def conv2_chunk(c, carry):
        s, ss = carry
        r0 = pl.multiple_of(c * CH, CH)
        acc = jnp.dot(a1p_ref[pl.ds(r0, CH), :], w2_ref[0],
                      preferred_element_type=jnp.float32)
        for i in range(1, 5):
            acc = acc + jnp.dot(a1p_ref[pl.ds(r0 + 64 * i, CH), :], w2_ref[i],
                                preferred_element_type=jnp.float32)
        acc = acc[:, :C2]
        r, h, w = row_coords(r0, C2)
        valid = ((r < M) & (h < 20) & (w < 20)
                 & ((h & 1) == 0) & ((w & 1) == 0)).astype(jnp.float32)
        acc = acc * valid
        act2_ref[pl.ds(r0, CH), :] = acc
        return (s + jnp.sum(acc, axis=0, keepdims=True),
                ss + jnp.sum(acc * acc, axis=0, keepdims=True))

    zero2 = jnp.zeros((1, C2), jnp.float32)
    s2, ss2 = jax.lax.fori_loop(0, n_acc2 // CH, conv2_chunk, (zero2, zero2))
    scale2, shift2 = bn_affine(s2, ss2, gb2_ref, 1.0 / (batch * 10 * 10))

    # -------- bn2 + relu + 2x2 maxpool -> bf16 output slab -------------------
    def pool2_chunk(c, carry):
        r0 = pl.multiple_of(c * CH, CH)
        a = act2_ref[pl.ds(r0, CH + 72), :]
        a = jnp.maximum(a * scale2 + shift2, 0.0)
        p = jnp.maximum(jnp.maximum(a[0:CH], a[2:CH + 2]),
                        jnp.maximum(a[64:CH + 64], a[66:CH + 66]))
        o_ref[pl.ds(r0, CH), :] = p.astype(jnp.bfloat16)
        return carry

    jax.lax.fori_loop(0, M // CH, pool2_chunk, 0)


def _conv_stack(xp, w1p, w2p, gb1, gb2, batch):
    M = batch * G * G
    kernel = functools.partial(_convnet_kernel, batch=batch)
    return pl.pallas_call(
        kernel,
        out_shape=jax.ShapeDtypeStruct((M, C2), jnp.bfloat16),
        in_specs=[_vmem()] * 5,
        out_specs=_vmem(),
        scratch_shapes=[
            pltpu.VMEM((M + PAD_ACC1, C1), jnp.float32),
            pltpu.VMEM((M + PAD_OUT1, KIN2), jnp.bfloat16),
            pltpu.VMEM((M + PAD_ACC2, C2), jnp.float32),
        ],
        compiler_params=pltpu.CompilerParams(vmem_limit_bytes=_vmem_limit()),
    )(xp, w1p, w2p, gb1, gb2)


# ----------------------------- fused FC kernel ------------------------------

def _fc_kernel(x_ref, w1_ref, w2_ref, w3_ref, v_ref, o_ref, *, inv_b):
    """fc1+bn3+relu -> fc2+bn4+relu -> fc3(+bias); single-pass batch stats."""
    def bn_relu(y, g, b):
        mean = jnp.sum(y, axis=0, keepdims=True) * inv_b
        var = jnp.maximum(
            jnp.sum(y * y, axis=0, keepdims=True) * inv_b - mean * mean, 0.0)
        scale = g * jax.lax.rsqrt(var + EPS)
        return jnp.maximum(y * scale + (b - mean * scale), 0.0)

    h = jnp.dot(x_ref[...].astype(jnp.bfloat16), w1_ref[...],
                preferred_element_type=jnp.float32)
    h = bn_relu(h, v_ref[0:1, :], v_ref[1:2, :])
    h = jnp.dot(h.astype(jnp.bfloat16), w2_ref[...],
                preferred_element_type=jnp.float32)
    h = bn_relu(h, v_ref[2:3, :], v_ref[3:4, :])
    o_ref[...] = jnp.dot(h.astype(jnp.bfloat16), w3_ref[...],
                         preferred_element_type=jnp.float32) + v_ref[4:5, :]


def _fc_stack(feat, w1, w2, w3, vecs):
    b = feat.shape[0]
    kernel = functools.partial(_fc_kernel, inv_b=1.0 / b)
    return pl.pallas_call(
        kernel,
        out_shape=jax.ShapeDtypeStruct((b, NFC), jnp.float32),
        in_specs=[_vmem()] * 5,
        out_specs=_vmem(),
        compiler_params=pltpu.CompilerParams(vmem_limit_bytes=_vmem_limit()),
    )(feat, w1, w2, w3, vecs)


# ----------------------------- parameters -----------------------------------

def init_params(key):
    """PyTorch-layout parameters (conv: (Cout,Cin,K,K), fc: (out,in))."""
    ks = jax.random.split(key, 10)

    def w(k, shape, scale=0.1):
        return (scale * jax.random.normal(k, shape)).astype(jnp.float32)

    return {
        "conv1_w": w(ks[0], (6, 3, 5, 5)),
        "conv1_b": w(ks[1], (6,), 0.01),        # unused: cancelled by bn1
        "bn1_g": jnp.ones((6,), jnp.float32),
        "bn1_b": jnp.zeros((6,), jnp.float32),
        "conv2_w": w(ks[2], (16, 6, 5, 5)),
        "conv2_b": w(ks[3], (16,), 0.01),       # unused: cancelled by bn2
        "bn2_g": jnp.ones((16,), jnp.float32),
        "bn2_b": jnp.zeros((16,), jnp.float32),
        "fc1_w": w(ks[4], (120, 400)),
        "fc1_b": w(ks[5], (120,), 0.01),        # unused: cancelled by bn3
        "bn3_g": jnp.ones((120,), jnp.float32),
        "bn3_b": jnp.zeros((120,), jnp.float32),
        "fc2_w": w(ks[6], (84, 120)),
        "fc2_b": w(ks[7], (84,), 0.01),         # unused: cancelled by bn4
        "bn4_g": jnp.ones((84,), jnp.float32),
        "bn4_b": jnp.zeros((84,), jnp.float32),
        "fc3_w": w(ks[8], (10, 84)),
        "fc3_b": w(ks[9], (10,), 0.01),
    }


def prepare_params(p):
    """One-time conversion of PyTorch-layout params to kernel-ready layout."""
    def pad_to(a, shape):
        return jnp.pad(a, [(0, t - s) for s, t in zip(a.shape, shape)])

    # conv1: contraction lane j*3+c of vertical tap i holds torch_w[co, c, i, j]
    w1 = jnp.transpose(p["conv1_w"], (2, 3, 1, 0)).reshape(5, 15, 6)
    w1 = pad_to(w1, (5, KIN1, NFC)).astype(jnp.bfloat16)
    # conv2: contraction lane j*8+c of vertical tap i holds torch_w[co, c, i, j]
    w2 = jnp.transpose(p["conv2_w"], (2, 3, 1, 0))                 # (5,5,6,16)
    w2 = jnp.pad(w2, ((0, 0), (0, 0), (0, C1 - 6), (0, 0))).reshape(5, 5 * C1, 16)
    w2 = pad_to(w2, (5, KIN2, NFC)).astype(jnp.bfloat16)
    # fc1 columns reordered from torch's (c, h, w) flatten to our (h, w, c)
    fc1 = p["fc1_w"].reshape(120, 16, 5, 5).transpose(2, 3, 1, 0).reshape(400, 120)
    # packed small vectors for the FC kernel: [g3, b3, g4, b4, fc3_bias, 0, 0, 0]
    fcv = jnp.zeros((8, NFC), jnp.float32)
    fcv = fcv.at[0, :120].set(p["bn3_g"]).at[1, :120].set(p["bn3_b"])
    fcv = fcv.at[2, :84].set(p["bn4_g"]).at[3, :84].set(p["bn4_b"])
    fcv = fcv.at[4, :10].set(p["fc3_b"])
    # conv1_b / conv2_b / fc1_b / fc2_b are omitted on purpose: a per-channel
    # bias added right before batch-stat BatchNorm is exactly cancelled.
    return {
        "w1": w1,
        "w2": w2,
        "gb1": jnp.stack([pad_to(p["bn1_g"], (C1,)), pad_to(p["bn1_b"], (C1,))]),
        "gb2": jnp.stack([p["bn2_g"], p["bn2_b"]]),
        "fc1": pad_to(fc1, (400, NFC)).astype(jnp.bfloat16),
        "fc2": pad_to(p["fc2_w"].T, (NFC, NFC)).astype(jnp.bfloat16),
        "fc3": pad_to(p["fc3_w"].T, (NFC, NFC)).astype(jnp.bfloat16),
        "fcv": fcv,
    }


# ----------------------------- forward pass ---------------------------------

@jax.jit
def net_forward(prep, x):
    """x: (B, 3, 32, 32) NCHW float32 -> logits (B, 10)."""
    B = x.shape[0]
    assert B >= 2, "train-mode BatchNorm1d batch statistics need batch >= 2"
    M = B * G * G

    # Tiny one-time input repack (on the 32x32x3 input only): channels-last,
    # pack the 5 horizontal conv1 taps into the contraction lanes (j*3 + c),
    # flatten to full-grid rows, zero-pad rows so in-kernel row shifts stay in
    # bounds, and cast to bf16 ONCE (the kernel never re-casts slices).
    xh = jnp.transpose(x, (0, 2, 3, 1))                        # (B, 32, 32, 3)
    xh = jnp.pad(xh, ((0, 0), (0, 0), (0, 4), (0, 0)))         # pad W for w+j reads
    xp = jnp.concatenate([xh[:, :, j:j + G, :] for j in range(5)], axis=-1)
    xp = xp.reshape(M, 15)
    xp = jnp.pad(xp, ((0, PAD_IN1), (0, KIN1 - 15))).astype(jnp.bfloat16)

    # Single fused conv stack (conv1+bn1+relu+pool1 -> conv2+bn2+relu+pool2).
    a2 = _conv_stack(xp, prep["w1"], prep["w2"], prep["gb1"], prep["gb2"], B)

    # Valid pooled conv2 features live at (h, w) multiples of 4 below 20.
    feat = a2.reshape(B, G, G, C2)[:, 0:20:4, 0:20:4, :].reshape(B, 400)
    logits = _fc_stack(feat, prep["fc1"], prep["fc2"], prep["fc3"], prep["fcv"])
    return logits[:, :10]


# ----------------------------- main ------------------------------------------

if __name__ == "__main__":
    key = jax.random.PRNGKey(0)
    k_params, k_x = jax.random.split(key)
    params = init_params(k_params)
    prep = prepare_params(params)      # one-time weight repack (outside jit)

    # CIFAR-shaped input is required by the 16*5*5 flatten in the module.
    x = jax.random.normal(k_x, (4, 3, 32, 32), dtype=jnp.float32)

    out = net_forward(prep, x)
    out = jax.block_until_ready(out)
    assert out.shape == (4, 10), out.shape
    print("KERNEL_OK")
</pallas_src>

<mosaic_0001>
module attributes {stable_mosaic.version = 11 : i64} {
  func.func @_convnet_kernel(%arg0: memref<4736x16xbf16, #tpu.memory_space<vmem>>, %arg1: memref<5x16x128xbf16, #tpu.memory_space<vmem>>, %arg2: memref<5x48x128xbf16, #tpu.memory_space<vmem>>, %arg3: memref<2x8xf32, #tpu.memory_space<vmem>>, %arg4: memref<2x16xf32, #tpu.memory_space<vmem>>, %arg5: memref<4096x16xbf16, #tpu.memory_space<vmem>>, %arg6: memref<4608x8xf32, #tpu.memory_space<vmem>>, %arg7: memref<4480x48xbf16, #tpu.memory_space<vmem>>, %arg8: memref<4224x16xf32, #tpu.memory_space<vmem>>) attributes {dimension_semantics = [], scalar_prefetch = 0 : i64, scratch_operands = 3 : i64, tpu.core_type = #tpu.core_type<tc>} {
    %cst = arith.constant 0.000000e+00 : f32
    %0 = vector.broadcast %cst : f32 to vector<1x8xf32>
    %c0_i32 = arith.constant 0 : i32
    %c36_i32 = arith.constant 36 : i32
    %1 = arith.addi %c0_i32, %c36_i32 : i32
    %c1_i32 = arith.constant 1 : i32
    %2:2 = scf.for %arg9 = %c0_i32 to %1 step %c1_i32 iter_args(%arg10 = %0, %arg11 = %0) -> (vector<1x8xf32>, vector<1x8xf32>)  : i32 {
      %c128_i32 = arith.constant 128 : i32
      %40 = arith.muli %arg9, %c128_i32 : i32
      %41 = tpu.assume_multiple %40, 128 : i32
      %42 = arith.index_cast %41 : i32 to index
      %c0_25 = arith.constant 0 : index
      %43 = vector.load %arg0[%42, %c0_25] : memref<4736x16xbf16, #tpu.memory_space<vmem>>, vector<128x16xbf16>
      %c0_26 = arith.constant 0 : index
      %c0_27 = arith.constant 0 : index
      %c0_28 = arith.constant 0 : index
      %44 = vector.load %arg1[%c0_26, %c0_27, %c0_28] : memref<5x16x128xbf16, #tpu.memory_space<vmem>>, vector<1x16x128xbf16>
      %45 = vector.shape_cast %44 : vector<1x16x128xbf16> to vector<16x128xbf16>
      %cst_29 = arith.constant dense<0.000000e+00> : vector<128x128xf32>
      %46 = tpu.matmul %43, %45, %cst_29 {dimension_numbers = #tpu.dot_dimension_numbers<[1], [0], [0], [1], [0, 0, 1, 1], [], []>} : vector<128x16xbf16>, vector<16x128xbf16>, vector<128x128xf32> -> vector<128x128xf32>
      %c32_i32_30 = arith.constant 32 : i32
      %47 = arith.addi %41, %c32_i32_30 : i32
      %48 = arith.index_cast %47 : i32 to index
      %c0_31 = arith.constant 0 : index
      %49 = vector.load %arg0[%48, %c0_31] : memref<4736x16xbf16, #tpu.memory_space<vmem>>, vector<128x16xbf16>
      %c1_32 = arith.constant 1 : index
      %c0_33 = arith.constant 0 : index
      %c0_34 = arith.constant 0 : index
      %50 = vector.load %arg1[%c1_32, %c0_33, %c0_34] : memref<5x16x128xbf16, #tpu.memory_space<vmem>>, vector<1x16x128xbf16>
      %51 = vector.shape_cast %50 : vector<1x16x128xbf16> to vector<16x128xbf16>
      %cst_35 = arith.constant dense<0.000000e+00> : vector<128x128xf32>
      %52 = tpu.matmul %49, %51, %cst_35 {dimension_numbers = #tpu.dot_dimension_numbers<[1], [0], [0], [1], [0, 0, 1, 1], [], []>} : vector<128x16xbf16>, vector<16x128xbf16>, vector<128x128xf32> -> vector<128x128xf32>
      %53 = arith.addf %46, %52 : vector<128x128xf32>
      %c64_i32 = arith.constant 64 : i32
      %54 = arith.addi %41, %c64_i32 : i32
      %55 = arith.index_cast %54 : i32 to index
      %c0_36 = arith.constant 0 : index
      %56 = vector.load %arg0[%55, %c0_36] : memref<4736x16xbf16, #tpu.memory_space<vmem>>, vector<128x16xbf16>
      %c2 = arith.constant 2 : index
      %c0_37 = arith.constant 0 : index
      %c0_38 = arith.constant 0 : index
      %57 = vector.load %arg1[%c2, %c0_37, %c0_38] : memref<5x16x128xbf16, #tpu.memory_space<vmem>>, vector<1x16x128xbf16>
      %58 = vector.shape_cast %57 : vector<1x16x128xbf16> to vector<16x128xbf16>
      %cst_39 = arith.constant dense<0.000000e+00> : vector<128x128xf32>
      %59 = tpu.matmul %56, %58, %cst_39 {dimension_numbers = #tpu.dot_dimension_numbers<[1], [0], [0], [1], [0, 0, 1, 1], [], []>} : vector<128x16xbf16>, vector<16x128xbf16>, vector<128x128xf32> -> vector<128x128xf32>
      %60 = arith.addf %53, %59 : vector<128x128xf32>
      %c96_i32 = arith.constant 96 : i32
      %61 = arith.addi %41, %c96_i32 : i32
      %62 = arith.index_cast %61 : i32 to index
      %c0_40 = arith.constant 0 : index
      %63 = vector.load %arg0[%62, %c0_40] : memref<4736x16xbf16, #tpu.memory_space<vmem>>, vector<128x16xbf16>
      %c3 = arith.constant 3 : index
      %c0_41 = arith.constant 0 : index
      %c0_42 = arith.constant 0 : index
      %64 = vector.load %arg1[%c3, %c0_41, %c0_42] : memref<5x16x128xbf16, #tpu.memory_space<vmem>>, vector<1x16x128xbf16>
      %65 = vector.shape_cast %64 : vector<1x16x128xbf16> to vector<16x128xbf16>
      %cst_43 = arith.constant dense<0.000000e+00> : vector<128x128xf32>
      %66 = tpu.matmul %63, %65, %cst_43 {dimension_numbers = #tpu.dot_dimension_numbers<[1], [0], [0], [1], [0, 0, 1, 1], [], []>} : vector<128x16xbf16>, vector<16x128xbf16>, vector<128x128xf32> -> vector<128x128xf32>
      %67 = arith.addf %60, %66 : vector<128x128xf32>
      %c128_i32_44 = arith.constant 128 : i32
      %68 = arith.addi %41, %c128_i32_44 : i32
      %69 = arith.index_cast %68 : i32 to index
      %c0_45 = arith.constant 0 : index
      %70 = vector.load %arg0[%69, %c0_45] : memref<4736x16xbf16, #tpu.memory_space<vmem>>, vector<128x16xbf16>
      %c4 = arith.constant 4 : index
      %c0_46 = arith.constant 0 : index
      %c0_47 = arith.constant 0 : index
      %71 = vector.load %arg1[%c4, %c0_46, %c0_47] : memref<5x16x128xbf16, #tpu.memory_space<vmem>>, vector<1x16x128xbf16>
      %72 = vector.shape_cast %71 : vector<1x16x128xbf16> to vector<16x128xbf16>
      %cst_48 = arith.constant dense<0.000000e+00> : vector<128x128xf32>
      %73 = tpu.matmul %70, %72, %cst_48 {dimension_numbers = #tpu.dot_dimension_numbers<[1], [0], [0], [1], [0, 0, 1, 1], [], []>} : vector<128x16xbf16>, vector<16x128xbf16>, vector<128x128xf32> -> vector<128x128xf32>
      %74 = arith.addf %67, %73 : vector<128x128xf32>
      %75 = vector.extract_strided_slice %74 {offsets = [0, 0], sizes = [128, 8], strides = [1, 1]} : vector<128x128xf32> to vector<128x8xf32>
      %76 = tpu.iota {dimensions = array<i32: 0>} : vector<128x8xi32>
      %77 = vector.broadcast %41 : i32 to vector<128x8xi32>
      %78 = arith.addi %77, %76 : vector<128x8xi32>
      %c5_i32 = arith.constant 5 : i32
      %79 = vector.broadcast %c5_i32 : i32 to vector<128x8xi32>
      %80 = arith.shrsi %78, %79 : vector<128x8xi32>
      %c31_i32 = arith.constant 31 : i32
      %81 = vector.broadcast %c31_i32 : i32 to vector<128x8xi32>
      %82 = arith.andi %80, %81 : vector<128x8xi32>
      %c31_i32_49 = arith.constant 31 : i32
      %83 = vector.broadcast %c31_i32_49 : i32 to vector<128x8xi32>
      %84 = arith.andi %78, %83 : vector<128x8xi32>
      %c4096_i32 = arith.constant 4096 : i32
      %85 = vector.broadcast %c4096_i32 : i32 to vector<128x8xi32>
      %86 = arith.cmpi slt, %78, %85 : vector<128x8xi32>
      %c28_i32 = arith.constant 28 : i32
      %87 = vector.broadcast %c28_i32 : i32 to vector<128x8xi32>
      %88 = arith.cmpi slt, %82, %87 : vector<128x8xi32>
      %89 = arith.andi %86, %88 : vector<128x8xi1>
      %c28_i32_50 = arith.constant 28 : i32
      %90 = vector.broadcast %c28_i32_50 : i32 to vector<128x8xi32>
      %91 = arith.cmpi slt, %84, %90 : vector<128x8xi32>
      %92 = arith.andi %89, %91 : vector<128x8xi1>
      %93 = arith.extui %92 : vector<128x8xi1> to vector<128x8xi32>
      %94 = arith.sitofp %93 : vector<128x8xi32> to vector<128x8xf32>
      %95 = arith.mulf %75, %94 : vector<128x8xf32>
      %96 = arith.index_cast %41 : i32 to index
      %c0_51 = arith.constant 0 : index
      %97 = vector.load %arg6[%96, %c0_51] : memref<4608x8xf32, #tpu.memory_space<vmem>>, vector<128x8xf32>
      tpu.vector_store %arg6[%96, %c0_51], %95 {strides = array<i32>} : memref<4608x8xf32, #tpu.memory_space<vmem>>, vector<128x8xf32>,
      %cst_52 = arith.constant dense<0.000000e+00> : vector<8xf32>
      %98 = vector.multi_reduction <add>, %95, %cst_52 [0] : vector<128x8xf32> to vector<8xf32>
      %99 = vector.shape_cast %98 : vector<8xf32> to vector<1x8xf32>
      %100 = arith.addf %arg10, %99 : vector<1x8xf32>
      %101 = arith.mulf %95, %95 : vector<128x8xf32>
      %cst_53 = arith.constant dense<0.000000e+00> : vector<8xf32>
      %102 = vector.multi_reduction <add>, %101, %cst_53 [0] : vector<128x8xf32> to vector<8xf32>
      %103 = vector.shape_cast %102 : vector<8xf32> to vector<1x8xf32>
      %104 = arith.addf %arg11, %103 : vector<1x8xf32>
      scf.yield %100, %104 : vector<1x8xf32>, vector<1x8xf32>
    }
    %c36_i32_0 = arith.constant 36 : i32
    %cst_1 = arith.constant 3.18877544E-4 : f32
    %3 = vector.broadcast %cst_1 : f32 to vector<1x8xf32>
    %4 = arith.mulf %2#0, %3 : vector<1x8xf32>
    %cst_2 = arith.constant 3.18877544E-4 : f32
    %5 = vector.broadcast %cst_2 : f32 to vector<1x8xf32>
    %6 = arith.mulf %2#1, %5 : vector<1x8xf32>
    %7 = arith.mulf %4, %4 : vector<1x8xf32>
    %8 = arith.subf %6, %7 : vector<1x8xf32>
    %cst_3 = arith.constant 0.000000e+00 : f32
    %9 = vector.broadcast %cst_3 : f32 to vector<1x8xf32>
    %10 = arith.maximumf %8, %9 : vector<1x8xf32>
    %c0 = arith.constant 0 : index
    %c0_4 = arith.constant 0 : index
    %11 = vector.load %arg3[%c0, %c0_4] : memref<2x8xf32, #tpu.memory_space<vmem>>, vector<1x8xf32>
    %cst_5 = arith.constant 9.99999974E-6 : f32
    %12 = vector.broadcast %cst_5 : f32 to vector<1x8xf32>
    %13 = arith.addf %10, %12 : vector<1x8xf32>
    %14 = math.rsqrt %13 : vector<1x8xf32>
    %15 = arith.mulf %11, %14 : vector<1x8xf32>
    %c1 = arith.constant 1 : index
    %c0_6 = arith.constant 0 : index
    %16 = vector.load %arg3[%c1, %c0_6] : memref<2x8xf32, #tpu.memory_space<vmem>>, vector<1x8xf32>
    %17 = arith.mulf %4, %15 : vector<1x8xf32>
    %18 = arith.subf %16, %17 : vector<1x8xf32>
    %c0_i32_7 = arith.constant 0 : i32
    %c35_i32 = arith.constant 35 : i32
    %19 = arith.addi %c0_i32_7, %c35_i32 : i32
    %c1_i32_8 = arith.constant 1 : i32
    scf.for %arg9 = %c0_i32_7 to %19 step %c1_i32_8  : i32 {
      %c128_i32 = arith.constant 128 : i32
      %40 = arith.muli %arg9, %c128_i32 : i32
      %41 = tpu.assume_multiple %40, 128 : i32
      %42 = arith.index_cast %41 : i32 to index
      %c0_25 = arith.constant 0 : index
      %43 = vector.load %arg6[%42, %c0_25] : memref<4608x8xf32, #tpu.memory_space<vmem>>, vector<176x8xf32>
      %44 = vector.broadcast %15 : vector<1x8xf32> to vector<176x8xf32>
      %45 = arith.mulf %43, %44 : vector<176x8xf32>
      %46 = vector.broadcast %18 : vector<1x8xf32> to vector<176x8xf32>
      %47 = arith.addf %45, %46 : vector<176x8xf32>
      %cst_26 = arith.constant 0.000000e+00 : f32
      %48 = vector.broadcast %cst_26 : f32 to vector<176x8xf32>
      %49 = arith.maximumf %47, %48 : vector<176x8xf32>
      %50 = vector.extract_strided_slice %49 {offsets = [0, 0], sizes = [136, 8], strides = [1, 1]} : vector<176x8xf32> to vector<136x8xf32>
      %51 = vector.extract_strided_slice %49 {offsets = [1, 0], sizes = [136, 8], strides = [1, 1]} : vector<176x8xf32> to vector<136x8xf32>
      %52 = arith.maximumf %50, %51 : vector<136x8xf32>
      %53 = vector.extract_strided_slice %49 {offsets = [32, 0], sizes = [136, 8], strides = [1, 1]} : vector<176x8xf32> to vector<136x8xf32>
      %54 = vector.extract_strided_slice %49 {offsets = [33, 0], sizes = [136, 8], strides = [1, 1]} : vector<176x8xf32> to vector<136x8xf32>
      %55 = arith.maximumf %53, %54 : vector<136x8xf32>
      %56 = arith.maximumf %52, %55 : vector<136x8xf32>
      %57 = vector.extract_strided_slice %56 {offsets = [0, 0], sizes = [128, 8], strides = [1, 1]} : vector<136x8xf32> to vector<128x8xf32>
      %58 = vector.extract_strided_slice %56 {offsets = [2, 0], sizes = [128, 8], strides = [1, 1]} : vector<136x8xf32> to vector<128x8xf32>
      %59 = vector.extract_strided_slice %56 {offsets = [4, 0], sizes = [128, 8], strides = [1, 1]} : vector<136x8xf32> to vector<128x8xf32>
      %60 = vector.extract_strided_slice %56 {offsets = [6, 0], sizes = [128, 8], strides = [1, 1]} : vector<136x8xf32> to vector<128x8xf32>
      %61 = vector.extract_strided_slice %56 {offsets = [8, 0], sizes = [128, 8], strides = [1, 1]} : vector<136x8xf32> to vector<128x8xf32>
      %cst_27 = arith.constant 0.000000e+00 : f32
      %62 = vector.broadcast %cst_27 : f32 to vector<128x8xf32>
      %63 = tpu.concatenate %57, %58, %59, %60, %61, %62 in 1 : vector<128x8xf32>, vector<128x8xf32>, vector<128x8xf32>, vector<128x8xf32>, vector<128x8xf32>, vector<128x8xf32> -> vector<128x48xf32>
      %64 = arith.truncf %63 : vector<128x48xf32> to vector<128x48xbf16>
      %65 = arith.index_cast %41 : i32 to index
      %c0_28 = arith.constant 0 : index
      %66 = vector.load %arg7[%65, %c0_28] : memref<4480x48xbf16, #tpu.memory_space<vmem>>, vector<128x48xbf16>
      tpu.vector_store %arg7[%65, %c0_28], %64 {strides = array<i32>} : memref<4480x48xbf16, #tpu.memory_space<vmem>>, vector<128x48xbf16>,
    }
    %c35_i32_9 = arith.constant 35 : i32
    %cst_10 = arith.constant 0.000000e+00 : f32
    %20 = vector.broadcast %cst_10 : f32 to vector<1x16xf32>
    %c0_i32_11 = arith.constant 0 : i32
    %c33_i32 = arith.constant 33 : i32
    %21 = arith.addi %c0_i32_11, %c33_i32 : i32
    %c1_i32_12 = arith.constant 1 : i32
    %22:2 = scf.for %arg9 = %c0_i32_11 to %21 step %c1_i32_12 iter_args(%arg10 = %20, %arg11 = %20) -> (vector<1x16xf32>, vector<1x16xf32>)  : i32 {
      %c128_i32 = arith.constant 128 : i32
      %40 = arith.muli %arg9, %c128_i32 : i32
      %41 = tpu.assume_multiple %40, 128 : i32
      %42 = arith.index_cast %41 : i32 to index
      %c0_25 = arith.constant 0 : index
      %43 = vector.load %arg7[%42, %c0_25] : memref<4480x48xbf16, #tpu.memory_space<vmem>>, vector<128x48xbf16>
      %c0_26 = arith.constant 0 : index
      %c0_27 = arith.constant 0 : index
      %c0_28 = arith.constant 0 : index
      %44 = vector.load %arg2[%c0_26, %c0_27, %c0_28] : memref<5x48x128xbf16, #tpu.memory_space<vmem>>, vector<1x48x128xbf16>
      %45 = vector.shape_cast %44 : vector<1x48x128xbf16> to vector<48x128xbf16>
      %cst_29 = arith.constant dense<0.000000e+00> : vector<128x128xf32>
      %46 = tpu.matmul %43, %45, %cst_29 {dimension_numbers = #tpu.dot_dimension_numbers<[1], [0], [0], [1], [0, 0, 1, 1], [], []>} : vector<128x48xbf16>, vector<48x128xbf16>, vector<128x128xf32> -> vector<128x128xf32>
      %c64_i32 = arith.constant 64 : i32
      %47 = arith.addi %41, %c64_i32 : i32
      %48 = arith.index_cast %47 : i32 to index
      %c0_30 = arith.constant 0 : index
      %49 = vector.load %arg7[%48, %c0_30] : memref<4480x48xbf16, #tpu.memory_space<vmem>>, vector<128x48xbf16>
      %c1_31 = arith.constant 1 : index
      %c0_32 = arith.constant 0 : index
      %c0_33 = arith.constant 0 : index
      %50 = vector.load %arg2[%c1_31, %c0_32, %c0_33] : memref<5x48x128xbf16, #tpu.memory_space<vmem>>, vector<1x48x128xbf16>
      %51 = vector.shape_cast %50 : vector<1x48x128xbf16> to vector<48x128xbf16>
      %cst_34 = arith.constant dense<0.000000e+00> : vector<128x128xf32>
      %52 = tpu.matmul %49, %51, %cst_34 {dimension_numbers = #tpu.dot_dimension_numbers<[1], [0], [0], [1], [0, 0, 1, 1], [], []>} : vector<128x48xbf16>, vector<48x128xbf16>, vector<128x128xf32> -> vector<128x128xf32>
      %53 = arith.addf %46, %52 : vector<128x128xf32>
      %c128_i32_35 = arith.constant 128 : i32
      %54 = arith.addi %41, %c128_i32_35 : i32
      %55 = arith.index_cast %54 : i32 to index
      %c0_36 = arith.constant 0 : index
      %56 = vector.load %arg7[%55, %c0_36] : memref<4480x48xbf16, #tpu.memory_space<vmem>>, vector<128x48xbf16>
      %c2 = arith.constant 2 : index
      %c0_37 = arith.constant 0 : index
      %c0_38 = arith.constant 0 : index
      %57 = vector.load %arg2[%c2, %c0_37, %c0_38] : memref<5x48x128xbf16, #tpu.memory_space<vmem>>, vector<1x48x128xbf16>
      %58 = vector.shape_cast %57 : vector<1x48x128xbf16> to vector<48x128xbf16>
      %cst_39 = arith.constant dense<0.000000e+00> : vector<128x128xf32>
      %59 = tpu.matmul %56, %58, %cst_39 {dimension_numbers = #tpu.dot_dimension_numbers<[1], [0], [0], [1], [0, 0, 1, 1], [], []>} : vector<128x48xbf16>, vector<48x128xbf16>, vector<128x128xf32> -> vector<128x128xf32>
      %60 = arith.addf %53, %59 : vector<128x128xf32>
      %c192_i32 = arith.constant 192 : i32
      %61 = arith.addi %41, %c192_i32 : i32
      %62 = arith.index_cast %61 : i32 to index
      %c0_40 = arith.constant 0 : index
      %63 = vector.load %arg7[%62, %c0_40] : memref<4480x48xbf16, #tpu.memory_space<vmem>>, vector<128x48xbf16>
      %c3 = arith.constant 3 : index
      %c0_41 = arith.constant 0 : index
      %c0_42 = arith.constant 0 : index
      %64 = vector.load %arg2[%c3, %c0_41, %c0_42] : memref<5x48x128xbf16, #tpu.memory_space<vmem>>, vector<1x48x128xbf16>
      %65 = vector.shape_cast %64 : vector<1x48x128xbf16> to vector<48x128xbf16>
      %cst_43 = arith.constant dense<0.000000e+00> : vector<128x128xf32>
      %66 = tpu.matmul %63, %65, %cst_43 {dimension_numbers = #tpu.dot_dimension_numbers<[1], [0], [0], [1], [0, 0, 1, 1], [], []>} : vector<128x48xbf16>, vector<48x128xbf16>, vector<128x128xf32> -> vector<128x128xf32>
      %67 = arith.addf %60, %66 : vector<128x128xf32>
      %c256_i32 = arith.constant 256 : i32
      %68 = arith.addi %41, %c256_i32 : i32
      %69 = arith.index_cast %68 : i32 to index
      %c0_44 = arith.constant 0 : index
      %70 = vector.load %arg7[%69, %c0_44] : memref<4480x48xbf16, #tpu.memory_space<vmem>>, vector<128x48xbf16>
      %c4 = arith.constant 4 : index
      %c0_45 = arith.constant 0 : index
      %c0_46 = arith.constant 0 : index
      %71 = vector.load %arg2[%c4, %c0_45, %c0_46] : memref<5x48x128xbf16, #tpu.memory_space<vmem>>, vector<1x48x128xbf16>
      %72 = vector.shape_cast %71 : vector<1x48x128xbf16> to vector<48x128xbf16>
      %cst_47 = arith.constant dense<0.000000e+00> : vector<128x128xf32>
      %73 = tpu.matmul %70, %72, %cst_47 {dimension_numbers = #tpu.dot_dimension_numbers<[1], [0], [0], [1], [0, 0, 1, 1], [], []>} : vector<128x48xbf16>, vector<48x128xbf16>, vector<128x128xf32> -> vector<128x128xf32>
      %74 = arith.addf %67, %73 : vector<128x128xf32>
      %75 = vector.extract_strided_slice %74 {offsets = [0, 0], sizes = [128, 16], strides = [1, 1]} : vector<128x128xf32> to vector<128x16xf32>
      %76 = tpu.iota {dimensions = array<i32: 0>} : vector<128x16xi32>
      %77 = vector.broadcast %41 : i32 to vector<128x16xi32>
      %78 = arith.addi %77, %76 : vector<128x16xi32>
      %c5_i32 = arith.constant 5 : i32
      %79 = vector.broadcast %c5_i32 : i32 to vector<128x16xi32>
      %80 = arith.shrsi %78, %79 : vector<128x16xi32>
      %c31_i32 = arith.constant 31 : i32
      %81 = vector.broadcast %c31_i32 : i32 to vector<128x16xi32>
      %82 = arith.andi %80, %81 : vector<128x16xi32>
      %c31_i32_48 = arith.constant 31 : i32
      %83 = vector.broadcast %c31_i32_48 : i32 to vector<128x16xi32>
      %84 = arith.andi %78, %83 : vector<128x16xi32>
      %c4096_i32 = arith.constant 4096 : i32
      %85 = vector.broadcast %c4096_i32 : i32 to vector<128x16xi32>
      %86 = arith.cmpi slt, %78, %85 : vector<128x16xi32>
      %c20_i32 = arith.constant 20 : i32
      %87 = vector.broadcast %c20_i32 : i32 to vector<128x16xi32>
      %88 = arith.cmpi slt, %82, %87 : vector<128x16xi32>
      %89 = arith.andi %86, %88 : vector<128x16xi1>
      %c20_i32_49 = arith.constant 20 : i32
      %90 = vector.broadcast %c20_i32_49 : i32 to vector<128x16xi32>
      %91 = arith.cmpi slt, %84, %90 : vector<128x16xi32>
      %92 = arith.andi %89, %91 : vector<128x16xi1>
      %c1_i32_50 = arith.constant 1 : i32
      %93 = vector.broadcast %c1_i32_50 : i32 to vector<128x16xi32>
      %94 = arith.andi %82, %93 : vector<128x16xi32>
      %c0_i32_51 = arith.constant 0 : i32
      %95 = vector.broadcast %c0_i32_51 : i32 to vector<128x16xi32>
      %96 = arith.cmpi eq, %94, %95 : vector<128x16xi32>
      %97 = arith.andi %92, %96 : vector<128x16xi1>
      %c1_i32_52 = arith.constant 1 : i32
      %98 = vector.broadcast %c1_i32_52 : i32 to vector<128x16xi32>
      %99 = arith.andi %84, %98 : vector<128x16xi32>
      %c0_i32_53 = arith.constant 0 : i32
      %100 = vector.broadcast %c0_i32_53 : i32 to vector<128x16xi32>
      %101 = arith.cmpi eq, %99, %100 : vector<128x16xi32>
      %102 = arith.andi %97, %101 : vector<128x16xi1>
      %103 = arith.extui %102 : vector<128x16xi1> to vector<128x16xi32>
      %104 = arith.sitofp %103 : vector<128x16xi32> to vector<128x16xf32>
      %105 = arith.mulf %75, %104 : vector<128x16xf32>
      %106 = arith.index_cast %41 : i32 to index
      %c0_54 = arith.constant 0 : index
      %107 = vector.load %arg8[%106, %c0_54] : memref<4224x16xf32, #tpu.memory_space<vmem>>, vector<128x16xf32>
      tpu.vector_store %arg8[%106, %c0_54], %105 {strides = array<i32>} : memref<4224x16xf32, #tpu.memory_space<vmem>>, vector<128x16xf32>,
      %cst_55 = arith.constant dense<0.000000e+00> : vector<16xf32>
      %108 = vector.multi_reduction <add>, %105, %cst_55 [0] : vector<128x16xf32> to vector<16xf32>
      %109 = vector.shape_cast %108 : vector<16xf32> to vector<1x16xf32>
      %110 = arith.addf %arg10, %109 : vector<1x16xf32>
      %111 = arith.mulf %105, %105 : vector<128x16xf32>
      %cst_56 = arith.constant dense<0.000000e+00> : vector<16xf32>
      %112 = vector.multi_reduction <add>, %111, %cst_56 [0] : vector<128x16xf32> to vector<16xf32>
      %113 = vector.shape_cast %112 : vector<16xf32> to vector<1x16xf32>
      %114 = arith.addf %arg11, %113 : vector<1x16xf32>
      scf.yield %110, %114 : vector<1x16xf32>, vector<1x16xf32>
    }
    %c33_i32_13 = arith.constant 33 : i32
    %cst_14 = arith.constant 2.500000e-03 : f32
    %23 = vector.broadcast %cst_14 : f32 to vector<1x16xf32>
    %24 = arith.mulf %22#0, %23 : vector<1x16xf32>
    %cst_15 = arith.constant 2.500000e-03 : f32
    %25 = vector.broadcast %cst_15 : f32 to vector<1x16xf32>
    %26 = arith.mulf %22#1, %25 : vector<1x16xf32>
    %27 = arith.mulf %24, %24 : vector<1x16xf32>
    %28 = arith.subf %26, %27 : vector<1x16xf32>
    %cst_16 = arith.constant 0.000000e+00 : f32
    %29 = vector.broadcast %cst_16 : f32 to vector<1x16xf32>
    %30 = arith.maximumf %28, %29 : vector<1x16xf32>
    %c0_17 = arith.constant 0 : index
    %c0_18 = arith.constant 0 : index
    %31 = vector.load %arg4[%c0_17, %c0_18] : memref<2x16xf32, #tpu.memory_space<vmem>>, vector<1x16xf32>
    %cst_19 = arith.constant 9.99999974E-6 : f32
    %32 = vector.broadcast %cst_19 : f32 to vector<1x16xf32>
    %33 = arith.addf %30, %32 : vector<1x16xf32>
    %34 = math.rsqrt %33 : vector<1x16xf32>
    %35 = arith.mulf %31, %34 : vector<1x16xf32>
    %c1_20 = arith.constant 1 : index
    %c0_21 = arith.constant 0 : index
    %36 = vector.load %arg4[%c1_20, %c0_21] : memref<2x16xf32, #tpu.memory_space<vmem>>, vector<1x16xf32>
    %37 = arith.mulf %24, %35 : vector<1x16xf32>
    %38 = arith.subf %36, %37 : vector<1x16xf32>
    %c0_i32_22 = arith.constant 0 : i32
    %c32_i32 = arith.constant 32 : i32
    %39 = arith.addi %c0_i32_22, %c32_i32 : i32
    %c1_i32_23 = arith.constant 1 : i32
    scf.for %arg9 = %c0_i32_22 to %39 step %c1_i32_23  : i32 {
      %c128_i32 = arith.constant 128 : i32
      %40 = arith.muli %arg9, %c128_i32 : i32
      %41 = tpu.assume_multiple %40, 128 : i32
      %42 = arith.index_cast %41 : i32 to index
      %c0_25 = arith.constant 0 : index
      %43 = vector.load %arg8[%42, %c0_25] : memref<4224x16xf32, #tpu.memory_space<vmem>>, vector<200x16xf32>
      %44 = vector.broadcast %35 : vector<1x16xf32> to vector<200x16xf32>
      %45 = arith.mulf %43, %44 : vector<200x16xf32>
      %46 = vector.broadcast %38 : vector<1x16xf32> to vector<200x16xf32>
      %47 = arith.addf %45, %46 : vector<200x16xf32>
      %cst_26 = arith.constant 0.000000e+00 : f32
      %48 = vector.broadcast %cst_26 : f32 to vector<200x16xf32>
      %49 = arith.maximumf %47, %48 : vector<200x16xf32>
      %50 = vector.extract_strided_slice %49 {offsets = [0, 0], sizes = [128, 16], strides = [1, 1]} : vector<200x16xf32> to vector<128x16xf32>
      %51 = vector.extract_strided_slice %49 {offsets = [2, 0], sizes = [128, 16], strides = [1, 1]} : vector<200x16xf32> to vector<128x16xf32>
      %52 = arith.maximumf %50, %51 : vector<128x16xf32>
      %53 = vector.extract_strided_slice %49 {offsets = [64, 0], sizes = [128, 16], strides = [1, 1]} : vector<200x16xf32> to vector<128x16xf32>
      %54 = vector.extract_strided_slice %49 {offsets = [66, 0], sizes = [128, 16], strides = [1, 1]} : vector<200x16xf32> to vector<128x16xf32>
      %55 = arith.maximumf %53, %54 : vector<128x16xf32>
      %56 = arith.maximumf %52, %55 : vector<128x16xf32>
      %57 = arith.truncf %56 : vector<128x16xf32> to vector<128x16xbf16>
      %58 = arith.index_cast %41 : i32 to index
      %c0_27 = arith.constant 0 : index
      %59 = vector.load %arg5[%58, %c0_27] : memref<4096x16xbf16, #tpu.memory_space<vmem>>, vector<128x16xbf16>
      tpu.vector_store %arg5[%58, %c0_27], %57 {strides = array<i32>} : memref<4096x16xbf16, #tpu.memory_space<vmem>>, vector<128x16xbf16>,
    }
    %c32_i32_24 = arith.constant 32 : i32
    return
  }
}

module attributes {stable_mosaic.version = 11 : i64} {
  func.func @_fc_kernel(%arg0: memref<4x400xbf16, #tpu.memory_space<vmem>>, %arg1: memref<400x128xbf16, #tpu.memory_space<vmem>>, %arg2: memref<128x128xbf16, #tpu.memory_space<vmem>>, %arg3: memref<128x128xbf16, #tpu.memory_space<vmem>>, %arg4: memref<8x128xf32, #tpu.memory_space<vmem>>, %arg5: memref<4x128xf32, #tpu.memory_space<vmem>>) attributes {dimension_semantics = [], scalar_prefetch = 0 : i64, scratch_operands = 0 : i64, tpu.core_type = #tpu.core_type<tc>} {
    %c0 = arith.constant 0 : index
    %c0_0 = arith.constant 0 : index
    %0 = vector.load %arg0[%c0, %c0_0] : memref<4x400xbf16, #tpu.memory_space<vmem>>, vector<4x400xbf16>
    %c0_1 = arith.constant 0 : index
    %c0_2 = arith.constant 0 : index
    %1 = vector.load %arg1[%c0_1, %c0_2] : memref<400x128xbf16, #tpu.memory_space<vmem>>, vector<400x128xbf16>
    %cst = arith.constant dense<0.000000e+00> : vector<4x128xf32>
    %2 = tpu.matmul %0, %1, %cst {dimension_numbers = #tpu.dot_dimension_numbers<[1], [0], [0], [1], [0, 0, 1, 1], [], []>} : vector<4x400xbf16>, vector<400x128xbf16>, vector<4x128xf32> -> vector<4x128xf32>
    %c0_3 = arith.constant 0 : index
    %c0_4 = arith.constant 0 : index
    %3 = vector.load %arg4[%c0_3, %c0_4] : memref<8x128xf32, #tpu.memory_space<vmem>>, vector<1x128xf32>
    %c1 = arith.constant 1 : index
    %c0_5 = arith.constant 0 : index
    %4 = vector.load %arg4[%c1, %c0_5] : memref<8x128xf32, #tpu.memory_space<vmem>>, vector<1x128xf32>
    %cst_6 = arith.constant dense<0.000000e+00> : vector<128xf32>
    %5 = vector.multi_reduction <add>, %2, %cst_6 [0] : vector<4x128xf32> to vector<128xf32>
    %6 = vector.shape_cast %5 : vector<128xf32> to vector<1x128xf32>
    %cst_7 = arith.constant 2.500000e-01 : f32
    %7 = vector.broadcast %cst_7 : f32 to vector<1x128xf32>
    %8 = arith.mulf %6, %7 : vector<1x128xf32>
    %9 = arith.mulf %2, %2 : vector<4x128xf32>
    %cst_8 = arith.constant dense<0.000000e+00> : vector<128xf32>
    %10 = vector.multi_reduction <add>, %9, %cst_8 [0] : vector<4x128xf32> to vector<128xf32>
    %11 = vector.shape_cast %10 : vector<128xf32> to vector<1x128xf32>
    %cst_9 = arith.constant 2.500000e-01 : f32
    %12 = vector.broadcast %cst_9 : f32 to vector<1x128xf32>
    %13 = arith.mulf %11, %12 : vector<1x128xf32>
    %14 = arith.mulf %8, %8 : vector<1x128xf32>
    %15 = arith.subf %13, %14 : vector<1x128xf32>
    %cst_10 = arith.constant 0.000000e+00 : f32
    %16 = vector.broadcast %cst_10 : f32 to vector<1x128xf32>
    %17 = arith.maximumf %15, %16 : vector<1x128xf32>
    %cst_11 = arith.constant 9.99999974E-6 : f32
    %18 = vector.broadcast %cst_11 : f32 to vector<1x128xf32>
    %19 = arith.addf %17, %18 : vector<1x128xf32>
    %20 = math.rsqrt %19 : vector<1x128xf32>
    %21 = arith.mulf %3, %20 : vector<1x128xf32>
    %22 = vector.broadcast %21 : vector<1x128xf32> to vector<4x128xf32>
    %23 = arith.mulf %2, %22 : vector<4x128xf32>
    %24 = arith.mulf %8, %21 : vector<1x128xf32>
    %25 = arith.subf %4, %24 : vector<1x128xf32>
    %26 = vector.broadcast %25 : vector<1x128xf32> to vector<4x128xf32>
    %27 = arith.addf %23, %26 : vector<4x128xf32>
    %cst_12 = arith.constant 0.000000e+00 : f32
    %28 = vector.broadcast %cst_12 : f32 to vector<4x128xf32>
    %29 = arith.maximumf %27, %28 : vector<4x128xf32>
    %30 = arith.truncf %29 : vector<4x128xf32> to vector<4x128xbf16>
    %c0_13 = arith.constant 0 : index
    %c0_14 = arith.constant 0 : index
    %31 = vector.load %arg2[%c0_13, %c0_14] : memref<128x128xbf16, #tpu.memory_space<vmem>>, vector<128x128xbf16>
    %cst_15 = arith.constant dense<0.000000e+00> : vector<4x128xf32>
    %32 = tpu.matmul %30, %31, %cst_15 {dimension_numbers = #tpu.dot_dimension_numbers<[1], [0], [0], [1], [0, 0, 1, 1], [], []>} : vector<4x128xbf16>, vector<128x128xbf16>, vector<4x128xf32> -> vector<4x128xf32>
    %c2 = arith.constant 2 : index
    %c0_16 = arith.constant 0 : index
    %33 = vector.load %arg4[%c2, %c0_16] : memref<8x128xf32, #tpu.memory_space<vmem>>, vector<1x128xf32>
    %c3 = arith.constant 3 : index
    %c0_17 = arith.constant 0 : index
    %34 = vector.load %arg4[%c3, %c0_17] : memref<8x128xf32, #tpu.memory_space<vmem>>, vector<1x128xf32>
    %cst_18 = arith.constant dense<0.000000e+00> : vector<128xf32>
    %35 = vector.multi_reduction <add>, %32, %cst_18 [0] : vector<4x128xf32> to vector<128xf32>
    %36 = vector.shape_cast %35 : vector<128xf32> to vector<1x128xf32>
    %cst_19 = arith.constant 2.500000e-01 : f32
    %37 = vector.broadcast %cst_19 : f32 to vector<1x128xf32>
    %38 = arith.mulf %36, %37 : vector<1x128xf32>
    %39 = arith.mulf %32, %32 : vector<4x128xf32>
    %cst_20 = arith.constant dense<0.000000e+00> : vector<128xf32>
    %40 = vector.multi_reduction <add>, %39, %cst_20 [0] : vector<4x128xf32> to vector<128xf32>
    %41 = vector.shape_cast %40 : vector<128xf32> to vector<1x128xf32>
    %cst_21 = arith.constant 2.500000e-01 : f32
    %42 = vector.broadcast %cst_21 : f32 to vector<1x128xf32>
    %43 = arith.mulf %41, %42 : vector<1x128xf32>
    %44 = arith.mulf %38, %38 : vector<1x128xf32>
    %45 = arith.subf %43, %44 : vector<1x128xf32>
    %cst_22 = arith.constant 0.000000e+00 : f32
    %46 = vector.broadcast %cst_22 : f32 to vector<1x128xf32>
    %47 = arith.maximumf %45, %46 : vector<1x128xf32>
    %cst_23 = arith.constant 9.99999974E-6 : f32
    %48 = vector.broadcast %cst_23 : f32 to vector<1x128xf32>
    %49 = arith.addf %47, %48 : vector<1x128xf32>
    %50 = math.rsqrt %49 : vector<1x128xf32>
    %51 = arith.mulf %33, %50 : vector<1x128xf32>
    %52 = vector.broadcast %51 : vector<1x128xf32> to vector<4x128xf32>
    %53 = arith.mulf %32, %52 : vector<4x128xf32>
    %54 = arith.mulf %38, %51 : vector<1x128xf32>
    %55 = arith.subf %34, %54 : vector<1x128xf32>
    %56 = vector.broadcast %55 : vector<1x128xf32> to vector<4x128xf32>
    %57 = arith.addf %53, %56 : vector<4x128xf32>
    %cst_24 = arith.constant 0.000000e+00 : f32
    %58 = vector.broadcast %cst_24 : f32 to vector<4x128xf32>
    %59 = arith.maximumf %57, %58 : vector<4x128xf32>
    %60 = arith.truncf %59 : vector<4x128xf32> to vector<4x128xbf16>
    %c0_25 = arith.constant 0 : index
    %c0_26 = arith.constant 0 : index
    %61 = vector.load %arg3[%c0_25, %c0_26] : memref<128x128xbf16, #tpu.memory_space<vmem>>, vector<128x128xbf16>
    %cst_27 = arith.constant dense<0.000000e+00> : vector<4x128xf32>
    %62 = tpu.matmul %60, %61, %cst_27 {dimension_numbers = #tpu.dot_dimension_numbers<[1], [0], [0], [1], [0, 0, 1, 1], [], []>} : vector<4x128xbf16>, vector<128x128xbf16>, vector<4x128xf32> -> vector<4x128xf32>
    %c4 = arith.constant 4 : index
    %c0_28 = arith.constant 0 : index
    %63 = vector.load %arg4[%c4, %c0_28] : memref<8x128xf32, #tpu.memory_space<vmem>>, vector<1x128xf32>
    %64 = vector.broadcast %63 : vector<1x128xf32> to vector<4x128xf32>
    %65 = arith.addf %62, %64 : vector<4x128xf32>
    %c0_29 = arith.constant 0 : index
    %c0_30 = arith.constant 0 : index
    %66 = vector.load %arg5[%c0_29, %c0_30] : memref<4x128xf32, #tpu.memory_space<vmem>>, vector<4x128xf32>
    tpu.vector_store %arg5[%c0_29, %c0_30], %65 {strides = array<i32>} : memref<4x128xf32, #tpu.memory_space<vmem>>, vector<4x128xf32>,
    return
  }
}

</mosaic_0001>

<llo_original>
// kernel: net_forward.3
$region0: #{net_forward.3}
  #allocation0 [shape = 'u32[]', space=smem, size = 0x4, offset = 0x4, fixed_abs, tag = 'smem constant byte address 0x4 - core index']
  #allocation1 [shape = 'u32[72,128]{1,0:T(1,128)}', space=vmem, size = 0x9000, scoped, tag = 'internal scratch']
  %s0 = inlined_call_operand.vmem [shape: bf16[4,400], index: 0, kind: input, shape index: {}]
  %s1 = inlined_call_operand.vmem [shape: bf16[400,128], index: 1, kind: input, shape index: {}]
  %s2 = inlined_call_operand.vmem [shape: bf16[128,128], index: 2, kind: input, shape index: {}]
  %s3 = inlined_call_operand.vmem [shape: bf16[128,128], index: 3, kind: input, shape index: {}]
  %s4 = inlined_call_operand.vmem [shape: f32[8,128], index: 4, kind: input, shape index: {}]
  %s5 = inlined_call_operand.hbm [shape: f32[4,128], index: 5, kind: output, shape index: {}]
  %s6 = sld [smem:[#allocation0]]
  $region30: #{net_forward.3} parent=0
    _
  %s8 = ssub.s32 1, %s6
  %s9 = scalar_select 0, %s8, %s6
  $region1: #{net_forward.3} parent=0
    #allocation2 [shape = 'u8[2048]{0}', space=vmem, size = 0x800, scoped, tag = 'output window, operand 0, single buffered']
    #allocation3 [shape = 's32[1]{0}', space=sflag, size = 0x4, scoped, tag = 'scoped memory for net_forward.3']
    %10 = vsyncpa [#allocation3], 0
    // Predicated region
    $region2: #{net_forward.3} parent=1 // pred_check
      _
    $region3: #{net_forward.3} parent=1 // pred_check_branch
      %12 = sbr.rel (0) target = $region5
    $region4: #{net_forward.3} parent=1 // pred_region
      _
    $region5: #{net_forward.3} parent=1 // pred_fallthru
      _
    // Predicated region
    $region6: #{net_forward.3} parent=1 // pred_check
      _
    $region7: #{net_forward.3} parent=1 // pred_check_branch
      %14 = sbr.rel (0) target = $region9
    $region8: #{net_forward.3} parent=1 // pred_region
      _
    $region9: #{net_forward.3} parent=1 // pred_fallthru
      _
    // Predicated region
    $region10: #{net_forward.3} parent=1 // pred_check
      _
    $region11: #{net_forward.3} parent=1 // pred_check_branch
      %16 = sbr.rel (0) target = $region13
    $region12: #{net_forward.3} parent=1 // pred_region
      _
    $region13: #{net_forward.3} parent=1 // pred_fallthru
      _
    // Predicated region
    $region14: #{net_forward.3} parent=1 // pred_check
      _
    $region15: #{net_forward.3} parent=1 // pred_check_branch
      %18 = sbr.rel (0) target = $region17
    $region16: #{net_forward.3} parent=1 // pred_region
      _
    $region17: #{net_forward.3} parent=1 // pred_fallthru
      _
    // Predicated region
    $region18: #{net_forward.3} parent=1 // pred_check
      _
    $region19: #{net_forward.3} parent=1 // pred_check_branch
      %20 = sbr.rel (0) target = $region21
    $region20: #{net_forward.3} parent=1 // pred_region
      _
    $region21: #{net_forward.3} parent=1 // pred_fallthru
      _
    %v22 = vld [vmem:[%s0] sm:$0xff]
    %v23 = vld [vmem:[%s1] sm:$0xf]
    %v24 = vld [vmem:[%s1 + $0x4] sm:$0xf]
    %v25 = vld [vmem:[%s1 + $0x8] sm:$0xf]
    %v26 = vld [vmem:[%s1 + $0xc] sm:$0xf]
    %v27 = vld [vmem:[%s1 + $0x10] sm:$0xf]
    %v28 = vld [vmem:[%s1 + $0x14] sm:$0xf]
    %v29 = vld [vmem:[%s1 + $0x18] sm:$0xf]
    %v30 = vld [vmem:[%s1 + $0x1c] sm:$0xf]
    %v31 = vld [vmem:[%s1 + $0x20] sm:$0xf]
    %v32 = vld [vmem:[%s1 + $0x24] sm:$0xf]
    %v33 = vld [vmem:[%s1 + $0x28] sm:$0xf]
    %v34 = vld [vmem:[%s1 + $0x2c] sm:$0xf]
    %v35 = vld [vmem:[%s1 + $0x30] sm:$0xf]
    %v36 = vld [vmem:[%s1 + $0x34] sm:$0xf]
    %v37 = vld [vmem:[%s1 + $0x38] sm:$0xf]
    %v38 = vld [vmem:[%s1 + $0x3c] sm:$0xf]
    %v39 = vld [vmem:[%s1 + $0x40] sm:$0xf]
    %v40 = vld [vmem:[%s1 + $0x44] sm:$0xf]
    %v41 = vld [vmem:[%s1 + $0x48] sm:$0xf]
    %v42 = vld [vmem:[%s1 + $0x4c] sm:$0xf]
    %v43 = vld [vmem:[%s1 + $0x50] sm:$0xf]
    %v44 = vld [vmem:[%s1 + $0x54] sm:$0xf]
    %v45 = vld [vmem:[%s1 + $0x58] sm:$0xf]
    %v46 = vld [vmem:[%s1 + $0x5c] sm:$0xf]
    %v47 = vld [vmem:[%s1 + $0x60] sm:$0xf]
    %v48 = vld [vmem:[%s1 + $0x64] sm:$0xf]
    %v49 = vld [vmem:[%s1 + $0x68] sm:$0xf]
    %v50 = vld [vmem:[%s1 + $0x6c] sm:$0xf]
    %v51 = vld [vmem:[%s1 + $0x70] sm:$0xf]
    %v52 = vld [vmem:[%s1 + $0x74] sm:$0xf]
    %v53 = vld [vmem:[%s1 + $0x78] sm:$0xf]
    %v54 = vld [vmem:[%s1 + $0x7c] sm:$0xf]
    %v55 = vld [vmem:[%s1 + $0x80] sm:$0xf]
    %v56 = vld [vmem:[%s1 + $0x84] sm:$0xf]
    %v57 = vld [vmem:[%s1 + $0x88] sm:$0xf]
    %v58 = vld [vmem:[%s1 + $0x8c] sm:$0xf]
    %v59 = vld [vmem:[%s1 + $0x90] sm:$0xf]
    %v60 = vld [vmem:[%s1 + $0x94] sm:$0xf]
    %v61 = vld [vmem:[%s1 + $0x98] sm:$0xf]
    %v62 = vld [vmem:[%s1 + $0x9c] sm:$0xf]
    %v63 = vld [vmem:[%s1 + $0xa0] sm:$0xf]
    %v64 = vld [vmem:[%s1 + $0xa4] sm:$0xf]
    %v65 = vld [vmem:[%s1 + $0xa8] sm:$0xf]
    %v66 = vld [vmem:[%s1 + $0xac] sm:$0xf]
    %v67 = vld [vmem:[%s1 + $0xb0] sm:$0xf]
    %v68 = vld [vmem:[%s1 + $0xb4] sm:$0xf]
    %v69 = vld [vmem:[%s1 + $0xb8] sm:$0xf]
    %v70 = vld [vmem:[%s1 + $0xbc] sm:$0xf]
    %v71 = vld [vmem:[%s1 + $0xc0] sm:$0xf]
    %v72 = vld [vmem:[%s1 + $0xc4] sm:$0xf]
    %74 = vst [vmem:[#allocation1] ss:$4 sm:$0xff] %v22
    %v75 = vld.sshfl [vmem:[#allocation1] sm:$0xff pattern:$0x73625140]
    %v76 = vld.sshfl [vmem:[#allocation1 + $0x8] sm:$0xff pattern:$0x73625140]
    %v77 = vld.sshfl [vmem:[#allocation1 + $0x10] sm:$0xff pattern:$0x73625140]
    %v78 = vld.sshfl [vmem:[#allocation1 + $0x18] sm:$0xff pattern:$0x73625140]
    %v132 = vunpack.c.l.b16 %v23
    %v133 = vunpack.c.l.b16 %v24
    %v134 = vunpack.c.l.b16 %v25
    %v135 = vunpack.c.l.b16 %v26
    %v136 = vunpack.c.l.b16 %v27
    %v137 = vunpack.c.l.b16 %v28
    %v138 = vunpack.c.l.b16 %v29
    %v139 = vunpack.c.l.b16 %v30
    %v140 = vunpack.c.l.b16 %v31
    %v141 = vunpack.c.l.b16 %v32
    %v142 = vunpack.c.l.b16 %v33
    %v143 = vunpack.c.l.b16 %v34
    %v144 = vunpack.c.l.b16 %v35
    %v145 = vunpack.c.l.b16 %v36
    %v146 = vunpack.c.l.b16 %v37
    %v147 = vunpack.c.l.b16 %v38
    %v148 = vunpack.c.l.b16 %v39
    %v149 = vunpack.c.l.b16 %v40
    %v150 = vunpack.c.l.b16 %v41
    %v151 = vunpack.c.l.b16 %v42
    %v152 = vunpack.c.l.b16 %v43
    %v153 = vunpack.c.l.b16 %v44
    %v154 = vunpack.c.l.b16 %v45
    %v155 = vunpack.c.l.b16 %v46
    %v156 = vunpack.c.l.b16 %v47
    %v157 = vunpack.c.l.b16 %v48
    %v158 = vunpack.c.l.b16 %v49
    %v159 = vunpack.c.l.b16 %v50
    %v160 = vunpack.c.l.b16 %v51
    %v161 = vunpack.c.l.b16 %v52
    %v162 = vunpack.c.l.b16 %v53
    %v163 = vunpack.c.l.b16 %v54
    %v164 = vunpack.c.l.b16 %v55
    %v165 = vunpack.c.l.b16 %v56
    %v166 = vunpack.c.l.b16 %v57
    %v167 = vunpack.c.l.b16 %v58
    %v168 = vunpack.c.l.b16 %v59
    %v169 = vunpack.c.l.b16 %v60
    %v170 = vunpack.c.l.b16 %v61
    %v171 = vunpack.c.l.b16 %v62
    %v172 = vunpack.c.l.b16 %v63
    %v173 = vunpack.c.l.b16 %v64
    %v174 = vunpack.c.l.b16 %v65
    %v175 = vunpack.c.l.b16 %v66
    %v176 = vunpack.c.l.b16 %v67
    %v177 = vunpack.c.l.b16 %v68
    %v178 = vunpack.c.l.b16 %v69
    %v179 = vunpack.c.l.b16 %v70
    %v180 = vunpack.c.l.b16 %v71
    %v181 = vunpack.c.l.b16 %v72
    %v182 = vpack.c.b16 %v133, %v132
    %v183 = vpack.c.b16 %v135, %v134
    %v184 = vpack.c.b16 %v137, %v136
    %v185 = vpack.c.b16 %v139, %v138
    %v186 = vpack.c.b16 %v141, %v140
    %v187 = vpack.c.b16 %v143, %v142
    %v188 = vpack.c.b16 %v145, %v144
    %v189 = vpack.c.b16 %v147, %v146
    %v190 = vpack.c.b16 %v149, %v148
    %v191 = vpack.c.b16 %v151, %v150
    %v192 = vpack.c.b16 %v153, %v152
    %v193 = vpack.c.b16 %v155, %v154
    %v194 = vpack.c.b16 %v157, %v156
    %v195 = vpack.c.b16 %v159, %v158
    %v196 = vpack.c.b16 %v161, %v160
    %v197 = vpack.c.b16 %v163, %v162
    %v198 = vpack.c.b16 %v165, %v164
    %v199 = vpack.c.b16 %v167, %v166
    %v200 = vpack.c.b16 %v169, %v168
    %v201 = vpack.c.b16 %v171, %v170
    %v202 = vpack.c.b16 %v173, %v172
    %v203 = vpack.c.b16 %v175, %v174
    %v204 = vpack.c.b16 %v177, %v176
    %v205 = vpack.c.b16 %v179, %v178
    %v206 = vpack.c.b16 %v181, %v180
    %vm232 = vcmask 130048
    %v233 = vsel %vm232, %v78, 0
    %235 = vmatpush.bf16.msra.mxu0 %v189
    %236 = vmatpush.bf16.msra.mxu0 %v188
    %237 = vmatpush.bf16.msra.mxu0 %v187
    %238 = vmatpush.bf16.msra.mxu0 %v186
    %239 = vmatpush.bf16.msra.mxu0 %v185
    %240 = vmatpush.bf16.msra.mxu0 %v184
    %241 = vmatpush.bf16.msra.mxu0 %v183
    %242 = vmatpush.bf16.msra.mxu0 %v182
    %243 = vmatmul.bf16.gmra.mxu0 %v75
    %v244 = vpop.f32.mrf.mxu0
    %v245 = vadd.f32 0.0, %v244
    %v246 = vpop.f32.mrf.mxu0
    %247 = vdwg.mxu0
    %248 = vmatpush.bf16.msra.mxu0 %v197
    %249 = vmatpush.bf16.msra.mxu0 %v196
    %250 = vmatpush.bf16.msra.mxu0 %v195
    %251 = vmatpush.bf16.msra.mxu0 %v194
    %252 = vmatpush.bf16.msra.mxu0 %v193
    %253 = vmatpush.bf16.msra.mxu0 %v192
    %254 = vmatpush.bf16.msra.mxu0 %v191
    %255 = vmatpush.bf16.msra.mxu0 %v190
    %256 = vmatmul.bf16.gmra.mxu0 %v76
    %v257 = vpop.f32.mrf.mxu0
    %v258 = vadd.f32 %v245, %v257
    %v259 = vpop.f32.mrf.mxu0
    %260 = vdwg.mxu0
    %261 = vmatpush.bf16.msra.mxu0 %v205
    %262 = vmatpush.bf16.msra.mxu0 %v204
    %263 = vmatpush.bf16.msra.mxu0 %v203
    %264 = vmatpush.bf16.msra.mxu0 %v202
    %265 = vmatpush.bf16.msra.mxu0 %v201
    %266 = vmatpush.bf16.msra.mxu0 %v200
    %267 = vmatpush.bf16.msra.mxu0 %v199
    %268 = vmatpush.bf16.msra.mxu0 %v198
    %269 = vmatmul.bf16.gmra.mxu0 %v77
    %v270 = vpop.f32.mrf.mxu0
    %v271 = vadd.f32 %v258, %v270
    %v272 = vpop.f32.mrf.mxu0
    %273 = vdwg.mxu0
    %274 = vmatpush.bf16.msra.mxu0 0
    %275 = vmatpush.bf16.msra.mxu0 0
    %276 = vmatpush.bf16.msra.mxu0 0
    %277 = vmatpush.bf16.msra.mxu0 0
    %278 = vmatpush.bf16.msra.mxu0 0
    %279 = vmatpush.bf16.msra.mxu0 0
    %280 = vmatpush.bf16.msra.mxu0 0
    %281 = vmatpush.bf16.msra.mxu0 %v206
    %282 = vmatmul.bf16.gmra.mxu0 %v233
    %v283 = vpop.f32.mrf.mxu0
    %v284 = vadd.f32 %v271, %v283
    %v285 = vpop.f32.mrf.mxu0
    %286 = vdwg.mxu0
    %v287 = vld [vmem:[%s4] sm:$0x1]
    %v288 = vld [vmem:[%s4 + $0x1] sm:$0x1]
    %vm289 = vcmask 1043456
    %v290 = vsel %vm289, %v284, 0.0
    %v291 = vrot.slane %v290, 4
    %v292 = vadd.f32 %v290, %v291
    %v293 = vrot.slane %v292, 2
    %v294 = vadd.f32 %v292, %v293
    %v295 = vrot.slane %v294, 1
    %v296 = vadd.f32 %v294, %v295
    %v297 = vmul.f32 %v296, 0.25
    %v298 = vmul.f32 %v284, %v284
    %v299 = vsel %vm289, %v298, 0.0
    %v300 = vrot.slane %v299, 4
    %v301 = vadd.f32 %v299, %v300
    %v302 = vrot.slane %v301, 2
    %v303 = vadd.f32 %v301, %v302
    %v304 = vrot.slane %v303, 1
    %v305 = vadd.f32 %v303, %v304
    %v306 = vmul.f32 %v305, 0.25
    %v307 = vmul.f32 %v297, %v297
    %v308 = vsub.f32 %v306, %v307
    %v309 = vmax.f32 %v308, 0.0
    %v310 = vadd.f32 %v309, 1e-05
    %v311 = vrsqrt.pop %v310
    %v312 = vmul.f32 %v311, %v310
    %v313 = vmul.f32 %v312, %v311
    %v314 = vmul.f32 0.5, %v313
    %v315 = vsub.f32 1.5, %v314
    %v316 = vmul.f32 %v311, %v315
    %vm317 = vweird.f32 %v310
    %vm318 = vweird.f32 %v311
    %vm319 = vmor %vm317, %vm318
    %v320 = vsel %vm319, %v311, %v316
    %v321 = vmul.f32 %v287, %v320
    %v322 = vperm.slane %v321, 0
    %v323 = vmul.f32 %v284, %v322
    %v324 = vmul.f32 %v297, %v321
    %v325 = vsub.f32 %v288, %v324
    %v326 = vperm.slane %v325, 0
    %v327 = vadd.f32 %v323, %v326
    %v328 = vmax.f32 %v327, 0.0
    %v329 = vpack.c.bf16 %v328, %v328
    %v330 = vld [vmem:[%s2] sm:$0xf]
    %v331 = vld [vmem:[%s2 + $0x4] sm:$0xf]
    %v332 = vld [vmem:[%s2 + $0x8] sm:$0xf]
    %v333 = vld [vmem:[%s2 + $0xc] sm:$0xf]
    %v334 = vld [vmem:[%s2 + $0x10] sm:$0xf]
    %v335 = vld [vmem:[%s2 + $0x14] sm:$0xf]
    %v336 = vld [vmem:[%s2 + $0x18] sm:$0xf]
    %v337 = vld [vmem:[%s2 + $0x1c] sm:$0xf]
    %v338 = vld [vmem:[%s2 + $0x20] sm:$0xf]
    %v339 = vld [vmem:[%s2 + $0x24] sm:$0xf]
    %v340 = vld [vmem:[%s2 + $0x28] sm:$0xf]
    %v341 = vld [vmem:[%s2 + $0x2c] sm:$0xf]
    %v342 = vld [vmem:[%s2 + $0x30] sm:$0xf]
    %v343 = vld [vmem:[%s2 + $0x34] sm:$0xf]
    %v344 = vld [vmem:[%s2 + $0x38] sm:$0xf]
    %v345 = vld [vmem:[%s2 + $0x3c] sm:$0xf]
    %v362 = vunpack.c.l.b16 %v330
    %v363 = vunpack.c.l.b16 %v331
    %v364 = vunpack.c.l.b16 %v332
    %v365 = vunpack.c.l.b16 %v333
    %v366 = vunpack.c.l.b16 %v334
    %v367 = vunpack.c.l.b16 %v335
    %v368 = vunpack.c.l.b16 %v336
    %v369 = vunpack.c.l.b16 %v337
    %v370 = vunpack.c.l.b16 %v338
    %v371 = vunpack.c.l.b16 %v339
    %v372 = vunpack.c.l.b16 %v340
    %v373 = vunpack.c.l.b16 %v341
    %v374 = vunpack.c.l.b16 %v342
    %v375 = vunpack.c.l.b16 %v343
    %v376 = vunpack.c.l.b16 %v344
    %v377 = vunpack.c.l.b16 %v345
    %v378 = vpack.c.b16 %v363, %v362
    %v379 = vpack.c.b16 %v365, %v364
    %v380 = vpack.c.b16 %v367, %v366
    %v381 = vpack.c.b16 %v369, %v368
    %v382 = vpack.c.b16 %v371, %v370
    %v383 = vpack.c.b16 %v373, %v372
    %v384 = vpack.c.b16 %v375, %v374
    %v385 = vpack.c.b16 %v377, %v376
    %394 = vmatpush.bf16.msra.mxu0 %v385
    %395 = vmatpush.bf16.msra.mxu0 %v384
    %396 = vmatpush.bf16.msra.mxu0 %v383
    %397 = vmatpush.bf16.msra.mxu0 %v382
    %398 = vmatpush.bf16.msra.mxu0 %v381
    %399 = vmatpush.bf16.msra.mxu0 %v380
    %400 = vmatpush.bf16.msra.mxu0 %v379
    %401 = vmatpush.bf16.msra.mxu0 %v378
    %402 = vmatmul.bf16.gmra.mxu0 %v329
    %v403 = vpop.f32.mrf.mxu0
    %v404 = vadd.f32 0.0, %v403
    %v405 = vpop.f32.mrf.mxu0
    %406 = vdwg.mxu0
    %v407 = vld [vmem:[%s4 + $0x2] sm:$0x1]
    %v408 = vld [vmem:[%s4 + $0x3] sm:$0x1]
    %v409 = vsel %vm289, %v404, 0.0
    %v410 = vrot.slane %v409, 4
    %v411 = vadd.f32 %v409, %v410
    %v412 = vrot.slane %v411, 2
    %v413 = vadd.f32 %v411, %v412
    %v414 = vrot.slane %v413, 1
    %v415 = vadd.f32 %v413, %v414
    %v416 = vmul.f32 %v415, 0.25
    %v417 = vmul.f32 %v404, %v404
    %v418 = vsel %vm289, %v417, 0.0
    %v419 = vrot.slane %v418, 4
    %v420 = vadd.f32 %v418, %v419
    %v421 = vrot.slane %v420, 2
    %v422 = vadd.f32 %v420, %v421
    %v423 = vrot.slane %v422, 1
    %v424 = vadd.f32 %v422, %v423
    %v425 = vmul.f32 %v424, 0.25
    %v426 = vmul.f32 %v416, %v416
    %v427 = vsub.f32 %v425, %v426
    %v428 = vmax.f32 %v427, 0.0
    %v429 = vadd.f32 %v428, 1e-05
    %v430 = vrsqrt.pop %v429
    %v431 = vmul.f32 %v430, %v429
    %v432 = vmul.f32 %v431, %v430
    %v433 = vmul.f32 0.5, %v432
    %v434 = vsub.f32 1.5, %v433
    %v435 = vmul.f32 %v430, %v434
    %vm436 = vweird.f32 %v429
    %vm437 = vweird.f32 %v430
    %vm438 = vmor %vm436, %vm437
    %v439 = vsel %vm438, %v430, %v435
    %v440 = vmul.f32 %v407, %v439
    %v441 = vperm.slane %v440, 0
    %v442 = vmul.f32 %v404, %v441
    %v443 = vmul.f32 %v416, %v440
    %v444 = vsub.f32 %v408, %v443
    %v445 = vperm.slane %v444, 0
    %v446 = vadd.f32 %v442, %v445
    %v447 = vmax.f32 %v446, 0.0
    %v448 = vpack.c.bf16 %v447, %v447
    %v449 = vld [vmem:[%s3] sm:$0xf]
    %v450 = vld [vmem:[%s3 + $0x4] sm:$0xf]
    %v451 = vld [vmem:[%s3 + $0x8] sm:$0xf]
    %v452 = vld [vmem:[%s3 + $0xc] sm:$0xf]
    %v453 = vld [vmem:[%s3 + $0x10] sm:$0xf]
    %v454 = vld [vmem:[%s3 + $0x14] sm:$0xf]
    %v455 = vld [vmem:[%s3 + $0x18] sm:$0xf]
    %v456 = vld [vmem:[%s3 + $0x1c] sm:$0xf]
    %v457 = vld [vmem:[%s3 + $0x20] sm:$0xf]
    %v458 = vld [vmem:[%s3 + $0x24] sm:$0xf]
    %v459 = vld [vmem:[%s3 + $0x28] sm:$0xf]
    %v460 = vld [vmem:[%s3 + $0x2c] sm:$0xf]
    %v461 = vld [vmem:[%s3 + $0x30] sm:$0xf]
    %v462 = vld [vmem:[%s3 + $0x34] sm:$0xf]
    %v463 = vld [vmem:[%s3 + $0x38] sm:$0xf]
    %v464 = vld [vmem:[%s3 + $0x3c] sm:$0xf]
    %v465 = vld [vmem:[%s4 + $0x4] sm:$0x1]
    %v466 = vperm.slane %v465, 0
    %v483 = vunpack.c.l.b16 %v449
    %v484 = vunpack.c.l.b16 %v450
    %v485 = vunpack.c.l.b16 %v451
    %v486 = vunpack.c.l.b16 %v452
    %v487 = vunpack.c.l.b16 %v453
    %v488 = vunpack.c.l.b16 %v454
    %v489 = vunpack.c.l.b16 %v455
    %v490 = vunpack.c.l.b16 %v456
    %v491 = vunpack.c.l.b16 %v457
    %v492 = vunpack.c.l.b16 %v458
    %v493 = vunpack.c.l.b16 %v459
    %v494 = vunpack.c.l.b16 %v460
    %v495 = vunpack.c.l.b16 %v461
    %v496 = vunpack.c.l.b16 %v462
    %v497 = vunpack.c.l.b16 %v463
    %v498 = vunpack.c.l.b16 %v464
    %v499 = vpack.c.b16 %v484, %v483
    %v500 = vpack.c.b16 %v486, %v485
    %v501 = vpack.c.b16 %v488, %v487
    %v502 = vpack.c.b16 %v490, %v489
    %v503 = vpack.c.b16 %v492, %v491
    %v504 = vpack.c.b16 %v494, %v493
    %v505 = vpack.c.b16 %v496, %v495
    %v506 = vpack.c.b16 %v498, %v497
    %515 = vmatpush.bf16.msra.mxu0 %v506
    %516 = vmatpush.bf16.msra.mxu0 %v505
    %517 = vmatpush.bf16.msra.mxu0 %v504
    %518 = vmatpush.bf16.msra.mxu0 %v503
    %519 = vmatpush.bf16.msra.mxu0 %v502
    %520 = vmatpush.bf16.msra.mxu0 %v501
    %521 = vmatpush.bf16.msra.mxu0 %v500
    %522 = vmatpush.bf16.msra.mxu0 %v499
    %523 = vmatmul.bf16.gmra.mxu0 %v448
    %v524 = vpop.f32.mrf.mxu0
    %v525 = vadd.f32 %v466, %v524
    %v526 = vpop.f32.mrf.mxu0
    %527 = vdwg.mxu0
    %528 = vst [vmem:[#allocation2] sm:$0xf] %v525
    // Predicated region
    $region22: #{net_forward.3} parent=1 // pred_check
      _
    $region23: #{net_forward.3} parent=1 // pred_check_branch
      %530 = sbr.rel (0) target = $region25
    $region24: #{net_forward.3} parent=1 // pred_region
      %532 = vsyncadd [#allocation3], 0
      %s534 = sshll.u32 [#allocation2], 4
      %s535 = int_to_ptr.vmem [resolvable:$true] %s534
      %s536 = sshll.u32 %s5, 4
      %s537 = int_to_ptr.hbm [resolvable:$true] %s536
      %539 = dma.vmem_to_hbm [thread:$0]  %s535, 64, %s537, [#allocation3]
    $region25: #{net_forward.3} parent=1 // pred_fallthru
      _
    // Predicated region
    $region26: #{net_forward.3} parent=1 // pred_check
      _
    $region27: #{net_forward.3} parent=1 // pred_check_branch
      %541 = sbr.rel (0) target = $region29
    $region28: #{net_forward.3} parent=1 // pred_region
      %543 = dma.done [#allocation3], 64
    $region29: #{net_forward.3} parent=1 // pred_fallthru
      _
    %544 = vsyncpa [#allocation3], 1

// kernel: net_forward.2
$region0: #{net_forward.2}
  #allocation0 [shape = 'u32[]', space=smem, size = 0x4, offset = 0x4, fixed_abs, tag = 'smem constant byte address 0x4 - core index']
  #allocation1 [shape = 'u32[72,128]{1,0:T(1,128)}', space=vmem, size = 0x9000, scoped, tag = 'internal scratch']
  #allocation2 [shape = 'f32[4608,8]{1,0:T(8,128)}', space=vmem, size = 0x240000, scoped, tag = 'scratch operand']
  #allocation3 [shape = 'bf16[4480,48]{1,0:T(8,128)(2,1)}', space=vmem, size = 0x118000, scoped, tag = 'scratch operand']
  #allocation4 [shape = 'f32[4224,16]{1,0:T(8,128)}', space=vmem, size = 0x210000, scoped, tag = 'scratch operand']
  %s0 = inlined_call_operand.vmem [shape: bf16[4736,16], index: 0, kind: input, shape index: {}]
  %s1 = inlined_call_operand.vmem [shape: bf16[5,16,128], index: 1, kind: input, shape index: {}]
  %s2 = inlined_call_operand.vmem [shape: bf16[5,48,128], index: 2, kind: input, shape index: {}]
  %s3 = inlined_call_operand.vmem [shape: f32[2,8], index: 3, kind: input, shape index: {}]
  %s4 = inlined_call_operand.vmem [shape: f32[2,16], index: 4, kind: input, shape index: {}]
  %s5 = inlined_call_operand.vmem [shape: bf16[4096,16], index: 5, kind: output, shape index: {}]
  %s6 = sld [smem:[#allocation0]]
  $region58: #{net_forward.2} parent=0
    _
  %s8 = ssub.s32 1, %s6
  %s9 = scalar_select 0, %s8, %s6
  // Predicated region
  $region2: #{net_forward.2} parent=0 // pred_check
    _
  $region3: #{net_forward.2} parent=0 // pred_check_branch
    %11 = sbr.rel (0) target = $region5
  $region4: #{net_forward.2} parent=0 // pred_region
    _
  $region5: #{net_forward.2} parent=0 // pred_fallthru
    _
  // Predicated region
  $region6: #{net_forward.2} parent=0 // pred_check
    _
  $region7: #{net_forward.2} parent=0 // pred_check_branch
    %13 = sbr.rel (0) target = $region9
  $region8: #{net_forward.2} parent=0 // pred_region
    _
  $region9: #{net_forward.2} parent=0 // pred_fallthru
    _
  // Predicated region
  $region10: #{net_forward.2} parent=0 // pred_check
    _
  $region11: #{net_forward.2} parent=0 // pred_check_branch
    %15 = sbr.rel (0) target = $region13
  $region12: #{net_forward.2} parent=0 // pred_region
    _
  $region13: #{net_forward.2} parent=0 // pred_fallthru
    _
  // Predicated region
  $region14: #{net_forward.2} parent=0 // pred_check
    _
  $region15: #{net_forward.2} parent=0 // pred_check_branch
    %17 = sbr.rel (0) target = $region17
  $region16: #{net_forward.2} parent=0 // pred_region
    _
  $region17: #{net_forward.2} parent=0 // pred_fallthru
    _
  // Predicated region
  $region18: #{net_forward.2} parent=0 // pred_check
    _
  $region19: #{net_forward.2} parent=0 // pred_check_branch
    %19 = sbr.rel (0) target = $region21
  $region20: #{net_forward.2} parent=0 // pred_region
    _
  $region21: #{net_forward.2} parent=0 // pred_fallthru
    _
  loop: start=0, step=1, limit=36
  $region22: #{net_forward.2} parent=0 // loop_pre_header
    _
  $region23: #{net_forward.2} parent=0 // loop_header
    %s22 = sphi 0, %s26
    %p23 = scmp.ge.s32.totalorder %s22, 36
    %v27 = vphi 0.0, %v1057
    %v28 = vphi 0.0, %v1111
  $region24: #{net_forward.2} parent=0 // loop_header_branch
    %25 = sbr.rel (%p23) target = $region28
  $region25: #{net_forward.2} parent=0 // loop_body
    %s29 = smul.u32 %s22, 128
    %s30 = sshra.s32 %s29, 3
    %s31 = sand.u32 %s29, 7
    %s32 = smul.addr %s30, 4
    %s33 = scalar_lea.vmem %s0, %s32
    %v34 = vld [vmem:[%s33] sm:$0xf]
    %v35 = vld [vmem:[%s33 + $0x4] sm:$0xf]
    %v36 = vld [vmem:[%s33 + $0x8] sm:$0xf]
    %v37 = vld [vmem:[%s33 + $0xc] sm:$0xf]
    %v38 = vld [vmem:[%s33 + $0x10] sm:$0xf]
    %v39 = vld [vmem:[%s33 + $0x14] sm:$0xf]
    %v40 = vld [vmem:[%s33 + $0x18] sm:$0xf]
    %v41 = vld [vmem:[%s33 + $0x1c] sm:$0xf]
    %v42 = vld [vmem:[%s33 + $0x20] sm:$0xf]
    %v43 = vld [vmem:[%s33 + $0x24] sm:$0xf]
    %v44 = vld [vmem:[%s33 + $0x28] sm:$0xf]
    %v45 = vld [vmem:[%s33 + $0x2c] sm:$0xf]
    %v46 = vld [vmem:[%s33 + $0x30] sm:$0xf]
    %v47 = vld [vmem:[%s33 + $0x34] sm:$0xf]
    %v48 = vld [vmem:[%s33 + $0x38] sm:$0xf]
    %v49 = vld [vmem:[%s33 + $0x3c] sm:$0xf]
    %v50 = vld [vmem:[%s1] sm:$0xf]
    %v51 = vld [vmem:[%s1 + $0x4] sm:$0xf]
    %s52 = sadd.s32 %s29, 32
    %s53 = sshra.s32 %s52, 3
    %s54 = sand.u32 %s52, 7
    %s55 = smul.addr %s53, 4
    %s56 = scalar_lea.vmem %s0, %s55
    %v57 = vld [vmem:[%s56] sm:$0xf]
    %v58 = vld [vmem:[%s56 + $0x4] sm:$0xf]
    %v59 = vld [vmem:[%s56 + $0x8] sm:$0xf]
    %v60 = vld [vmem:[%s56 + $0xc] sm:$0xf]
    %v61 = vld [vmem:[%s56 + $0x10] sm:$0xf]
    %v62 = vld [vmem:[%s56 + $0x14] sm:$0xf]
    %v63 = vld [vmem:[%s56 + $0x18] sm:$0xf]
    %v64 = vld [vmem:[%s56 + $0x1c] sm:$0xf]
    %v65 = vld [vmem:[%s56 + $0x20] sm:$0xf]
    %v66 = vld [vmem:[%s56 + $0x24] sm:$0xf]
    %v67 = vld [vmem:[%s56 + $0x28] sm:$0xf]
    %v68 = vld [vmem:[%s56 + $0x2c] sm:$0xf]
    %v69 = vld [vmem:[%s56 + $0x30] sm:$0xf]
    %v70 = vld [vmem:[%s56 + $0x34] sm:$0xf]
    %v71 = vld [vmem:[%s56 + $0x38] sm:$0xf]
    %v72 = vld [vmem:[%s56 + $0x3c] sm:$0xf]
    %s73 = scalar_lea.vmem %s1, 8
    %v74 = vld [vmem:[%s73] sm:$0xf]
    %v75 = vld [vmem:[%s73 + $0x4] sm:$0xf]
    %v92 = vunpack.c.l.b16 %v57
    %v93 = vunpack.c.l.b16 %v58
    %v94 = vunpack.c.l.b16 %v59
    %v95 = vunpack.c.l.b16 %v60
    %v96 = vunpack.c.l.b16 %v61
    %v97 = vunpack.c.l.b16 %v62
    %v98 = vunpack.c.l.b16 %v63
    %v99 = vunpack.c.l.b16 %v64
    %v100 = vunpack.c.l.b16 %v65
    %v101 = vunpack.c.l.b16 %v66
    %v102 = vunpack.c.l.b16 %v67
    %v103 = vunpack.c.l.b16 %v68
    %v104 = vunpack.c.l.b16 %v69
    %v105 = vunpack.c.l.b16 %v70
    %v106 = vunpack.c.l.b16 %v71
    %v107 = vunpack.c.l.b16 %v72
    %v108 = vpack.c.b16 %v93, %v92
    %v109 = vpack.c.b16 %v95, %v94
    %v110 = vpack.c.b16 %v97, %v96
    %v111 = vpack.c.b16 %v99, %v98
    %v112 = vpack.c.b16 %v101, %v100
    %v113 = vpack.c.b16 %v103, %v102
    %v114 = vpack.c.b16 %v105, %v104
    %v115 = vpack.c.b16 %v107, %v106
    %v118 = vunpack.c.l.b16 %v74
    %v119 = vunpack.c.l.b16 %v75
    %v120 = vpack.c.b16 %v119, %v118
    %vm122 = vcmask 130048
    %v124 = vsel %vm122, %v108, 0
    %v127 = vsel %vm122, %v109, 0
    %v130 = vsel %vm122, %v110, 0
    %v133 = vsel %vm122, %v111, 0
    %v136 = vsel %vm122, %v112, 0
    %v139 = vsel %vm122, %v113, 0
    %v142 = vsel %vm122, %v114, 0
    %v145 = vsel %vm122, %v115, 0
    %147 = vmatpush.bf16.msra.mxu0 0
    %148 = vmatpush.bf16.msra.mxu0 0
    %149 = vmatpush.bf16.msra.mxu0 0
    %150 = vmatpush.bf16.msra.mxu0 0
    %151 = vmatpush.bf16.msra.mxu0 0
    %152 = vmatpush.bf16.msra.mxu0 0
    %153 = vmatpush.bf16.msra.mxu0 0
    %154 = vmatpush.bf16.msra.mxu0 %v120
    %155 = vmatmul.bf16.gmra.mxu0 %v124
    %v156 = vpop.f32.mrf.mxu0
    %v157 = vadd.f32 0.0, %v156
    %v158 = vpop.f32.mrf.mxu0
    %v159 = vadd.f32 0.0, %v158
    %160 = vmatmul.bf16.gmra.mxu0 %v127
    %v161 = vpop.f32.mrf.mxu0
    %v162 = vadd.f32 0.0, %v161
    %v163 = vpop.f32.mrf.mxu0
    %v164 = vadd.f32 0.0, %v163
    %165 = vmatmul.bf16.gmra.mxu0 %v130
    %v166 = vpop.f32.mrf.mxu0
    %v167 = vadd.f32 0.0, %v166
    %v168 = vpop.f32.mrf.mxu0
    %v169 = vadd.f32 0.0, %v168
    %170 = vmatmul.bf16.gmra.mxu0 %v133
    %v171 = vpop.f32.mrf.mxu0
    %v172 = vadd.f32 0.0, %v171
    %v173 = vpop.f32.mrf.mxu0
    %v174 = vadd.f32 0.0, %v173
    %175 = vmatmul.bf16.gmra.mxu0 %v136
    %v176 = vpop.f32.mrf.mxu0
    %v177 = vadd.f32 0.0, %v176
    %v178 = vpop.f32.mrf.mxu0
    %v179 = vadd.f32 0.0, %v178
    %180 = vmatmul.bf16.gmra.mxu0 %v139
    %v181 = vpop.f32.mrf.mxu0
    %v182 = vadd.f32 0.0, %v181
    %v183 = vpop.f32.mrf.mxu0
    %v184 = vadd.f32 0.0, %v183
    %185 = vmatmul.bf16.gmra.mxu0 %v142
    %v186 = vpop.f32.mrf.mxu0
    %v187 = vadd.f32 0.0, %v186
    %v188 = vpop.f32.mrf.mxu0
    %v189 = vadd.f32 0.0, %v188
    %190 = vmatmul.bf16.gmra.mxu0 %v145
    %v191 = vpop.f32.mrf.mxu0
    %v192 = vadd.f32 0.0, %v191
    %v193 = vpop.f32.mrf.mxu0
    %v194 = vadd.f32 0.0, %v193
    %195 = vdwg.mxu0
    %v212 = vunpack.c.l.b16 %v34
    %v213 = vunpack.c.l.b16 %v35
    %v214 = vunpack.c.l.b16 %v36
    %v215 = vunpack.c.l.b16 %v37
    %v216 = vunpack.c.l.b16 %v38
    %v217 = vunpack.c.l.b16 %v39
    %v218 = vunpack.c.l.b16 %v40
    %v219 = vunpack.c.l.b16 %v41
    %v220 = vunpack.c.l.b16 %v42
    %v221 = vunpack.c.l.b16 %v43
    %v222 = vunpack.c.l.b16 %v44
    %v223 = vunpack.c.l.b16 %v45
    %v224 = vunpack.c.l.b16 %v46
    %v225 = vunpack.c.l.b16 %v47
    %v226 = vunpack.c.l.b16 %v48
    %v227 = vunpack.c.l.b16 %v49
    %v228 = vpack.c.b16 %v213, %v212
    %v229 = vpack.c.b16 %v215, %v214
    %v230 = vpack.c.b16 %v217, %v216
    %v231 = vpack.c.b16 %v219, %v218
    %v232 = vpack.c.b16 %v221, %v220
    %v233 = vpack.c.b16 %v223, %v222
    %v234 = vpack.c.b16 %v225, %v224
    %v235 = vpack.c.b16 %v227, %v226
    %v238 = vunpack.c.l.b16 %v50
    %v239 = vunpack.c.l.b16 %v51
    %v240 = vpack.c.b16 %v239, %v238
    %v243 = vsel %vm122, %v228, 0
    %v246 = vsel %vm122, %v229, 0
    %v249 = vsel %vm122, %v230, 0
    %v252 = vsel %vm122, %v231, 0
    %v255 = vsel %vm122, %v232, 0
    %v258 = vsel %vm122, %v233, 0
    %v261 = vsel %vm122, %v234, 0
    %v264 = vsel %vm122, %v235, 0
    %266 = vmatpush.bf16.msra.mxu0 0
    %267 = vmatpush.bf16.msra.mxu0 0
    %268 = vmatpush.bf16.msra.mxu0 0
    %269 = vmatpush.bf16.msra.mxu0 0
    %270 = vmatpush.bf16.msra.mxu0 0
    %271 = vmatpush.bf16.msra.mxu0 0
    %272 = vmatpush.bf16.msra.mxu0 0
    %273 = vmatpush.bf16.msra.mxu0 %v240
    %274 = vmatmul.bf16.gmra.mxu0 %v243
    %v275 = vpop.f32.mrf.mxu0
    %v276 = vadd.f32 %v157, %v275
    %v277 = vpop.f32.mrf.mxu0
    %v278 = vadd.f32 %v159, %v277
    %279 = vmatmul.bf16.gmra.mxu0 %v246
    %v280 = vpop.f32.mrf.mxu0
    %v281 = vadd.f32 %v162, %v280
    %v282 = vpop.f32.mrf.mxu0
    %v283 = vadd.f32 %v164, %v282
    %284 = vmatmul.bf16.gmra.mxu0 %v249
    %v285 = vpop.f32.mrf.mxu0
    %v286 = vadd.f32 %v167, %v285
    %v287 = vpop.f32.mrf.mxu0
    %v288 = vadd.f32 %v169, %v287
    %289 = vmatmul.bf16.gmra.mxu0 %v252
    %v290 = vpop.f32.mrf.mxu0
    %v291 = vadd.f32 %v172, %v290
    %v292 = vpop.f32.mrf.mxu0
    %v293 = vadd.f32 %v174, %v292
    %294 = vmatmul.bf16.gmra.mxu0 %v255
    %v295 = vpop.f32.mrf.mxu0
    %v296 = vadd.f32 %v177, %v295
    %v297 = vpop.f32.mrf.mxu0
    %v298 = vadd.f32 %v179, %v297
    %299 = vmatmul.bf16.gmra.mxu0 %v258
    %v300 = vpop.f32.mrf.mxu0
    %v301 = vadd.f32 %v182, %v300
    %v302 = vpop.f32.mrf.mxu0
    %v303 = vadd.f32 %v184, %v302
    %304 = vmatmul.bf16.gmra.mxu0 %v261
    %v305 = vpop.f32.mrf.mxu0
    %v306 = vadd.f32 %v187, %v305
    %v307 = vpop.f32.mrf.mxu0
    %v308 = vadd.f32 %v189, %v307
    %309 = vmatmul.bf16.gmra.mxu0 %v264
    %v310 = vpop.f32.mrf.mxu0
    %v311 = vadd.f32 %v192, %v310
    %v312 = vpop.f32.mrf.mxu0
    %v313 = vadd.f32 %v194, %v312
    %314 = vdwg.mxu0
    %s315 = sadd.s32 %s29, 64
    %s316 = sshra.s32 %s315, 3
    %s317 = sand.u32 %s315, 7
    %s318 = smul.addr %s316, 4
    %s319 = scalar_lea.vmem %s0, %s318
    %v320 = vld [vmem:[%s319] sm:$0xf]
    %v321 = vld [vmem:[%s319 + $0x4] sm:$0xf]
    %v322 = vld [vmem:[%s319 + $0x8] sm:$0xf]
    %v323 = vld [vmem:[%s319 + $0xc] sm:$0xf]
    %v324 = vld [vmem:[%s319 + $0x10] sm:$0xf]
    %v325 = vld [vmem:[%s319 + $0x14] sm:$0xf]
    %v326 = vld [vmem:[%s319 + $0x18] sm:$0xf]
    %v327 = vld [vmem:[%s319 + $0x1c] sm:$0xf]
    %v328 = vld [vmem:[%s319 + $0x20] sm:$0xf]
    %v329 = vld [vmem:[%s319 + $0x24] sm:$0xf]
    %v330 = vld [vmem:[%s319 + $0x28] sm:$0xf]
    %v331 = vld [vmem:[%s319 + $0x2c] sm:$0xf]
    %v332 = vld [vmem:[%s319 + $0x30] sm:$0xf]
    %v333 = vld [vmem:[%s319 + $0x34] sm:$0xf]
    %v334 = vld [vmem:[%s319 + $0x38] sm:$0xf]
    %v335 = vld [vmem:[%s319 + $0x3c] sm:$0xf]
    %s336 = scalar_lea.vmem %s1, 16
    %v337 = vld [vmem:[%s336] sm:$0xf]
    %v338 = vld [vmem:[%s336 + $0x4] sm:$0xf]
    %v355 = vunpack.c.l.b16 %v320
    %v356 = vunpack.c.l.b16 %v321
    %v357 = vunpack.c.l.b16 %v322
    %v358 = vunpack.c.l.b16 %v323
    %v359 = vunpack.c.l.b16 %v324
    %v360 = vunpack.c.l.b16 %v325
    %v361 = vunpack.c.l.b16 %v326
    %v362 = vunpack.c.l.b16 %v327
    %v363 = vunpack.c.l.b16 %v328
    %v364 = vunpack.c.l.b16 %v329
    %v365 = vunpack.c.l.b16 %v330
    %v366 = vunpack.c.l.b16 %v331
    %v367 = vunpack.c.l.b16 %v332
    %v368 = vunpack.c.l.b16 %v333
    %v369 = vunpack.c.l.b16 %v334
    %v370 = vunpack.c.l.b16 %v335
    %v371 = vpack.c.b16 %v356, %v355
    %v372 = vpack.c.b16 %v358, %v357
    %v373 = vpack.c.b16 %v360, %v359
    %v374 = vpack.c.b16 %v362, %v361
    %v375 = vpack.c.b16 %v364, %v363
    %v376 = vpack.c.b16 %v366, %v365
    %v377 = vpack.c.b16 %v368, %v367
    %v378 = vpack.c.b16 %v370, %v369
    %v381 = vunpack.c.l.b16 %v337
    %v382 = vunpack.c.l.b16 %v338
    %v383 = vpack.c.b16 %v382, %v381
    %v386 = vsel %vm122, %v371, 0
    %v389 = vsel %vm122, %v372, 0
    %v392 = vsel %vm122, %v373, 0
    %v395 = vsel %vm122, %v374, 0
    %v398 = vsel %vm122, %v375, 0
    %v401 = vsel %vm122, %v376, 0
    %v404 = vsel %vm122, %v377, 0
    %v407 = vsel %vm122, %v378, 0
    %409 = vmatpush.bf16.msra.mxu0 0
    %410 = vmatpush.bf16.msra.mxu0 0
    %411 = vmatpush.bf16.msra.mxu0 0
    %412 = vmatpush.bf16.msra.mxu0 0
    %413 = vmatpush.bf16.msra.mxu0 0
    %414 = vmatpush.bf16.msra.mxu0 0
    %415 = vmatpush.bf16.msra.mxu0 0
    %416 = vmatpush.bf16.msra.mxu0 %v383
    %417 = vmatmul.bf16.gmra.mxu0 %v386
    %v418 = vpop.f32.mrf.mxu0
    %v419 = vadd.f32 0.0, %v418
    %v420 = vpop.f32.mrf.mxu0
    %v421 = vadd.f32 0.0, %v420
    %422 = vmatmul.bf16.gmra.mxu0 %v389
    %v423 = vpop.f32.mrf.mxu0
    %v424 = vadd.f32 0.0, %v423
    %v425 = vpop.f32.mrf.mxu0
    %v426 = vadd.f32 0.0, %v425
    %427 = vmatmul.bf16.gmra.mxu0 %v392
    %v428 = vpop.f32.mrf.mxu0
    %v429 = vadd.f32 0.0, %v428
    %v430 = vpop.f32.mrf.mxu0
    %v431 = vadd.f32 0.0, %v430
    %432 = vmatmul.bf16.gmra.mxu0 %v395
    %v433 = vpop.f32.mrf.mxu0
    %v434 = vadd.f32 0.0, %v433
    %v435 = vpop.f32.mrf.mxu0
    %v436 = vadd.f32 0.0, %v435
    %437 = vmatmul.bf16.gmra.mxu0 %v398
    %v438 = vpop.f32.mrf.mxu0
    %v439 = vadd.f32 0.0, %v438
    %v440 = vpop.f32.mrf.mxu0
    %v441 = vadd.f32 0.0, %v440
    %442 = vmatmul.bf16.gmra.mxu0 %v401
    %v443 = vpop.f32.mrf.mxu0
    %v444 = vadd.f32 0.0, %v443
    %v445 = vpop.f32.mrf.mxu0
    %v446 = vadd.f32 0.0, %v445
    %447 = vmatmul.bf16.gmra.mxu0 %v404
    %v448 = vpop.f32.mrf.mxu0
    %v449 = vadd.f32 0.0, %v448
    %v450 = vpop.f32.mrf.mxu0
    %v451 = vadd.f32 0.0, %v450
    %452 = vmatmul.bf16.gmra.mxu0 %v407
    %v453 = vpop.f32.mrf.mxu0
    %v454 = vadd.f32 0.0, %v453
    %v455 = vpop.f32.mrf.mxu0
    %v456 = vadd.f32 0.0, %v455
    %457 = vdwg.mxu0
    %v458 = vadd.f32 %v276, %v419
    %v459 = vadd.f32 %v278, %v421
    %v460 = vadd.f32 %v281, %v424
    %v461 = vadd.f32 %v283, %v426
    %v462 = vadd.f32 %v286, %v429
    %v463 = vadd.f32 %v288, %v431
    %v464 = vadd.f32 %v291, %v434
    %v465 = vadd.f32 %v293, %v436
    %v466 = vadd.f32 %v296, %v439
    %v467 = vadd.f32 %v298, %v441
    %v468 = vadd.f32 %v301, %v444
    %v469 = vadd.f32 %v303, %v446
    %v470 = vadd.f32 %v306, %v449
    %v471 = vadd.f32 %v308, %v451
    %v472 = vadd.f32 %v311, %v454
    %v473 = vadd.f32 %v313, %v456
    %s474 = sadd.s32 %s29, 96
    %s475 = sshra.s32 %s474, 3
    %s476 = sand.u32 %s474, 7
    %s477 = smul.addr %s475, 4
    %s478 = scalar_lea.vmem %s0, %s477
    %v479 = vld [vmem:[%s478] sm:$0xf]
    %v480 = vld [vmem:[%s478 + $0x4] sm:$0xf]
    %v481 = vld [vmem:[%s478 + $0x8] sm:$0xf]
    %v482 = vld [vmem:[%s478 + $0xc] sm:$0xf]
    %v483 = vld [vmem:[%s478 + $0x10] sm:$0xf]
    %v484 = vld [vmem:[%s478 + $0x14] sm:$0xf]
    %v485 = vld [vmem:[%s478 + $0x18] sm:$0xf]
    %v486 = vld [vmem:[%s478 + $0x1c] sm:$0xf]
    %v487 = vld [vmem:[%s478 + $0x20] sm:$0xf]
    %v488 = vld [vmem:[%s478 + $0x24] sm:$0xf]
    %v489 = vld [vmem:[%s478 + $0x28] sm:$0xf]
    %v490 = vld [vmem:[%s478 + $0x2c] sm:$0xf]
    %v491 = vld [vmem:[%s478 + $0x30] sm:$0xf]
    %v492 = vld [vmem:[%s478 + $0x34] sm:$0xf]
    %v493 = vld [vmem:[%s478 + $0x38] sm:$0xf]
    %v494 = vld [vmem:[%s478 + $0x3c] sm:$0xf]
    %s495 = scalar_lea.vmem %s1, 24
    %v496 = vld [vmem:[%s495] sm:$0xf]
    %v497 = vld [vmem:[%s495 + $0x4] sm:$0xf]
    %v514 = vunpack.c.l.b16 %v479
    %v515 = vunpack.c.l.b16 %v480
    %v516 = vunpack.c.l.b16 %v481
    %v517 = vunpack.c.l.b16 %v482
    %v518 = vunpack.c.l.b16 %v483
    %v519 = vunpack.c.l.b16 %v484
    %v520 = vunpack.c.l.b16 %v485
    %v521 = vunpack.c.l.b16 %v486
    %v522 = vunpack.c.l.b16 %v487
    %v523 = vunpack.c.l.b16 %v488
    %v524 = vunpack.c.l.b16 %v489
    %v525 = vunpack.c.l.b16 %v490
    %v526 = vunpack.c.l.b16 %v491
    %v527 = vunpack.c.l.b16 %v492
    %v528 = vunpack.c.l.b16 %v493
    %v529 = vunpack.c.l.b16 %v494
    %v530 = vpack.c.b16 %v515, %v514
    %v531 = vpack.c.b16 %v517, %v516
    %v532 = vpack.c.b16 %v519, %v518
    %v533 = vpack.c.b16 %v521, %v520
    %v534 = vpack.c.b16 %v523, %v522
    %v535 = vpack.c.b16 %v525, %v524
    %v536 = vpack.c.b16 %v527, %v526
    %v537 = vpack.c.b16 %v529, %v528
    %v540 = vunpack.c.l.b16 %v496
    %v541 = vunpack.c.l.b16 %v497
    %v542 = vpack.c.b16 %v541, %v540
    %v545 = vsel %vm122, %v530, 0
    %v548 = vsel %vm122, %v531, 0
    %v551 = vsel %vm122, %v532, 0
    %v554 = vsel %vm122, %v533, 0
    %v557 = vsel %vm122, %v534, 0
    %v560 = vsel %vm122, %v535, 0
    %v563 = vsel %vm122, %v536, 0
    %v566 = vsel %vm122, %v537, 0
    %568 = vmatpush.bf16.msra.mxu0 0
    %569 = vmatpush.bf16.msra.mxu0 0
    %570 = vmatpush.bf16.msra.mxu0 0
    %571 = vmatpush.bf16.msra.mxu0 0
    %572 = vmatpush.bf16.msra.mxu0 0
    %573 = vmatpush.bf16.msra.mxu0 0
    %574 = vmatpush.bf16.msra.mxu0 0
    %575 = vmatpush.bf16.msra.mxu0 %v542
    %576 = vmatmul.bf16.gmra.mxu0 %v545
    %v577 = vpop.f32.mrf.mxu0
    %v578 = vadd.f32 0.0, %v577
    %v579 = vpop.f32.mrf.mxu0
    %v580 = vadd.f32 0.0, %v579
    %581 = vmatmul.bf16.gmra.mxu0 %v548
    %v582 = vpop.f32.mrf.mxu0
    %v583 = vadd.f32 0.0, %v582
    %v584 = vpop.f32.mrf.mxu0
    %v585 = vadd.f32 0.0, %v584
    %586 = vmatmul.bf16.gmra.mxu0 %v551
    %v587 = vpop.f32.mrf.mxu0
    %v588 = vadd.f32 0.0, %v587
    %v589 = vpop.f32.mrf.mxu0
    %v590 = vadd.f32 0.0, %v589
    %591 = vmatmul.bf16.gmra.mxu0 %v554
    %v592 = vpop.f32.mrf.mxu0
    %v593 = vadd.f32 0.0, %v592
    %v594 = vpop.f32.mrf.mxu0
    %v595 = vadd.f32 0.0, %v594
    %596 = vmatmul.bf16.gmra.mxu0 %v557
    %v597 = vpop.f32.mrf.mxu0
    %v598 = vadd.f32 0.0, %v597
    %v599 = vpop.f32.mrf.mxu0
    %v600 = vadd.f32 0.0, %v599
    %601 = vmatmul.bf16.gmra.mxu0 %v560
    %v602 = vpop.f32.mrf.mxu0
    %v603 = vadd.f32 0.0, %v602
    %v604 = vpop.f32.mrf.mxu0
    %v605 = vadd.f32 0.0, %v604
    %606 = vmatmul.bf16.gmra.mxu0 %v563
    %v607 = vpop.f32.mrf.mxu0
    %v608 = vadd.f32 0.0, %v607
    %v609 = vpop.f32.mrf.mxu0
    %v610 = vadd.f32 0.0, %v609
    %611 = vmatmul.bf16.gmra.mxu0 %v566
    %v612 = vpop.f32.mrf.mxu0
    %v613 = vadd.f32 0.0, %v612
    %v614 = vpop.f32.mrf.mxu0
    %v615 = vadd.f32 0.0, %v614
    %616 = vdwg.mxu0
    %v617 = vadd.f32 %v458, %v578
    %v618 = vadd.f32 %v459, %v580
    %v619 = vadd.f32 %v460, %v583
    %v620 = vadd.f32 %v461, %v585
    %v621 = vadd.f32 %v462, %v588
    %v622 = vadd.f32 %v463, %v590
    %v623 = vadd.f32 %v464, %v593
    %v624 = vadd.f32 %v465, %v595
    %v625 = vadd.f32 %v466, %v598
    %v626 = vadd.f32 %v467, %v600
    %v627 = vadd.f32 %v468, %v603
    %v628 = vadd.f32 %v469, %v605
    %v629 = vadd.f32 %v470, %v608
    %v630 = vadd.f32 %v471, %v610
    %v631 = vadd.f32 %v472, %v613
    %v632 = vadd.f32 %v473, %v615
    %s633 = sadd.s32 %s29, 128
    %s634 = sshra.s32 %s633, 3
    %s635 = sand.u32 %s633, 7
    %s636 = smul.addr %s634, 4
    %s637 = scalar_lea.vmem %s0, %s636
    %v638 = vld [vmem:[%s637] sm:$0xf]
    %v639 = vld [vmem:[%s637 + $0x4] sm:$0xf]
    %v640 = vld [vmem:[%s637 + $0x8] sm:$0xf]
    %v641 = vld [vmem:[%s637 + $0xc] sm:$0xf]
    %v642 = vld [vmem:[%s637 + $0x10] sm:$0xf]
    %v643 = vld [vmem:[%s637 + $0x14] sm:$0xf]
    %v644 = vld [vmem:[%s637 + $0x18] sm:$0xf]
    %v645 = vld [vmem:[%s637 + $0x1c] sm:$0xf]
    %v646 = vld [vmem:[%s637 + $0x20] sm:$0xf]
    %v647 = vld [vmem:[%s637 + $0x24] sm:$0xf]
    %v648 = vld [vmem:[%s637 + $0x28] sm:$0xf]
    %v649 = vld [vmem:[%s637 + $0x2c] sm:$0xf]
    %v650 = vld [vmem:[%s637 + $0x30] sm:$0xf]
    %v651 = vld [vmem:[%s637 + $0x34] sm:$0xf]
    %v652 = vld [vmem:[%s637 + $0x38] sm:$0xf]
    %v653 = vld [vmem:[%s637 + $0x3c] sm:$0xf]
    %s654 = scalar_lea.vmem %s1, 32
    %v655 = vld [vmem:[%s654] sm:$0xf]
    %v656 = vld [vmem:[%s654 + $0x4] sm:$0xf]
    %v673 = vunpack.c.l.b16 %v638
    %v674 = vunpack.c.l.b16 %v639
    %v675 = vunpack.c.l.b16 %v640
    %v676 = vunpack.c.l.b16 %v641
    %v677 = vunpack.c.l.b16 %v642
    %v678 = vunpack.c.l.b16 %v643
    %v679 = vunpack.c.l.b16 %v644
    %v680 = vunpack.c.l.b16 %v645
    %v681 = vunpack.c.l.b16 %v646
    %v682 = vunpack.c.l.b16 %v647
    %v683 = vunpack.c.l.b16 %v648
    %v684 = vunpack.c.l.b16 %v649
    %v685 = vunpack.c.l.b16 %v650
    %v686 = vunpack.c.l.b16 %v651
    %v687 = vunpack.c.l.b16 %v652
    %v688 = vunpack.c.l.b16 %v653
    %v689 = vpack.c.b16 %v674, %v673
    %v690 = vpack.c.b16 %v676, %v675
    %v691 = vpack.c.b16 %v678, %v677
    %v692 = vpack.c.b16 %v680, %v679
    %v693 = vpack.c.b16 %v682, %v681
    %v694 = vpack.c.b16 %v684, %v683
    %v695 = vpack.c.b16 %v686, %v685
    %v696 = vpack.c.b16 %v688, %v687
    %v699 = vunpack.c.l.b16 %v655
    %v700 = vunpack.c.l.b16 %v656
    %v701 = vpack.c.b16 %v700, %v699
    %v704 = vsel %vm122, %v689, 0
    %v707 = vsel %vm122, %v690, 0
    %v710 = vsel %vm122, %v691, 0
    %v713 = vsel %vm122, %v692, 0
    %v716 = vsel %vm122, %v693, 0
    %v719 = vsel %vm122, %v694, 0
    %v722 = vsel %vm122, %v695, 0
    %v725 = vsel %vm122, %v696, 0
    %727 = vmatpush.bf16.msra.mxu0 0
    %728 = vmatpush.bf16.msra.mxu0 0
    %729 = vmatpush.bf16.msra.mxu0 0
    %730 = vmatpush.bf16.msra.mxu0 0
    %731 = vmatpush.bf16.msra.mxu0 0
    %732 = vmatpush.bf16.msra.mxu0 0
    %733 = vmatpush.bf16.msra.mxu0 0
    %734 = vmatpush.bf16.msra.mxu0 %v701
    %735 = vmatmul.bf16.gmra.mxu0 %v704
    %v736 = vpop.f32.mrf.mxu0
    %v737 = vadd.f32 0.0, %v736
    %v738 = vpop.f32.mrf.mxu0
    %v739 = vadd.f32 0.0, %v738
    %740 = vmatmul.bf16.gmra.mxu0 %v707
    %v741 = vpop.f32.mrf.mxu0
    %v742 = vadd.f32 0.0, %v741
    %v743 = vpop.f32.mrf.mxu0
    %v744 = vadd.f32 0.0, %v743
    %745 = vmatmul.bf16.gmra.mxu0 %v710
    %v746 = vpop.f32.mrf.mxu0
    %v747 = vadd.f32 0.0, %v746
    %v748 = vpop.f32.mrf.mxu0
    %v749 = vadd.f32 0.0, %v748
    %750 = vmatmul.bf16.gmra.mxu0 %v713
    %v751 = vpop.f32.mrf.mxu0
    %v752 = vadd.f32 0.0, %v751
    %v753 = vpop.f32.mrf.mxu0
    %v754 = vadd.f32 0.0, %v753
    %755 = vmatmul.bf16.gmra.mxu0 %v716
    %v756 = vpop.f32.mrf.mxu0
    %v757 = vadd.f32 0.0, %v756
    %v758 = vpop.f32.mrf.mxu0
    %v759 = vadd.f32 0.0, %v758
    %760 = vmatmul.bf16.gmra.mxu0 %v719
    %v761 = vpop.f32.mrf.mxu0
    %v762 = vadd.f32 0.0, %v761
    %v763 = vpop.f32.mrf.mxu0
    %v764 = vadd.f32 0.0, %v763
    %765 = vmatmul.bf16.gmra.mxu0 %v722
    %v766 = vpop.f32.mrf.mxu0
    %v767 = vadd.f32 0.0, %v766
    %v768 = vpop.f32.mrf.mxu0
    %v769 = vadd.f32 0.0, %v768
    %770 = vmatmul.bf16.gmra.mxu0 %v725
    %v771 = vpop.f32.mrf.mxu0
    %v772 = vadd.f32 0.0, %v771
    %v773 = vpop.f32.mrf.mxu0
    %v774 = vadd.f32 0.0, %v773
    %775 = vdwg.mxu0
    %v776 = vadd.f32 %v617, %v737
    %v777 = vadd.f32 %v618, %v739
    %v778 = vadd.f32 %v619, %v742
    %v779 = vadd.f32 %v620, %v744
    %v780 = vadd.f32 %v621, %v747
    %v781 = vadd.f32 %v622, %v749
    %v782 = vadd.f32 %v623, %v752
    %v783 = vadd.f32 %v624, %v754
    %v784 = vadd.f32 %v625, %v757
    %v785 = vadd.f32 %v626, %v759
    %v786 = vadd.f32 %v627, %v762
    %v787 = vadd.f32 %v628, %v764
    %v788 = vadd.f32 %v629, %v767
    %v789 = vadd.f32 %v630, %v769
    %v790 = vadd.f32 %v631, %v772
    %v791 = vadd.f32 %v632, %v774
    %v792 = vlaneseq
    %v793 = vshrl.u32 %v792, 7
    %v794 = vadd.s32 %v793, 8
    %v795 = vadd.s32 %v793, 16
    %v796 = vadd.s32 %v793, 24
    %v797 = vadd.s32 %v793, 32
    %v798 = vadd.s32 %v793, 40
    %v799 = vadd.s32 %v793, 48
    %v800 = vadd.s32 %v793, 56
    %v801 = vadd.s32 %v793, 64
    %v802 = vadd.s32 %v793, 72
    %v803 = vadd.s32 %v793, 80
    %v804 = vadd.s32 %v793, 88
    %v805 = vadd.s32 %v793, 96
    %v806 = vadd.s32 %v793, 104
    %v807 = vadd.s32 %v793, 112
    %v808 = vadd.s32 %v793, 120
    %v809 = vstv %s29
    %v810 = vadd.s32 %v809, %v793
    %v811 = vadd.s32 %v809, %v794
    %v812 = vadd.s32 %v809, %v795
    %v813 = vadd.s32 %v809, %v796
    %v814 = vadd.s32 %v809, %v797
    %v815 = vadd.s32 %v809, %v798
    %v816 = vadd.s32 %v809, %v799
    %v817 = vadd.s32 %v809, %v800
    %v818 = vadd.s32 %v809, %v801
    %v819 = vadd.s32 %v809, %v802
    %v820 = vadd.s32 %v809, %v803
    %v821 = vadd.s32 %v809, %v804
    %v822 = vadd.s32 %v809, %v805
    %v823 = vadd.s32 %v809, %v806
    %v824 = vadd.s32 %v809, %v807
    %v825 = vadd.s32 %v809, %v808
    %v826 = vshra.s32 %v810, 5
    %v827 = vshra.s32 %v811, 5
    %v828 = vshra.s32 %v812, 5
    %v829 = vshra.s32 %v813, 5
    %v830 = vshra.s32 %v814, 5
    %v831 = vshra.s32 %v815, 5
    %v832 = vshra.s32 %v816, 5
    %v833 = vshra.s32 %v817, 5
    %v834 = vshra.s32 %v818, 5
    %v835 = vshra.s32 %v819, 5
    %v836 = vshra.s32 %v820, 5
    %v837 = vshra.s32 %v821, 5
    %v838 = vshra.s32 %v822, 5
    %v839 = vshra.s32 %v823, 5
    %v840 = vshra.s32 %v824, 5
    %v841 = vshra.s32 %v825, 5
    %v842 = vand.u32 %v826, 31
    %v843 = vand.u32 %v827, 31
    %v844 = vand.u32 %v828, 31
    %v845 = vand.u32 %v829, 31
    %v846 = vand.u32 %v830, 31
    %v847 = vand.u32 %v831, 31
    %v848 = vand.u32 %v832, 31
    %v849 = vand.u32 %v833, 31
    %v850 = vand.u32 %v834, 31
    %v851 = vand.u32 %v835, 31
    %v852 = vand.u32 %v836, 31
    %v853 = vand.u32 %v837, 31
    %v854 = vand.u32 %v838, 31
    %v855 = vand.u32 %v839, 31
    %v856 = vand.u32 %v840, 31
    %v857 = vand.u32 %v841, 31
    %v858 = vand.u32 %v810, 31
    %v859 = vand.u32 %v811, 31
    %v860 = vand.u32 %v812, 31
    %v861 = vand.u32 %v813, 31
    %v862 = vand.u32 %v814, 31
    %v863 = vand.u32 %v815, 31
    %v864 = vand.u32 %v816, 31
    %v865 = vand.u32 %v817, 31
    %v866 = vand.u32 %v818, 31
    %v867 = vand.u32 %v819, 31
    %v868 = vand.u32 %v820, 31
    %v869 = vand.u32 %v821, 31
    %v870 = vand.u32 %v822, 31
    %v871 = vand.u32 %v823, 31
    %v872 = vand.u32 %v824, 31
    %v873 = vand.u32 %v825, 31
    %vm874 = vcmp.lt.s32.totalorder %v810, 4096
    %vm875 = vcmp.lt.s32.totalorder %v811, 4096
    %vm876 = vcmp.lt.s32.totalorder %v812, 4096
    %vm877 = vcmp.lt.s32.totalorder %v813, 4096
    %vm878 = vcmp.lt.s32.totalorder %v814, 4096
    %vm879 = vcmp.lt.s32.totalorder %v815, 4096
    %vm880 = vcmp.lt.s32.totalorder %v816, 4096
    %vm881 = vcmp.lt.s32.totalorder %v817, 4096
    %vm882 = vcmp.lt.s32.totalorder %v818, 4096
    %vm883 = vcmp.lt.s32.totalorder %v819, 4096
    %vm884 = vcmp.lt.s32.totalorder %v820, 4096
    %vm885 = vcmp.lt.s32.totalorder %v821, 4096
    %vm886 = vcmp.lt.s32.totalorder %v822, 4096
    %vm887 = vcmp.lt.s32.totalorder %v823, 4096
    %vm888 = vcmp.lt.s32.totalorder %v824, 4096
    %vm889 = vcmp.lt.s32.totalorder %v825, 4096
    %vm890 = vcmp.lt.s32.totalorder %v842, 28
    %vm891 = vcmp.lt.s32.totalorder %v843, 28
    %vm892 = vcmp.lt.s32.totalorder %v844, 28
    %vm893 = vcmp.lt.s32.totalorder %v845, 28
    %vm894 = vcmp.lt.s32.totalorder %v846, 28
    %vm895 = vcmp.lt.s32.totalorder %v847, 28
    %vm896 = vcmp.lt.s32.totalorder %v848, 28
    %vm897 = vcmp.lt.s32.totalorder %v849, 28
    %vm898 = vcmp.lt.s32.totalorder %v850, 28
    %vm899 = vcmp.lt.s32.totalorder %v851, 28
    %vm900 = vcmp.lt.s32.totalorder %v852, 28
    %vm901 = vcmp.lt.s32.totalorder %v853, 28
    %vm902 = vcmp.lt.s32.totalorder %v854, 28
    %vm903 = vcmp.lt.s32.totalorder %v855, 28
    %vm904 = vcmp.lt.s32.totalorder %v856, 28
    %vm905 = vcmp.lt.s32.totalorder %v857, 28
    %vm906 = vmand %vm874, %vm890
    %vm907 = vmand %vm875, %vm891
    %vm908 = vmand %vm876, %vm892
    %vm909 = vmand %vm877, %vm893
    %vm910 = vmand %vm878, %vm894
    %vm911 = vmand %vm879, %vm895
    %vm912 = vmand %vm880, %vm896
    %vm913 = vmand %vm881, %vm897
    %vm914 = vmand %vm882, %vm898
    %vm915 = vmand %vm883, %vm899
    %vm916 = vmand %vm884, %vm900
    %vm917 = vmand %vm885, %vm901
    %vm918 = vmand %vm886, %vm902
    %vm919 = vmand %vm887, %vm903
    %vm920 = vmand %vm888, %vm904
    %vm921 = vmand %vm889, %vm905
    %vm922 = vcmp.lt.s32.totalorder %v858, 28
    %vm923 = vcmp.lt.s32.totalorder %v859, 28
    %vm924 = vcmp.lt.s32.totalorder %v860, 28
    %vm925 = vcmp.lt.s32.totalorder %v861, 28
    %vm926 = vcmp.lt.s32.totalorder %v862, 28
    %vm927 = vcmp.lt.s32.totalorder %v863, 28
    %vm928 = vcmp.lt.s32.totalorder %v864, 28
    %vm929 = vcmp.lt.s32.totalorder %v865, 28
    %vm930 = vcmp.lt.s32.totalorder %v866, 28
    %vm931 = vcmp.lt.s32.totalorder %v867, 28
    %vm932 = vcmp.lt.s32.totalorder %v868, 28
    %vm933 = vcmp.lt.s32.totalorder %v869, 28
    %vm934 = vcmp.lt.s32.totalorder %v870, 28
    %vm935 = vcmp.lt.s32.totalorder %v871, 28
    %vm936 = vcmp.lt.s32.totalorder %v872, 28
    %vm937 = vcmp.lt.s32.totalorder %v873, 28
    %vm938 = vmand %vm906, %vm922
    %vm939 = vmand %vm907, %vm923
    %vm940 = vmand %vm908, %vm924
    %vm941 = vmand %vm909, %vm925
    %vm942 = vmand %vm910, %vm926
    %vm943 = vmand %vm911, %vm927
    %vm944 = vmand %vm912, %vm928
    %vm945 = vmand %vm913, %vm929
    %vm946 = vmand %vm914, %vm930
    %vm947 = vmand %vm915, %vm931
    %vm948 = vmand %vm916, %vm932
    %vm949 = vmand %vm917, %vm933
    %vm950 = vmand %vm918, %vm934
    %vm951 = vmand %vm919, %vm935
    %vm952 = vmand %vm920, %vm936
    %vm953 = vmand %vm921, %vm937
    %v954 = vsel %vm938, 1, 0
    %v955 = vsel %vm939, 1, 0
    %v956 = vsel %vm940, 1, 0
    %v957 = vsel %vm941, 1, 0
    %v958 = vsel %vm942, 1, 0
    %v959 = vsel %vm943, 1, 0
    %v960 = vsel %vm944, 1, 0
    %v961 = vsel %vm945, 1, 0
    %v962 = vsel %vm946, 1, 0
    %v963 = vsel %vm947, 1, 0
    %v964 = vsel %vm948, 1, 0
    %v965 = vsel %vm949, 1, 0
    %v966 = vsel %vm950, 1, 0
    %v967 = vsel %vm951, 1, 0
    %v968 = vsel %vm952, 1, 0
    %v969 = vsel %vm953, 1, 0
    %v970 = vcvt.s32.f32 %v954
    %v971 = vcvt.s32.f32 %v955
    %v972 = vcvt.s32.f32 %v956
    %v973 = vcvt.s32.f32 %v957
    %v974 = vcvt.s32.f32 %v958
    %v975 = vcvt.s32.f32 %v959
    %v976 = vcvt.s32.f32 %v960
    %v977 = vcvt.s32.f32 %v961
    %v978 = vcvt.s32.f32 %v962
    %v979 = vcvt.s32.f32 %v963
    %v980 = vcvt.s32.f32 %v964
    %v981 = vcvt.s32.f32 %v965
    %v982 = vcvt.s32.f32 %v966
    %v983 = vcvt.s32.f32 %v967
    %v984 = vcvt.s32.f32 %v968
    %v985 = vcvt.s32.f32 %v969
    %v986 = vmul.f32 %v776, %v970
    %v987 = vmul.f32 %v777, %v971
    %v988 = vmul.f32 %v778, %v972
    %v989 = vmul.f32 %v779, %v973
    %v990 = vmul.f32 %v780, %v974
    %v991 = vmul.f32 %v781, %v975
    %v992 = vmul.f32 %v782, %v976
    %v993 = vmul.f32 %v783, %v977
    %v994 = vmul.f32 %v784, %v978
    %v995 = vmul.f32 %v785, %v979
    %v996 = vmul.f32 %v786, %v980
    %v997 = vmul.f32 %v787, %v981
    %v998 = vmul.f32 %v788, %v982
    %v999 = vmul.f32 %v789, %v983
    %v1000 = vmul.f32 %v790, %v984
    %v1001 = vmul.f32 %v791, %v985
    %s1002 = scalar_lea.vmem [#allocation2], %s29
    %vm1003 = vcmask 64512
    %1004 = vst.msk [vmem:[%s1002] sm:$0xff] %vm1003, %v986
    %1005 = vst.msk [vmem:[%s1002 + $0x8] sm:$0xff] %vm1003, %v987
    %1006 = vst.msk [vmem:[%s1002 + $0x10] sm:$0xff] %vm1003, %v988
    %1007 = vst.msk [vmem:[%s1002 + $0x18] sm:$0xff] %vm1003, %v989
    %1008 = vst.msk [vmem:[%s1002 + $0x20] sm:$0xff] %vm1003, %v990
    %1009 = vst.msk [vmem:[%s1002 + $0x28] sm:$0xff] %vm1003, %v991
    %1010 = vst.msk [vmem:[%s1002 + $0x30] sm:$0xff] %vm1003, %v992
    %1011 = vst.msk [vmem:[%s1002 + $0x38] sm:$0xff] %vm1003, %v993
    %1012 = vst.msk [vmem:[%s1002 + $0x40] sm:$0xff] %vm1003, %v994
    %1013 = vst.msk [vmem:[%s1002 + $0x48] sm:$0xff] %vm1003, %v995
    %1014 = vst.msk [vmem:[%s1002 + $0x50] sm:$0xff] %vm1003, %v996
    %1015 = vst.msk [vmem:[%s1002 + $0x58] sm:$0xff] %vm1003, %v997
    %1016 = vst.msk [vmem:[%s1002 + $0x60] sm:$0xff] %vm1003, %v998
    %1017 = vst.msk [vmem:[%s1002 + $0x68] sm:$0xff] %vm1003, %v999
    %1018 = vst.msk [vmem:[%s1002 + $0x70] sm:$0xff] %vm1003, %v1000
    %1019 = vst.msk [vmem:[%s1002 + $0x78] sm:$0xff] %vm1003, %v1001
    %v1020 = vsel %vm1003, %v986, 0.0
    %v1021 = vsel %vm1003, %v987, 0.0
    %v1022 = vadd.f32 %v1020, %v1021
    %v1023 = vsel %vm1003, %v988, 0.0
    %v1024 = vadd.f32 %v1022, %v1023
    %v1025 = vsel %vm1003, %v989, 0.0
    %v1026 = vadd.f32 %v1024, %v1025
    %v1027 = vsel %vm1003, %v990, 0.0
    %v1028 = vadd.f32 %v1026, %v1027
    %v1029 = vsel %vm1003, %v991, 0.0
    %v1030 = vadd.f32 %v1028, %v1029
    %v1031 = vsel %vm1003, %v992, 0.0
    %v1032 = vadd.f32 %v1030, %v1031
    %v1033 = vsel %vm1003, %v993, 0.0
    %v1034 = vadd.f32 %v1032, %v1033
    %v1035 = vsel %vm1003, %v994, 0.0
    %v1036 = vadd.f32 %v1034, %v1035
    %v1037 = vsel %vm1003, %v995, 0.0
    %v1038 = vadd.f32 %v1036, %v1037
    %v1039 = vsel %vm1003, %v996, 0.0
    %v1040 = vadd.f32 %v1038, %v1039
    %v1041 = vsel %vm1003, %v997, 0.0
    %v1042 = vadd.f32 %v1040, %v1041
    %v1043 = vsel %vm1003, %v998, 0.0
    %v1044 = vadd.f32 %v1042, %v1043
    %v1045 = vsel %vm1003, %v999, 0.0
    %v1046 = vadd.f32 %v1044, %v1045
    %v1047 = vsel %vm1003, %v1000, 0.0
    %v1048 = vadd.f32 %v1046, %v1047
    %v1049 = vsel %vm1003, %v1001, 0.0
    %v1050 = vadd.f32 %v1048, %v1049
    %v1051 = vrot.slane %v1050, 4
    %v1052 = vadd.f32 %v1050, %v1051
    %v1053 = vrot.slane %v1052, 2
    %v1054 = vadd.f32 %v1052, %v1053
    %v1055 = vrot.slane %v1054, 1
    %v1056 = vadd.f32 %v1054, %v1055
    %v1057 = vadd.f32 %v27, %v1056
    %v1058 = vmul.f32 %v986, %v986
    %v1059 = vmul.f32 %v987, %v987
    %v1060 = vmul.f32 %v988, %v988
    %v1061 = vmul.f32 %v989, %v989
    %v1062 = vmul.f32 %v990, %v990
    %v1063 = vmul.f32 %v991, %v991
    %v1064 = vmul.f32 %v992, %v992
    %v1065 = vmul.f32 %v993, %v993
    %v1066 = vmul.f32 %v994, %v994
    %v1067 = vmul.f32 %v995, %v995
    %v1068 = vmul.f32 %v996, %v996
    %v1069 = vmul.f32 %v997, %v997
    %v1070 = vmul.f32 %v998, %v998
    %v1071 = vmul.f32 %v999, %v999
    %v1072 = vmul.f32 %v1000, %v1000
    %v1073 = vmul.f32 %v1001, %v1001
    %v1074 = vsel %vm1003, %v1058, 0.0
    %v1075 = vsel %vm1003, %v1059, 0.0
    %v1076 = vadd.f32 %v1074, %v1075
    %v1077 = vsel %vm1003, %v1060, 0.0
    %v1078 = vadd.f32 %v1076, %v1077
    %v1079 = vsel %vm1003, %v1061, 0.0
    %v1080 = vadd.f32 %v1078, %v1079
    %v1081 = vsel %vm1003, %v1062, 0.0
    %v1082 = vadd.f32 %v1080, %v1081
    %v1083 = vsel %vm1003, %v1063, 0.0
    %v1084 = vadd.f32 %v1082, %v1083
    %v1085 = vsel %vm1003, %v1064, 0.0
    %v1086 = vadd.f32 %v1084, %v1085
    %v1087 = vsel %vm1003, %v1065, 0.0
    %v1088 = vadd.f32 %v1086, %v1087
    %v1089 = vsel %vm1003, %v1066, 0.0
    %v1090 = vadd.f32 %v1088, %v1089
    %v1091 = vsel %vm1003, %v1067, 0.0
    %v1092 = vadd.f32 %v1090, %v1091
    %v1093 = vsel %vm1003, %v1068, 0.0
    %v1094 = vadd.f32 %v1092, %v1093
    %v1095 = vsel %vm1003, %v1069, 0.0
    %v1096 = vadd.f32 %v1094, %v1095
    %v1097 = vsel %vm1003, %v1070, 0.0
    %v1098 = vadd.f32 %v1096, %v1097
    %v1099 = vsel %vm1003, %v1071, 0.0
    %v1100 = vadd.f32 %v1098, %v1099
    %v1101 = vsel %vm1003, %v1072, 0.0
    %v1102 = vadd.f32 %v1100, %v1101
    %v1103 = vsel %vm1003, %v1073, 0.0
    %v1104 = vadd.f32 %v1102, %v1103
    %v1105 = vrot.slane %v1104, 4
    %v1106 = vadd.f32 %v1104, %v1105
    %v1107 = vrot.slane %v1106, 2
    %v1108 = vadd.f32 %v1106, %v1107
    %v1109 = vrot.slane %v1108, 1
    %v1110 = vadd.f32 %v1108, %v1109
    %v1111 = vadd.f32 %v28, %v1110
  $region26: #{net_forward.2} parent=0 // loop_footer
    %s26 = sadd.s32 1, %s22
  $region27: #{net_forward.2} parent=0 // loop_footer_branch
    %21 = sbr.rel target = $region23
  $region28: #{net_forward.2} parent=0 // loop_exit
    _
  %v1112 = vmul.f32 %v27, 0.00031887754
  %v1113 = vmul.f32 %v28, 0.00031887754
  %v1114 = vmul.f32 %v1112, %v1112
  %v1115 = vsub.f32 %v1113, %v1114
  %v1116 = vmax.f32 %v1115, 0.0
  %v1117 = vld [vmem:[%s3] sm:$0x1]
  %v1118 = vadd.f32 %v1116, 1e-05
  %v1119 = vrsqrt.pop %v1118
  %v1120 = vmul.f32 %v1119, %v1118
  %v1121 = vmul.f32 %v1120, %v1119
  %v1122 = vmul.f32 0.5, %v1121
  %v1123 = vsub.f32 1.5, %v1122
  %v1124 = vmul.f32 %v1119, %v1123
  %vm1125 = vweird.f32 %v1118
  %vm1126 = vweird.f32 %v1119
  %vm1127 = vmor %vm1125, %vm1126
  %v1128 = vsel %vm1127, %v1119, %v1124
  %v1129 = vmul.f32 %v1117, %v1128
  %v1130 = vld [vmem:[%s3 + $0x1] sm:$0x1]
  %v1131 = vmul.f32 %v1112, %v1129
  %v1132 = vsub.f32 %v1130, %v1131
  loop: start=0, step=1, limit=35
  $region29: #{net_forward.2} parent=0 // loop_pre_header
    _
  $region30: #{net_forward.2} parent=0 // loop_header
    %s1134 = sphi 0, %s1138
    %p1135 = scmp.ge.s32.totalorder %s1134, 35
  $region31: #{net_forward.2} parent=0 // loop_header_branch
    %1137 = sbr.rel (%p1135) target = $region35
  $region32: #{net_forward.2} parent=0 // loop_body
    %s1139 = smul.u32 %s1134, 128
    %s1140 = scalar_lea.vmem [#allocation2], %s1139
    %v1141 = vld [vmem:[%s1140] sm:$0xff]
    %v1142 = vld [vmem:[%s1140 + $0x8] sm:$0xff]
    %v1143 = vld [vmem:[%s1140 + $0x10] sm:$0xff]
    %v1144 = vld [vmem:[%s1140 + $0x18] sm:$0xff]
    %v1145 = vld [vmem:[%s1140 + $0x20] sm:$0xff]
    %v1146 = vld [vmem:[%s1140 + $0x28] sm:$0xff]
    %v1147 = vld [vmem:[%s1140 + $0x30] sm:$0xff]
    %v1148 = vld [vmem:[%s1140 + $0x38] sm:$0xff]
    %v1149 = vld [vmem:[%s1140 + $0x40] sm:$0xff]
    %v1150 = vld [vmem:[%s1140 + $0x48] sm:$0xff]
    %v1151 = vld [vmem:[%s1140 + $0x50] sm:$0xff]
    %v1152 = vld [vmem:[%s1140 + $0x58] sm:$0xff]
    %v1153 = vld [vmem:[%s1140 + $0x60] sm:$0xff]
    %v1154 = vld [vmem:[%s1140 + $0x68] sm:$0xff]
    %v1155 = vld [vmem:[%s1140 + $0x70] sm:$0xff]
    %v1156 = vld [vmem:[%s1140 + $0x78] sm:$0xff]
    %v1157 = vld [vmem:[%s1140 + $0x80] sm:$0xff]
    %v1158 = vld [vmem:[%s1140 + $0x88] sm:$0xff]
    %v1159 = vld [vmem:[%s1140 + $0x90] sm:$0xff]
    %v1160 = vld [vmem:[%s1140 + $0x98] sm:$0xff]
    %v1161 = vld [vmem:[%s1140 + $0xa0] sm:$0xff]
    %v1162 = vld [vmem:[%s1140 + $0xa8] sm:$0xff]
    %v1163 = vperm.slane %v1129, 0
    %v1164 = vmul.f32 %v1141, %v1163
    %v1165 = vmul.f32 %v1142, %v1163
    %v1166 = vmul.f32 %v1143, %v1163
    %v1167 = vmul.f32 %v1144, %v1163
    %v1168 = vmul.f32 %v1145, %v1163
    %v1169 = vmul.f32 %v1146, %v1163
    %v1170 = vmul.f32 %v1147, %v1163
    %v1171 = vmul.f32 %v1148, %v1163
    %v1172 = vmul.f32 %v1149, %v1163
    %v1173 = vmul.f32 %v1150, %v1163
    %v1174 = vmul.f32 %v1151, %v1163
    %v1175 = vmul.f32 %v1152, %v1163
    %v1176 = vmul.f32 %v1153, %v1163
    %v1177 = vmul.f32 %v1154, %v1163
    %v1178 = vmul.f32 %v1155, %v1163
    %v1179 = vmul.f32 %v1156, %v1163
    %v1180 = vmul.f32 %v1157, %v1163
    %v1181 = vmul.f32 %v1158, %v1163
    %v1182 = vmul.f32 %v1159, %v1163
    %v1183 = vmul.f32 %v1160, %v1163
    %v1184 = vmul.f32 %v1161, %v1163
    %v1185 = vmul.f32 %v1162, %v1163
    %v1186 = vperm.slane %v1132, 0
    %v1187 = vadd.f32 %v1164, %v1186
    %v1188 = vadd.f32 %v1165, %v1186
    %v1189 = vadd.f32 %v1166, %v1186
    %v1190 = vadd.f32 %v1167, %v1186
    %v1191 = vadd.f32 %v1168, %v1186
    %v1192 = vadd.f32 %v1169, %v1186
    %v1193 = vadd.f32 %v1170, %v1186
    %v1194 = vadd.f32 %v1171, %v1186
    %v1195 = vadd.f32 %v1172, %v1186
    %v1196 = vadd.f32 %v1173, %v1186
    %v1197 = vadd.f32 %v1174, %v1186
    %v1198 = vadd.f32 %v1175, %v1186
    %v1199 = vadd.f32 %v1176, %v1186
    %v1200 = vadd.f32 %v1177, %v1186
    %v1201 = vadd.f32 %v1178, %v1186
    %v1202 = vadd.f32 %v1179, %v1186
    %v1203 = vadd.f32 %v1180, %v1186
    %v1204 = vadd.f32 %v1181, %v1186
    %v1205 = vadd.f32 %v1182, %v1186
    %v1206 = vadd.f32 %v1183, %v1186
    %v1207 = vadd.f32 %v1184, %v1186
    %v1208 = vadd.f32 %v1185, %v1186
    %v1209 = vmax.f32 %v1187, 0.0
    %v1210 = vmax.f32 %v1188, 0.0
    %v1211 = vmax.f32 %v1189, 0.0
    %v1212 = vmax.f32 %v1190, 0.0
    %v1213 = vmax.f32 %v1191, 0.0
    %v1214 = vmax.f32 %v1192, 0.0
    %v1215 = vmax.f32 %v1193, 0.0
    %v1216 = vmax.f32 %v1194, 0.0
    %v1217 = vmax.f32 %v1195, 0.0
    %v1218 = vmax.f32 %v1196, 0.0
    %v1219 = vmax.f32 %v1197, 0.0
    %v1220 = vmax.f32 %v1198, 0.0
    %v1221 = vmax.f32 %v1199, 0.0
    %v1222 = vmax.f32 %v1200, 0.0
    %v1223 = vmax.f32 %v1201, 0.0
    %v1224 = vmax.f32 %v1202, 0.0
    %v1225 = vmax.f32 %v1203, 0.0
    %v1226 = vmax.f32 %v1204, 0.0
    %v1227 = vmax.f32 %v1205, 0.0
    %v1228 = vmax.f32 %v1206, 0.0
    %v1229 = vmax.f32 %v1207, 0.0
    %v1230 = vmax.f32 %v1208, 0.0
    %vm1249 = vcmask 1046528
    %v1250 = vrot.slane %v1209, 1
    %v1251 = vrot.slane %v1210, 1
    %v1252 = vsel %vm1249, %v1250, %v1251
    %v1253 = vrot.slane %v1211, 1
    %v1254 = vsel %vm1249, %v1251, %v1253
    %v1255 = vrot.slane %v1212, 1
    %v1256 = vsel %vm1249, %v1253, %v1255
    %v1257 = vrot.slane %v1213, 1
    %v1258 = vsel %vm1249, %v1255, %v1257
    %v1259 = vrot.slane %v1214, 1
    %v1260 = vsel %vm1249, %v1257, %v1259
    %v1261 = vrot.slane %v1215, 1
    %v1262 = vsel %vm1249, %v1259, %v1261
    %v1263 = vrot.slane %v1216, 1
    %v1264 = vsel %vm1249, %v1261, %v1263
    %v1265 = vrot.slane %v1217, 1
    %v1266 = vsel %vm1249, %v1263, %v1265
    %v1267 = vrot.slane %v1218, 1
    %v1268 = vsel %vm1249, %v1265, %v1267
    %v1269 = vrot.slane %v1219, 1
    %v1270 = vsel %vm1249, %v1267, %v1269
    %v1271 = vrot.slane %v1220, 1
    %v1272 = vsel %vm1249, %v1269, %v1271
    %v1273 = vrot.slane %v1221, 1
    %v1274 = vsel %vm1249, %v1271, %v1273
    %v1275 = vrot.slane %v1222, 1
    %v1276 = vsel %vm1249, %v1273, %v1275
    %v1277 = vrot.slane %v1223, 1
    %v1278 = vsel %vm1249, %v1275, %v1277
    %v1279 = vrot.slane %v1224, 1
    %v1280 = vsel %vm1249, %v1277, %v1279
    %v1281 = vrot.slane %v1225, 1
    %v1282 = vsel %vm1249, %v1279, %v1281
    %v1283 = vrot.slane %v1226, 1
    %v1284 = vsel %vm1249, %v1281, %v1283
    %v1302 = vmax.f32 %v1209, %v1252
    %v1303 = vmax.f32 %v1210, %v1254
    %v1304 = vmax.f32 %v1211, %v1256
    %v1305 = vmax.f32 %v1212, %v1258
    %v1306 = vmax.f32 %v1213, %v1260
    %v1307 = vmax.f32 %v1214, %v1262
    %v1308 = vmax.f32 %v1215, %v1264
    %v1309 = vmax.f32 %v1216, %v1266
    %v1310 = vmax.f32 %v1217, %v1268
    %v1311 = vmax.f32 %v1218, %v1270
    %v1312 = vmax.f32 %v1219, %v1272
    %v1313 = vmax.f32 %v1220, %v1274
    %v1314 = vmax.f32 %v1221, %v1276
    %v1315 = vmax.f32 %v1222, %v1278
    %v1316 = vmax.f32 %v1223, %v1280
    %v1317 = vmax.f32 %v1224, %v1282
    %v1318 = vmax.f32 %v1225, %v1284
    %v1323 = vrot.slane %v1227, 1
    %v1324 = vsel %vm1249, %v1283, %v1323
    %v1325 = vrot.slane %v1228, 1
    %v1326 = vsel %vm1249, %v1323, %v1325
    %v1327 = vrot.slane %v1229, 1
    %v1328 = vsel %vm1249, %v1325, %v1327
    %v1329 = vrot.slane %v1230, 1
    %v1330 = vsel %vm1249, %v1327, %v1329
    %v1335 = vmax.f32 %v1226, %v1324
    %v1336 = vmax.f32 %v1227, %v1326
    %v1337 = vmax.f32 %v1228, %v1328
    %v1338 = vmax.f32 %v1229, %v1330
    %v1339 = vmax.f32 %v1302, %v1306
    %v1340 = vmax.f32 %v1303, %v1307
    %v1341 = vmax.f32 %v1304, %v1308
    %v1342 = vmax.f32 %v1305, %v1309
    %v1343 = vmax.f32 %v1306, %v1310
    %v1344 = vmax.f32 %v1307, %v1311
    %v1345 = vmax.f32 %v1308, %v1312
    %v1346 = vmax.f32 %v1309, %v1313
    %v1347 = vmax.f32 %v1310, %v1314
    %v1348 = vmax.f32 %v1311, %v1315
    %v1349 = vmax.f32 %v1312, %v1316
    %v1350 = vmax.f32 %v1313, %v1317
    %v1351 = vmax.f32 %v1314, %v1318
    %v1352 = vmax.f32 %v1315, %v1335
    %v1353 = vmax.f32 %v1316, %v1336
    %v1354 = vmax.f32 %v1317, %v1337
    %v1355 = vmax.f32 %v1318, %v1338
    %vm1373 = vcmask 1045504
    %v1374 = vrot.slane %v1339, 2
    %v1375 = vrot.slane %v1340, 2
    %v1376 = vsel %vm1373, %v1374, %v1375
    %v1377 = vrot.slane %v1341, 2
    %v1378 = vsel %vm1373, %v1375, %v1377
    %v1379 = vrot.slane %v1342, 2
    %v1380 = vsel %vm1373, %v1377, %v1379
    %v1381 = vrot.slane %v1343, 2
    %v1382 = vsel %vm1373, %v1379, %v1381
    %v1383 = vrot.slane %v1344, 2
    %v1384 = vsel %vm1373, %v1381, %v1383
    %v1385 = vrot.slane %v1345, 2
    %v1386 = vsel %vm1373, %v1383, %v1385
    %v1387 = vrot.slane %v1346, 2
    %v1388 = vsel %vm1373, %v1385, %v1387
    %v1389 = vrot.slane %v1347, 2
    %v1390 = vsel %vm1373, %v1387, %v1389
    %v1391 = vrot.slane %v1348, 2
    %v1392 = vsel %vm1373, %v1389, %v1391
    %v1393 = vrot.slane %v1349, 2
    %v1394 = vsel %vm1373, %v1391, %v1393
    %v1395 = vrot.slane %v1350, 2
    %v1396 = vsel %vm1373, %v1393, %v1395
    %v1397 = vrot.slane %v1351, 2
    %v1398 = vsel %vm1373, %v1395, %v1397
    %v1399 = vrot.slane %v1352, 2
    %v1400 = vsel %vm1373, %v1397, %v1399
    %v1401 = vrot.slane %v1353, 2
    %v1402 = vsel %vm1373, %v1399, %v1401
    %v1403 = vrot.slane %v1354, 2
    %v1404 = vsel %vm1373, %v1401, %v1403
    %v1405 = vrot.slane %v1355, 2
    %v1406 = vsel %vm1373, %v1403, %v1405
    %1407 = vrot.lane.b32.xlu0 %v1376, 8
    %v1408 = vpop.permute.xlu0 %1407
    %1409 = vrot.lane.b32.xlu0 %v1378, 8
    %v1410 = vpop.permute.xlu0 %1409
    %1411 = vrot.lane.b32.xlu0 %v1380, 8
    %v1412 = vpop.permute.xlu0 %1411
    %1413 = vrot.lane.b32.xlu0 %v1382, 8
    %v1414 = vpop.permute.xlu0 %1413
    %1415 = vrot.lane.b32.xlu0 %v1384, 8
    %v1416 = vpop.permute.xlu0 %1415
    %1417 = vrot.lane.b32.xlu0 %v1386, 8
    %v1418 = vpop.permute.xlu0 %1417
    %1419 = vrot.lane.b32.xlu0 %v1388, 8
    %v1420 = vpop.permute.xlu0 %1419
    %1421 = vrot.lane.b32.xlu0 %v1390, 8
    %v1422 = vpop.permute.xlu0 %1421
    %1423 = vrot.lane.b32.xlu0 %v1392, 8
    %v1424 = vpop.permute.xlu0 %1423
    %1425 = vrot.lane.b32.xlu0 %v1394, 8
    %v1426 = vpop.permute.xlu0 %1425
    %1427 = vrot.lane.b32.xlu0 %v1396, 8
    %v1428 = vpop.permute.xlu0 %1427
    %1429 = vrot.lane.b32.xlu0 %v1398, 8
    %v1430 = vpop.permute.xlu0 %1429
    %1431 = vrot.lane.b32.xlu0 %v1400, 8
    %v1432 = vpop.permute.xlu0 %1431
    %1433 = vrot.lane.b32.xlu0 %v1402, 8
    %v1434 = vpop.permute.xlu0 %1433
    %1435 = vrot.lane.b32.xlu0 %v1404, 8
    %v1436 = vpop.permute.xlu0 %1435
    %1437 = vrot.lane.b32.xlu0 %v1406, 8
    %v1438 = vpop.permute.xlu0 %1437
    %vm1455 = vcmask 1043456
    %v1456 = vrot.slane %v1339, 4
    %v1457 = vrot.slane %v1340, 4
    %v1458 = vsel %vm1455, %v1456, %v1457
    %v1459 = vrot.slane %v1341, 4
    %v1460 = vsel %vm1455, %v1457, %v1459
    %v1461 = vrot.slane %v1342, 4
    %v1462 = vsel %vm1455, %v1459, %v1461
    %v1463 = vrot.slane %v1343, 4
    %v1464 = vsel %vm1455, %v1461, %v1463
    %v1465 = vrot.slane %v1344, 4
    %v1466 = vsel %vm1455, %v1463, %v1465
    %v1467 = vrot.slane %v1345, 4
    %v1468 = vsel %vm1455, %v1465, %v1467
    %v1469 = vrot.slane %v1346, 4
    %v1470 = vsel %vm1455, %v1467, %v1469
    %v1471 = vrot.slane %v1347, 4
    %v1472 = vsel %vm1455, %v1469, %v1471
    %v1473 = vrot.slane %v1348, 4
    %v1474 = vsel %vm1455, %v1471, %v1473
    %v1475 = vrot.slane %v1349, 4
    %v1476 = vsel %vm1455, %v1473, %v1475
    %v1477 = vrot.slane %v1350, 4
    %v1478 = vsel %vm1455, %v1475, %v1477
    %v1479 = vrot.slane %v1351, 4
    %v1480 = vsel %vm1455, %v1477, %v1479
    %v1481 = vrot.slane %v1352, 4
    %v1482 = vsel %vm1455, %v1479, %v1481
    %v1483 = vrot.slane %v1353, 4
    %v1484 = vsel %vm1455, %v1481, %v1483
    %v1485 = vrot.slane %v1354, 4
    %v1486 = vsel %vm1455, %v1483, %v1485
    %v1487 = vrot.slane %v1355, 4
    %v1488 = vsel %vm1455, %v1485, %v1487
    %1489 = vrot.lane.b32.xlu0 %v1458, 16
    %v1490 = vpop.permute.xlu0 %1489
    %1491 = vrot.lane.b32.xlu0 %v1460, 16
    %v1492 = vpop.permute.xlu0 %1491
    %1493 = vrot.lane.b32.xlu0 %v1462, 16
    %v1494 = vpop.permute.xlu0 %1493
    %1495 = vrot.lane.b32.xlu0 %v1464, 16
    %v1496 = vpop.permute.xlu0 %1495
    %1497 = vrot.lane.b32.xlu0 %v1466, 16
    %v1498 = vpop.permute.xlu0 %1497
    %1499 = vrot.lane.b32.xlu0 %v1468, 16
    %v1500 = vpop.permute.xlu0 %1499
    %1501 = vrot.lane.b32.xlu0 %v1470, 16
    %v1502 = vpop.permute.xlu0 %1501
    %1503 = vrot.lane.b32.xlu0 %v1472, 16
    %v1504 = vpop.permute.xlu0 %1503
    %1505 = vrot.lane.b32.xlu0 %v1474, 16
    %v1506 = vpop.permute.xlu0 %1505
    %1507 = vrot.lane.b32.xlu0 %v1476, 16
    %v1508 = vpop.permute.xlu0 %1507
    %1509 = vrot.lane.b32.xlu0 %v1478, 16
    %v1510 = vpop.permute.xlu0 %1509
    %1511 = vrot.lane.b32.xlu0 %v1480, 16
    %v1512 = vpop.permute.xlu0 %1511
    %1513 = vrot.lane.b32.xlu0 %v1482, 16
    %v1514 = vpop.permute.xlu0 %1513
    %1515 = vrot.lane.b32.xlu0 %v1484, 16
    %v1516 = vpop.permute.xlu0 %1515
    %1517 = vrot.lane.b32.xlu0 %v1486, 16
    %v1518 = vpop.permute.xlu0 %1517
    %1519 = vrot.lane.b32.xlu0 %v1488, 16
    %v1520 = vpop.permute.xlu0 %1519
    %vm1537 = vcmask 1041408
    %v1538 = vrot.slane %v1339, 6
    %v1539 = vrot.slane %v1340, 6
    %v1540 = vsel %vm1537, %v1538, %v1539
    %v1541 = vrot.slane %v1341, 6
    %v1542 = vsel %vm1537, %v1539, %v1541
    %v1543 = vrot.slane %v1342, 6
    %v1544 = vsel %vm1537, %v1541, %v1543
    %v1545 = vrot.slane %v1343, 6
    %v1546 = vsel %vm1537, %v1543, %v1545
    %v1547 = vrot.slane %v1344, 6
    %v1548 = vsel %vm1537, %v1545, %v1547
    %v1549 = vrot.slane %v1345, 6
    %v1550 = vsel %vm1537, %v1547, %v1549
    %v1551 = vrot.slane %v1346, 6
    %v1552 = vsel %vm1537, %v1549, %v1551
    %v1553 = vrot.slane %v1347, 6
    %v1554 = vsel %vm1537, %v1551, %v1553
    %v1555 = vrot.slane %v1348, 6
    %v1556 = vsel %vm1537, %v1553, %v1555
    %v1557 = vrot.slane %v1349, 6
    %v1558 = vsel %vm1537, %v1555, %v1557
    %v1559 = vrot.slane %v1350, 6
    %v1560 = vsel %vm1537, %v1557, %v1559
    %v1561 = vrot.slane %v1351, 6
    %v1562 = vsel %vm1537, %v1559, %v1561
    %v1563 = vrot.slane %v1352, 6
    %v1564 = vsel %vm1537, %v1561, %v1563
    %v1565 = vrot.slane %v1353, 6
    %v1566 = vsel %vm1537, %v1563, %v1565
    %v1567 = vrot.slane %v1354, 6
    %v1568 = vsel %vm1537, %v1565, %v1567
    %v1569 = vrot.slane %v1355, 6
    %v1570 = vsel %vm1537, %v1567, %v1569
    %1571 = vrot.lane.b32.xlu0 %v1540, 24
    %v1572 = vpop.permute.xlu0 %1571
    %1573 = vrot.lane.b32.xlu0 %v1542, 24
    %v1574 = vpop.permute.xlu0 %1573
    %1575 = vrot.lane.b32.xlu0 %v1544, 24
    %v1576 = vpop.permute.xlu0 %1575
    %1577 = vrot.lane.b32.xlu0 %v1546, 24
    %v1578 = vpop.permute.xlu0 %1577
    %1579 = vrot.lane.b32.xlu0 %v1548, 24
    %v1580 = vpop.permute.xlu0 %1579
    %1581 = vrot.lane.b32.xlu0 %v1550, 24
    %v1582 = vpop.permute.xlu0 %1581
    %1583 = vrot.lane.b32.xlu0 %v1552, 24
    %v1584 = vpop.permute.xlu0 %1583
    %1585 = vrot.lane.b32.xlu0 %v1554, 24
    %v1586 = vpop.permute.xlu0 %1585
    %1587 = vrot.lane.b32.xlu0 %v1556, 24
    %v1588 = vpop.permute.xlu0 %1587
    %1589 = vrot.lane.b32.xlu0 %v1558, 24
    %v1590 = vpop.permute.xlu0 %1589
    %1591 = vrot.lane.b32.xlu0 %v1560, 24
    %v1592 = vpop.permute.xlu0 %1591
    %1593 = vrot.lane.b32.xlu0 %v1562, 24
    %v1594 = vpop.permute.xlu0 %1593
    %1595 = vrot.lane.b32.xlu0 %v1564, 24
    %v1596 = vpop.permute.xlu0 %1595
    %1597 = vrot.lane.b32.xlu0 %v1566, 24
    %v1598 = vpop.permute.xlu0 %1597
    %1599 = vrot.lane.b32.xlu0 %v1568, 24
    %v1600 = vpop.permute.xlu0 %1599
    %1601 = vrot.lane.b32.xlu0 %v1570, 24
    %v1602 = vpop.permute.xlu0 %1601
    %1619 = vrot.lane.b32.xlu0 %v1340, 32
    %v1620 = vpop.permute.xlu0 %1619
    %1621 = vrot.lane.b32.xlu0 %v1341, 32
    %v1622 = vpop.permute.xlu0 %1621
    %1623 = vrot.lane.b32.xlu0 %v1342, 32
    %v1624 = vpop.permute.xlu0 %1623
    %1625 = vrot.lane.b32.xlu0 %v1343, 32
    %v1626 = vpop.permute.xlu0 %1625
    %1627 = vrot.lane.b32.xlu0 %v1344, 32
    %v1628 = vpop.permute.xlu0 %1627
    %1629 = vrot.lane.b32.xlu0 %v1345, 32
    %v1630 = vpop.permute.xlu0 %1629
    %1631 = vrot.lane.b32.xlu0 %v1346, 32
    %v1632 = vpop.permute.xlu0 %1631
    %1633 = vrot.lane.b32.xlu0 %v1347, 32
    %v1634 = vpop.permute.xlu0 %1633
    %1635 = vrot.lane.b32.xlu0 %v1348, 32
    %v1636 = vpop.permute.xlu0 %1635
    %1637 = vrot.lane.b32.xlu0 %v1349, 32
    %v1638 = vpop.permute.xlu0 %1637
    %1639 = vrot.lane.b32.xlu0 %v1350, 32
    %v1640 = vpop.permute.xlu0 %1639
    %1641 = vrot.lane.b32.xlu0 %v1351, 32
    %v1642 = vpop.permute.xlu0 %1641
    %1643 = vrot.lane.b32.xlu0 %v1352, 32
    %v1644 = vpop.permute.xlu0 %1643
    %1645 = vrot.lane.b32.xlu0 %v1353, 32
    %v1646 = vpop.permute.xlu0 %1645
    %1647 = vrot.lane.b32.xlu0 %v1354, 32
    %v1648 = vpop.permute.xlu0 %1647
    %1649 = vrot.lane.b32.xlu0 %v1355, 32
    %v1650 = vpop.permute.xlu0 %1649
    %vm1667 = vcmask 64512
    %v1668 = vsel %vm1667, %v1339, %v1408
    %v1669 = vsel %vm1667, %v1340, %v1410
    %v1670 = vsel %vm1667, %v1341, %v1412
    %v1671 = vsel %vm1667, %v1342, %v1414
    %v1672 = vsel %vm1667, %v1343, %v1416
    %v1673 = vsel %vm1667, %v1344, %v1418
    %v1674 = vsel %vm1667, %v1345, %v1420
    %v1675 = vsel %vm1667, %v1346, %v1422
    %v1676 = vsel %vm1667, %v1347, %v1424
    %v1677 = vsel %vm1667, %v1348, %v1426
    %v1678 = vsel %vm1667, %v1349, %v1428
    %v1679 = vsel %vm1667, %v1350, %v1430
    %v1680 = vsel %vm1667, %v1351, %v1432
    %v1681 = vsel %vm1667, %v1352, %v1434
    %v1682 = vsel %vm1667, %v1353, %v1436
    %v1683 = vsel %vm1667, %v1354, %v1438
    %vm1684 = vcmask 130048
    %v1685 = vsel %vm1684, %v1668, %v1490
    %v1686 = vsel %vm1684, %v1669, %v1492
    %v1687 = vsel %vm1684, %v1670, %v1494
    %v1688 = vsel %vm1684, %v1671, %v1496
    %v1689 = vsel %vm1684, %v1672, %v1498
    %v1690 = vsel %vm1684, %v1673, %v1500
    %v1691 = vsel %vm1684, %v1674, %v1502
    %v1692 = vsel %vm1684, %v1675, %v1504
    %v1693 = vsel %vm1684, %v1676, %v1506
    %v1694 = vsel %vm1684, %v1677, %v1508
    %v1695 = vsel %vm1684, %v1678, %v1510
    %v1696 = vsel %vm1684, %v1679, %v1512
    %v1697 = vsel %vm1684, %v1680, %v1514
    %v1698 = vsel %vm1684, %v1681, %v1516
    %v1699 = vsel %vm1684, %v1682, %v1518
    %v1700 = vsel %vm1684, %v1683, %v1520
    %vm1701 = vcmask 195584
    %v1702 = vsel %vm1701, %v1685, %v1572
    %v1703 = vsel %vm1701, %v1686, %v1574
    %v1704 = vsel %vm1701, %v1687, %v1576
    %v1705 = vsel %vm1701, %v1688, %v1578
    %v1706 = vsel %vm1701, %v1689, %v1580
    %v1707 = vsel %vm1701, %v1690, %v1582
    %v1708 = vsel %vm1701, %v1691, %v1584
    %v1709 = vsel %vm1701, %v1692, %v1586
    %v1710 = vsel %vm1701, %v1693, %v1588
    %v1711 = vsel %vm1701, %v1694, %v1590
    %v1712 = vsel %vm1701, %v1695, %v1592
    %v1713 = vsel %vm1701, %v1696, %v1594
    %v1714 = vsel %vm1701, %v1697, %v1596
    %v1715 = vsel %vm1701, %v1698, %v1598
    %v1716 = vsel %vm1701, %v1699, %v1600
    %v1717 = vsel %vm1701, %v1700, %v1602
    %vm1718 = vcmask 261120
    %v1719 = vsel %vm1718, %v1702, %v1620
    %v1720 = vsel %vm1718, %v1703, %v1622
    %v1721 = vsel %vm1718, %v1704, %v1624
    %v1722 = vsel %vm1718, %v1705, %v1626
    %v1723 = vsel %vm1718, %v1706, %v1628
    %v1724 = vsel %vm1718, %v1707, %v1630
    %v1725 = vsel %vm1718, %v1708, %v1632
    %v1726 = vsel %vm1718, %v1709, %v1634
    %v1727 = vsel %vm1718, %v1710, %v1636
    %v1728 = vsel %vm1718, %v1711, %v1638
    %v1729 = vsel %vm1718, %v1712, %v1640
    %v1730 = vsel %vm1718, %v1713, %v1642
    %v1731 = vsel %vm1718, %v1714, %v1644
    %v1732 = vsel %vm1718, %v1715, %v1646
    %v1733 = vsel %vm1718, %v1716, %v1648
    %v1734 = vsel %vm1718, %v1717, %v1650
    %vm1735 = vcmask 326656
    %v1736 = vsel %vm1735, %v1719, 0.0
    %v1737 = vsel %vm1735, %v1720, 0.0
    %v1738 = vsel %vm1735, %v1721, 0.0
    %v1739 = vsel %vm1735, %v1722, 0.0
    %v1740 = vsel %vm1735, %v1723, 0.0
    %v1741 = vsel %vm1735, %v1724, 0.0
    %v1742 = vsel %vm1735, %v1725, 0.0
    %v1743 = vsel %vm1735, %v1726, 0.0
    %v1744 = vsel %vm1735, %v1727, 0.0
    %v1745 = vsel %vm1735, %v1728, 0.0
    %v1746 = vsel %vm1735, %v1729, 0.0
    %v1747 = vsel %vm1735, %v1730, 0.0
    %v1748 = vsel %vm1735, %v1731, 0.0
    %v1749 = vsel %vm1735, %v1732, 0.0
    %v1750 = vsel %vm1735, %v1733, 0.0
    %v1751 = vsel %vm1735, %v1734, 0.0
    %v1752 = vpack.c.bf16 %v1736, %v1736
    %v1753 = vpack.c.bf16 %v1737, %v1737
    %v1754 = vpack.c.bf16 %v1738, %v1738
    %v1755 = vpack.c.bf16 %v1739, %v1739
    %v1756 = vpack.c.bf16 %v1740, %v1740
    %v1757 = vpack.c.bf16 %v1741, %v1741
    %v1758 = vpack.c.bf16 %v1742, %v1742
    %v1759 = vpack.c.bf16 %v1743, %v1743
    %v1760 = vpack.c.bf16 %v1744, %v1744
    %v1761 = vpack.c.bf16 %v1745, %v1745
    %v1762 = vpack.c.bf16 %v1746, %v1746
    %v1763 = vpack.c.bf16 %v1747, %v1747
    %v1764 = vpack.c.bf16 %v1748, %v1748
    %v1765 = vpack.c.bf16 %v1749, %v1749
    %v1766 = vpack.c.bf16 %v1750, %v1750
    %v1767 = vpack.c.bf16 %v1751, %v1751
    %s1768 = sshra.s32 %s1139, 3
    %s1769 = sand.u32 %s1139, 7
    %s1770 = smul.addr %s1768, 4
    %s1771 = scalar_lea.vmem [#allocation3], %s1770
    %vm1772 = vcmask 388096
    %1773 = vst.msk [vmem:[%s1771] sm:$0xf] %vm1772, %v1752
    %1774 = vst.msk [vmem:[%s1771 + $0x4] sm:$0xf] %vm1772, %v1753
    %1775 = vst.msk [vmem:[%s1771 + $0x8] sm:$0xf] %vm1772, %v1754
    %1776 = vst.msk [vmem:[%s1771 + $0xc] sm:$0xf] %vm1772, %v1755
    %1777 = vst.msk [vmem:[%s1771 + $0x10] sm:$0xf] %vm1772, %v1756
    %1778 = vst.msk [vmem:[%s1771 + $0x14] sm:$0xf] %vm1772, %v1757
    %1779 = vst.msk [vmem:[%s1771 + $0x18] sm:$0xf] %vm1772, %v1758
    %1780 = vst.msk [vmem:[%s1771 + $0x1c] sm:$0xf] %vm1772, %v1759
    %1781 = vst.msk [vmem:[%s1771 + $0x20] sm:$0xf] %vm1772, %v1760
    %1782 = vst.msk [vmem:[%s1771 + $0x24] sm:$0xf] %vm1772, %v1761
    %1783 = vst.msk [vmem:[%s1771 + $0x28] sm:$0xf] %vm1772, %v1762
    %1784 = vst.msk [vmem:[%s1771 + $0x2c] sm:$0xf] %vm1772, %v1763
    %1785 = vst.msk [vmem:[%s1771 + $0x30] sm:$0xf] %vm1772, %v1764
    %1786 = vst.msk [vmem:[%s1771 + $0x34] sm:$0xf] %vm1772, %v1765
    %1787 = vst.msk [vmem:[%s1771 + $0x38] sm:$0xf] %vm1772, %v1766
    %1788 = vst.msk [vmem:[%s1771 + $0x3c] sm:$0xf] %vm1772, %v1767
  $region33: #{net_forward.2} parent=0 // loop_footer
    %s1138 = sadd.s32 1, %s1134
  $region34: #{net_forward.2} parent=0 // loop_footer_branch
    %1133 = sbr.rel target = $region30
  $region35: #{net_forward.2} parent=0 // loop_exit
    _
  loop: start=0, step=1, limit=33
  $region36: #{net_forward.2} parent=0 // loop_pre_header
    _
  $region37: #{net_forward.2} parent=0 // loop_header
    %s1790 = sphi 0, %s1794
    %p1791 = scmp.ge.s32.totalorder %s1790, 33
    %v1795 = vphi 0.0, %v3001
    %v1796 = vphi 0.0, %v3055
  $region38: #{net_forward.2} parent=0 // loop_header_branch
    %1793 = sbr.rel (%p1791) target = $region42
  $region39: #{net_forward.2} parent=0 // loop_body
    %s1797 = smul.u32 %s1790, 128
    %s1798 = sshra.s32 %s1797, 3
    %s1799 = sand.u32 %s1797, 7
    %s1800 = smul.addr %s1798, 4
    %s1801 = scalar_lea.vmem [#allocation3], %s1800
    %v1802 = vld [vmem:[%s1801] sm:$0xf]
    %v1803 = vld [vmem:[%s1801 + $0x4] sm:$0xf]
    %v1804 = vld [vmem:[%s1801 + $0x8] sm:$0xf]
    %v1805 = vld [vmem:[%s1801 + $0xc] sm:$0xf]
    %v1806 = vld [vmem:[%s1801 + $0x10] sm:$0xf]
    %v1807 = vld [vmem:[%s1801 + $0x14] sm:$0xf]
    %v1808 = vld [vmem:[%s1801 + $0x18] sm:$0xf]
    %v1809 = vld [vmem:[%s1801 + $0x1c] sm:$0xf]
    %v1810 = vld [vmem:[%s1801 + $0x20] sm:$0xf]
    %v1811 = vld [vmem:[%s1801 + $0x24] sm:$0xf]
    %v1812 = vld [vmem:[%s1801 + $0x28] sm:$0xf]
    %v1813 = vld [vmem:[%s1801 + $0x2c] sm:$0xf]
    %v1814 = vld [vmem:[%s1801 + $0x30] sm:$0xf]
    %v1815 = vld [vmem:[%s1801 + $0x34] sm:$0xf]
    %v1816 = vld [vmem:[%s1801 + $0x38] sm:$0xf]
    %v1817 = vld [vmem:[%s1801 + $0x3c] sm:$0xf]
    %v1818 = vld [vmem:[%s2] sm:$0xf]
    %v1819 = vld [vmem:[%s2 + $0x4] sm:$0xf]
    %v1820 = vld [vmem:[%s2 + $0x8] sm:$0xf]
    %v1821 = vld [vmem:[%s2 + $0xc] sm:$0xf]
    %v1822 = vld [vmem:[%s2 + $0x10] sm:$0xf]
    %v1823 = vld [vmem:[%s2 + $0x14] sm:$0xf]
    %s1824 = sadd.s32 %s1797, 64
    %s1825 = sshra.s32 %s1824, 3
    %s1826 = sand.u32 %s1824, 7
    %s1827 = smul.addr %s1825, 4
    %s1828 = scalar_lea.vmem [#allocation3], %s1827
    %v1829 = vld [vmem:[%s1828] sm:$0xf]
    %v1830 = vld [vmem:[%s1828 + $0x4] sm:$0xf]
    %v1831 = vld [vmem:[%s1828 + $0x8] sm:$0xf]
    %v1832 = vld [vmem:[%s1828 + $0xc] sm:$0xf]
    %v1833 = vld [vmem:[%s1828 + $0x10] sm:$0xf]
    %v1834 = vld [vmem:[%s1828 + $0x14] sm:$0xf]
    %v1835 = vld [vmem:[%s1828 + $0x18] sm:$0xf]
    %v1836 = vld [vmem:[%s1828 + $0x1c] sm:$0xf]
    %v1837 = vld [vmem:[%s1828 + $0x20] sm:$0xf]
    %v1838 = vld [vmem:[%s1828 + $0x24] sm:$0xf]
    %v1839 = vld [vmem:[%s1828 + $0x28] sm:$0xf]
    %v1840 = vld [vmem:[%s1828 + $0x2c] sm:$0xf]
    %v1841 = vld [vmem:[%s1828 + $0x30] sm:$0xf]
    %v1842 = vld [vmem:[%s1828 + $0x34] sm:$0xf]
    %v1843 = vld [vmem:[%s1828 + $0x38] sm:$0xf]
    %v1844 = vld [vmem:[%s1828 + $0x3c] sm:$0xf]
    %s1845 = scalar_lea.vmem %s2, 24
    %v1846 = vld [vmem:[%s1845] sm:$0xf]
    %v1847 = vld [vmem:[%s1845 + $0x4] sm:$0xf]
    %v1848 = vld [vmem:[%s1845 + $0x8] sm:$0xf]
    %v1849 = vld [vmem:[%s1845 + $0xc] sm:$0xf]
    %v1850 = vld [vmem:[%s1845 + $0x10] sm:$0xf]
    %v1851 = vld [vmem:[%s1845 + $0x14] sm:$0xf]
    %v1868 = vunpack.c.l.b16 %v1829
    %v1869 = vunpack.c.l.b16 %v1830
    %v1870 = vunpack.c.l.b16 %v1831
    %v1871 = vunpack.c.l.b16 %v1832
    %v1872 = vunpack.c.l.b16 %v1833
    %v1873 = vunpack.c.l.b16 %v1834
    %v1874 = vunpack.c.l.b16 %v1835
    %v1875 = vunpack.c.l.b16 %v1836
    %v1876 = vunpack.c.l.b16 %v1837
    %v1877 = vunpack.c.l.b16 %v1838
    %v1878 = vunpack.c.l.b16 %v1839
    %v1879 = vunpack.c.l.b16 %v1840
    %v1880 = vunpack.c.l.b16 %v1841
    %v1881 = vunpack.c.l.b16 %v1842
    %v1882 = vunpack.c.l.b16 %v1843
    %v1883 = vunpack.c.l.b16 %v1844
    %v1884 = vpack.c.b16 %v1869, %v1868
    %v1885 = vpack.c.b16 %v1871, %v1870
    %v1886 = vpack.c.b16 %v1873, %v1872
    %v1887 = vpack.c.b16 %v1875, %v1874
    %v1888 = vpack.c.b16 %v1877, %v1876
    %v1889 = vpack.c.b16 %v1879, %v1878
    %v1890 = vpack.c.b16 %v1881, %v1880
    %v1891 = vpack.c.b16 %v1883, %v1882
    %v1898 = vunpack.c.l.b16 %v1846
    %v1899 = vunpack.c.l.b16 %v1847
    %v1900 = vunpack.c.l.b16 %v1848
    %v1901 = vunpack.c.l.b16 %v1849
    %v1902 = vunpack.c.l.b16 %v1850
    %v1903 = vunpack.c.l.b16 %v1851
    %v1904 = vpack.c.b16 %v1899, %v1898
    %v1905 = vpack.c.b16 %v1901, %v1900
    %v1906 = vpack.c.b16 %v1903, %v1902
    %vm1910 = vcmask 392192
    %v1912 = vsel %vm1910, %v1884, 0
    %v1915 = vsel %vm1910, %v1885, 0
    %v1918 = vsel %vm1910, %v1886, 0
    %v1921 = vsel %vm1910, %v1887, 0
    %v1924 = vsel %vm1910, %v1888, 0
    %v1927 = vsel %vm1910, %v1889, 0
    %v1930 = vsel %vm1910, %v1890, 0
    %v1933 = vsel %vm1910, %v1891, 0
    %1935 = vmatpush.bf16.msra.mxu0 0
    %1936 = vmatpush.bf16.msra.mxu0 0
    %1937 = vmatpush.bf16.msra.mxu0 0
    %1938 = vmatpush.bf16.msra.mxu0 0
    %1939 = vmatpush.bf16.msra.mxu0 0
    %1940 = vmatpush.bf16.msra.mxu0 %v1906
    %1941 = vmatpush.bf16.msra.mxu0 %v1905
    %1942 = vmatpush.bf16.msra.mxu0 %v1904
    %1943 = vmatmul.bf16.gmra.mxu0 %v1912
    %v1944 = vpop.f32.mrf.mxu0
    %v1945 = vadd.f32 0.0, %v1944
    %v1946 = vpop.f32.mrf.mxu0
    %v1947 = vadd.f32 0.0, %v1946
    %1948 = vmatmul.bf16.gmra.mxu0 %v1915
    %v1949 = vpop.f32.mrf.mxu0
    %v1950 = vadd.f32 0.0, %v1949
    %v1951 = vpop.f32.mrf.mxu0
    %v1952 = vadd.f32 0.0, %v1951
    %1953 = vmatmul.bf16.gmra.mxu0 %v1918
    %v1954 = vpop.f32.mrf.mxu0
    %v1955 = vadd.f32 0.0, %v1954
    %v1956 = vpop.f32.mrf.mxu0
    %v1957 = vadd.f32 0.0, %v1956
    %1958 = vmatmul.bf16.gmra.mxu0 %v1921
    %v1959 = vpop.f32.mrf.mxu0
    %v1960 = vadd.f32 0.0, %v1959
    %v1961 = vpop.f32.mrf.mxu0
    %v1962 = vadd.f32 0.0, %v1961
    %1963 = vmatmul.bf16.gmra.mxu0 %v1924
    %v1964 = vpop.f32.mrf.mxu0
    %v1965 = vadd.f32 0.0, %v1964
    %v1966 = vpop.f32.mrf.mxu0
    %v1967 = vadd.f32 0.0, %v1966
    %1968 = vmatmul.bf16.gmra.mxu0 %v1927
    %v1969 = vpop.f32.mrf.mxu0
    %v1970 = vadd.f32 0.0, %v1969
    %v1971 = vpop.f32.mrf.mxu0
    %v1972 = vadd.f32 0.0, %v1971
    %1973 = vmatmul.bf16.gmra.mxu0 %v1930
    %v1974 = vpop.f32.mrf.mxu0
    %v1975 = vadd.f32 0.0, %v1974
    %v1976 = vpop.f32.mrf.mxu0
    %v1977 = vadd.f32 0.0, %v1976
    %1978 = vmatmul.bf16.gmra.mxu0 %v1933
    %v1979 = vpop.f32.mrf.mxu0
    %v1980 = vadd.f32 0.0, %v1979
    %v1981 = vpop.f32.mrf.mxu0
    %v1982 = vadd.f32 0.0, %v1981
    %1983 = vdwg.mxu0
    %v2000 = vunpack.c.l.b16 %v1802
    %v2001 = vunpack.c.l.b16 %v1803
    %v2002 = vunpack.c.l.b16 %v1804
    %v2003 = vunpack.c.l.b16 %v1805
    %v2004 = vunpack.c.l.b16 %v1806
    %v2005 = vunpack.c.l.b16 %v1807
    %v2006 = vunpack.c.l.b16 %v1808
    %v2007 = vunpack.c.l.b16 %v1809
    %v2008 = vunpack.c.l.b16 %v1810
    %v2009 = vunpack.c.l.b16 %v1811
    %v2010 = vunpack.c.l.b16 %v1812
    %v2011 = vunpack.c.l.b16 %v1813
    %v2012 = vunpack.c.l.b16 %v1814
    %v2013 = vunpack.c.l.b16 %v1815
    %v2014 = vunpack.c.l.b16 %v1816
    %v2015 = vunpack.c.l.b16 %v1817
    %v2016 = vpack.c.b16 %v2001, %v2000
    %v2017 = vpack.c.b16 %v2003, %v2002
    %v2018 = vpack.c.b16 %v2005, %v2004
    %v2019 = vpack.c.b16 %v2007, %v2006
    %v2020 = vpack.c.b16 %v2009, %v2008
    %v2021 = vpack.c.b16 %v2011, %v2010
    %v2022 = vpack.c.b16 %v2013, %v2012
    %v2023 = vpack.c.b16 %v2015, %v2014
    %v2030 = vunpack.c.l.b16 %v1818
    %v2031 = vunpack.c.l.b16 %v1819
    %v2032 = vunpack.c.l.b16 %v1820
    %v2033 = vunpack.c.l.b16 %v1821
    %v2034 = vunpack.c.l.b16 %v1822
    %v2035 = vunpack.c.l.b16 %v1823
    %v2036 = vpack.c.b16 %v2031, %v2030
    %v2037 = vpack.c.b16 %v2033, %v2032
    %v2038 = vpack.c.b16 %v2035, %v2034
    %v2043 = vsel %vm1910, %v2016, 0
    %v2046 = vsel %vm1910, %v2017, 0
    %v2049 = vsel %vm1910, %v2018, 0
    %v2052 = vsel %vm1910, %v2019, 0
    %v2055 = vsel %vm1910, %v2020, 0
    %v2058 = vsel %vm1910, %v2021, 0
    %v2061 = vsel %vm1910, %v2022, 0
    %v2064 = vsel %vm1910, %v2023, 0
    %2066 = vmatpush.bf16.msra.mxu0 0
    %2067 = vmatpush.bf16.msra.mxu0 0
    %2068 = vmatpush.bf16.msra.mxu0 0
    %2069 = vmatpush.bf16.msra.mxu0 0
    %2070 = vmatpush.bf16.msra.mxu0 0
    %2071 = vmatpush.bf16.msra.mxu0 %v2038
    %2072 = vmatpush.bf16.msra.mxu0 %v2037
    %2073 = vmatpush.bf16.msra.mxu0 %v2036
    %2074 = vmatmul.bf16.gmra.mxu0 %v2043
    %v2075 = vpop.f32.mrf.mxu0
    %v2076 = vadd.f32 %v1945, %v2075
    %v2077 = vpop.f32.mrf.mxu0
    %v2078 = vadd.f32 %v1947, %v2077
    %2079 = vmatmul.bf16.gmra.mxu0 %v2046
    %v2080 = vpop.f32.mrf.mxu0
    %v2081 = vadd.f32 %v1950, %v2080
    %v2082 = vpop.f32.mrf.mxu0
    %v2083 = vadd.f32 %v1952, %v2082
    %2084 = vmatmul.bf16.gmra.mxu0 %v2049
    %v2085 = vpop.f32.mrf.mxu0
    %v2086 = vadd.f32 %v1955, %v2085
    %v2087 = vpop.f32.mrf.mxu0
    %v2088 = vadd.f32 %v1957, %v2087
    %2089 = vmatmul.bf16.gmra.mxu0 %v2052
    %v2090 = vpop.f32.mrf.mxu0
    %v2091 = vadd.f32 %v1960, %v2090
    %v2092 = vpop.f32.mrf.mxu0
    %v2093 = vadd.f32 %v1962, %v2092
    %2094 = vmatmul.bf16.gmra.mxu0 %v2055
    %v2095 = vpop.f32.mrf.mxu0
    %v2096 = vadd.f32 %v1965, %v2095
    %v2097 = vpop.f32.mrf.mxu0
    %v2098 = vadd.f32 %v1967, %v2097
    %2099 = vmatmul.bf16.gmra.mxu0 %v2058
    %v2100 = vpop.f32.mrf.mxu0
    %v2101 = vadd.f32 %v1970, %v2100
    %v2102 = vpop.f32.mrf.mxu0
    %v2103 = vadd.f32 %v1972, %v2102
    %2104 = vmatmul.bf16.gmra.mxu0 %v2061
    %v2105 = vpop.f32.mrf.mxu0
    %v2106 = vadd.f32 %v1975, %v2105
    %v2107 = vpop.f32.mrf.mxu0
    %v2108 = vadd.f32 %v1977, %v2107
    %2109 = vmatmul.bf16.gmra.mxu0 %v2064
    %v2110 = vpop.f32.mrf.mxu0
    %v2111 = vadd.f32 %v1980, %v2110
    %v2112 = vpop.f32.mrf.mxu0
    %v2113 = vadd.f32 %v1982, %v2112
    %2114 = vdwg.mxu0
    %s2115 = sadd.s32 %s1797, 128
    %s2116 = sshra.s32 %s2115, 3
    %s2117 = sand.u32 %s2115, 7
    %s2118 = smul.addr %s2116, 4
    %s2119 = scalar_lea.vmem [#allocation3], %s2118
    %v2120 = vld [vmem:[%s2119] sm:$0xf]
    %v2121 = vld [vmem:[%s2119 + $0x4] sm:$0xf]
    %v2122 = vld [vmem:[%s2119 + $0x8] sm:$0xf]
    %v2123 = vld [vmem:[%s2119 + $0xc] sm:$0xf]
    %v2124 = vld [vmem:[%s2119 + $0x10] sm:$0xf]
    %v2125 = vld [vmem:[%s2119 + $0x14] sm:$0xf]
    %v2126 = vld [vmem:[%s2119 + $0x18] sm:$0xf]
    %v2127 = vld [vmem:[%s2119 + $0x1c] sm:$0xf]
    %v2128 = vld [vmem:[%s2119 + $0x20] sm:$0xf]
    %v2129 = vld [vmem:[%s2119 + $0x24] sm:$0xf]
    %v2130 = vld [vmem:[%s2119 + $0x28] sm:$0xf]
    %v2131 = vld [vmem:[%s2119 + $0x2c] sm:$0xf]
    %v2132 = vld [vmem:[%s2119 + $0x30] sm:$0xf]
    %v2133 = vld [vmem:[%s2119 + $0x34] sm:$0xf]
    %v2134 = vld [vmem:[%s2119 + $0x38] sm:$0xf]
    %v2135 = vld [vmem:[%s2119 + $0x3c] sm:$0xf]
    %s2136 = scalar_lea.vmem %s2, 48
    %v2137 = vld [vmem:[%s2136] sm:$0xf]
    %v2138 = vld [vmem:[%s2136 + $0x4] sm:$0xf]
    %v2139 = vld [vmem:[%s2136 + $0x8] sm:$0xf]
    %v2140 = vld [vmem:[%s2136 + $0xc] sm:$0xf]
    %v2141 = vld [vmem:[%s2136 + $0x10] sm:$0xf]
    %v2142 = vld [vmem:[%s2136 + $0x14] sm:$0xf]
    %v2159 = vunpack.c.l.b16 %v2120
    %v2160 = vunpack.c.l.b16 %v2121
    %v2161 = vunpack.c.l.b16 %v2122
    %v2162 = vunpack.c.l.b16 %v2123
    %v2163 = vunpack.c.l.b16 %v2124
    %v2164 = vunpack.c.l.b16 %v2125
    %v2165 = vunpack.c.l.b16 %v2126
    %v2166 = vunpack.c.l.b16 %v2127
    %v2167 = vunpack.c.l.b16 %v2128
    %v2168 = vunpack.c.l.b16 %v2129
    %v2169 = vunpack.c.l.b16 %v2130
    %v2170 = vunpack.c.l.b16 %v2131
    %v2171 = vunpack.c.l.b16 %v2132
    %v2172 = vunpack.c.l.b16 %v2133
    %v2173 = vunpack.c.l.b16 %v2134
    %v2174 = vunpack.c.l.b16 %v2135
    %v2175 = vpack.c.b16 %v2160, %v2159
    %v2176 = vpack.c.b16 %v2162, %v2161
    %v2177 = vpack.c.b16 %v2164, %v2163
    %v2178 = vpack.c.b16 %v2166, %v2165
    %v2179 = vpack.c.b16 %v2168, %v2167
    %v2180 = vpack.c.b16 %v2170, %v2169
    %v2181 = vpack.c.b16 %v2172, %v2171
    %v2182 = vpack.c.b16 %v2174, %v2173
    %v2189 = vunpack.c.l.b16 %v2137
    %v2190 = vunpack.c.l.b16 %v2138
    %v2191 = vunpack.c.l.b16 %v2139
    %v2192 = vunpack.c.l.b16 %v2140
    %v2193 = vunpack.c.l.b16 %v2141
    %v2194 = vunpack.c.l.b16 %v2142
    %v2195 = vpack.c.b16 %v2190, %v2189
    %v2196 = vpack.c.b16 %v2192, %v2191
    %v2197 = vpack.c.b16 %v2194, %v2193
    %v2202 = vsel %vm1910, %v2175, 0
    %v2205 = vsel %vm1910, %v2176, 0
    %v2208 = vsel %vm1910, %v2177, 0
    %v2211 = vsel %vm1910, %v2178, 0
    %v2214 = vsel %vm1910, %v2179, 0
    %v2217 = vsel %vm1910, %v2180, 0
    %v2220 = vsel %vm1910, %v2181, 0
    %v2223 = vsel %vm1910, %v2182, 0
    %2225 = vmatpush.bf16.msra.mxu0 0
    %2226 = vmatpush.bf16.msra.mxu0 0
    %2227 = vmatpush.bf16.msra.mxu0 0
    %2228 = vmatpush.bf16.msra.mxu0 0
    %2229 = vmatpush.bf16.msra.mxu0 0
    %2230 = vmatpush.bf16.msra.mxu0 %v2197
    %2231 = vmatpush.bf16.msra.mxu0 %v2196
    %2232 = vmatpush.bf16.msra.mxu0 %v2195
    %2233 = vmatmul.bf16.gmra.mxu0 %v2202
    %v2234 = vpop.f32.mrf.mxu0
    %v2235 = vadd.f32 0.0, %v2234
    %v2236 = vpop.f32.mrf.mxu0
    %v2237 = vadd.f32 0.0, %v2236
    %2238 = vmatmul.bf16.gmra.mxu0 %v2205
    %v2239 = vpop.f32.mrf.mxu0
    %v2240 = vadd.f32 0.0, %v2239
    %v2241 = vpop.f32.mrf.mxu0
    %v2242 = vadd.f32 0.0, %v2241
    %2243 = vmatmul.bf16.gmra.mxu0 %v2208
    %v2244 = vpop.f32.mrf.mxu0
    %v2245 = vadd.f32 0.0, %v2244
    %v2246 = vpop.f32.mrf.mxu0
    %v2247 = vadd.f32 0.0, %v2246
    %2248 = vmatmul.bf16.gmra.mxu0 %v2211
    %v2249 = vpop.f32.mrf.mxu0
    %v2250 = vadd.f32 0.0, %v2249
    %v2251 = vpop.f32.mrf.mxu0
    %v2252 = vadd.f32 0.0, %v2251
    %2253 = vmatmul.bf16.gmra.mxu0 %v2214
    %v2254 = vpop.f32.mrf.mxu0
    %v2255 = vadd.f32 0.0, %v2254
    %v2256 = vpop.f32.mrf.mxu0
    %v2257 = vadd.f32 0.0, %v2256
    %2258 = vmatmul.bf16.gmra.mxu0 %v2217
    %v2259 = vpop.f32.mrf.mxu0
    %v2260 = vadd.f32 0.0, %v2259
    %v2261 = vpop.f32.mrf.mxu0
    %v2262 = vadd.f32 0.0, %v2261
    %2263 = vmatmul.bf16.gmra.mxu0 %v2220
    %v2264 = vpop.f32.mrf.mxu0
    %v2265 = vadd.f32 0.0, %v2264
    %v2266 = vpop.f32.mrf.mxu0
    %v2267 = vadd.f32 0.0, %v2266
    %2268 = vmatmul.bf16.gmra.mxu0 %v2223
    %v2269 = vpop.f32.mrf.mxu0
    %v2270 = vadd.f32 0.0, %v2269
    %v2271 = vpop.f32.mrf.mxu0
    %v2272 = vadd.f32 0.0, %v2271
    %2273 = vdwg.mxu0
    %v2274 = vadd.f32 %v2076, %v2235
    %v2275 = vadd.f32 %v2078, %v2237
    %v2276 = vadd.f32 %v2081, %v2240
    %v2277 = vadd.f32 %v2083, %v2242
    %v2278 = vadd.f32 %v2086, %v2245
    %v2279 = vadd.f32 %v2088, %v2247
    %v2280 = vadd.f32 %v2091, %v2250
    %v2281 = vadd.f32 %v2093, %v2252
    %v2282 = vadd.f32 %v2096, %v2255
    %v2283 = vadd.f32 %v2098, %v2257
    %v2284 = vadd.f32 %v2101, %v2260
    %v2285 = vadd.f32 %v2103, %v2262
    %v2286 = vadd.f32 %v2106, %v2265
    %v2287 = vadd.f32 %v2108, %v2267
    %v2288 = vadd.f32 %v2111, %v2270
    %v2289 = vadd.f32 %v2113, %v2272
    %s2290 = sadd.s32 %s1797, 192
    %s2291 = sshra.s32 %s2290, 3
    %s2292 = sand.u32 %s2290, 7
    %s2293 = smul.addr %s2291, 4
    %s2294 = scalar_lea.vmem [#allocation3], %s2293
    %v2295 = vld [vmem:[%s2294] sm:$0xf]
    %v2296 = vld [vmem:[%s2294 + $0x4] sm:$0xf]
    %v2297 = vld [vmem:[%s2294 + $0x8] sm:$0xf]
    %v2298 = vld [vmem:[%s2294 + $0xc] sm:$0xf]
    %v2299 = vld [vmem:[%s2294 + $0x10] sm:$0xf]
    %v2300 = vld [vmem:[%s2294 + $0x14] sm:$0xf]
    %v2301 = vld [vmem:[%s2294 + $0x18] sm:$0xf]
    %v2302 = vld [vmem:[%s2294 + $0x1c] sm:$0xf]
    %v2303 = vld [vmem:[%s2294 + $0x20] sm:$0xf]
    %v2304 = vld [vmem:[%s2294 + $0x24] sm:$0xf]
    %v2305 = vld [vmem:[%s2294 + $0x28] sm:$0xf]
    %v2306 = vld [vmem:[%s2294 + $0x2c] sm:$0xf]
    %v2307 = vld [vmem:[%s2294 + $0x30] sm:$0xf]
    %v2308 = vld [vmem:[%s2294 + $0x34] sm:$0xf]
    %v2309 = vld [vmem:[%s2294 + $0x38] sm:$0xf]
    %v2310 = vld [vmem:[%s2294 + $0x3c] sm:$0xf]
    %s2311 = scalar_lea.vmem %s2, 72
    %v2312 = vld [vmem:[%s2311] sm:$0xf]
    %v2313 = vld [vmem:[%s2311 + $0x4] sm:$0xf]
    %v2314 = vld [vmem:[%s2311 + $0x8] sm:$0xf]
    %v2315 = vld [vmem:[%s2311 + $0xc] sm:$0xf]
    %v2316 = vld [vmem:[%s2311 + $0x10] sm:$0xf]
    %v2317 = vld [vmem:[%s2311 + $0x14] sm:$0xf]
    %v2334 = vunpack.c.l.b16 %v2295
    %v2335 = vunpack.c.l.b16 %v2296
    %v2336 = vunpack.c.l.b16 %v2297
    %v2337 = vunpack.c.l.b16 %v2298
    %v2338 = vunpack.c.l.b16 %v2299
    %v2339 = vunpack.c.l.b16 %v2300
    %v2340 = vunpack.c.l.b16 %v2301
    %v2341 = vunpack.c.l.b16 %v2302
    %v2342 = vunpack.c.l.b16 %v2303
    %v2343 = vunpack.c.l.b16 %v2304
    %v2344 = vunpack.c.l.b16 %v2305
    %v2345 = vunpack.c.l.b16 %v2306
    %v2346 = vunpack.c.l.b16 %v2307
    %v2347 = vunpack.c.l.b16 %v2308
    %v2348 = vunpack.c.l.b16 %v2309
    %v2349 = vunpack.c.l.b16 %v2310
    %v2350 = vpack.c.b16 %v2335, %v2334
    %v2351 = vpack.c.b16 %v2337, %v2336
    %v2352 = vpack.c.b16 %v2339, %v2338
    %v2353 = vpack.c.b16 %v2341, %v2340
    %v2354 = vpack.c.b16 %v2343, %v2342
    %v2355 = vpack.c.b16 %v2345, %v2344
    %v2356 = vpack.c.b16 %v2347, %v2346
    %v2357 = vpack.c.b16 %v2349, %v2348
    %v2364 = vunpack.c.l.b16 %v2312
    %v2365 = vunpack.c.l.b16 %v2313
    %v2366 = vunpack.c.l.b16 %v2314
    %v2367 = vunpack.c.l.b16 %v2315
    %v2368 = vunpack.c.l.b16 %v2316
    %v2369 = vunpack.c.l.b16 %v2317
    %v2370 = vpack.c.b16 %v2365, %v2364
    %v2371 = vpack.c.b16 %v2367, %v2366
    %v2372 = vpack.c.b16 %v2369, %v2368
    %v2377 = vsel %vm1910, %v2350, 0
    %v2380 = vsel %vm1910, %v2351, 0
    %v2383 = vsel %vm1910, %v2352, 0
    %v2386 = vsel %vm1910, %v2353, 0
    %v2389 = vsel %vm1910, %v2354, 0
    %v2392 = vsel %vm1910, %v2355, 0
    %v2395 = vsel %vm1910, %v2356, 0
    %v2398 = vsel %vm1910, %v2357, 0
    %2400 = vmatpush.bf16.msra.mxu0 0
    %2401 = vmatpush.bf16.msra.mxu0 0
    %2402 = vmatpush.bf16.msra.mxu0 0
    %2403 = vmatpush.bf16.msra.mxu0 0
    %2404 = vmatpush.bf16.msra.mxu0 0
    %2405 = vmatpush.bf16.msra.mxu0 %v2372
    %2406 = vmatpush.bf16.msra.mxu0 %v2371
    %2407 = vmatpush.bf16.msra.mxu0 %v2370
    %2408 = vmatmul.bf16.gmra.mxu0 %v2377
    %v2409 = vpop.f32.mrf.mxu0
    %v2410 = vadd.f32 0.0, %v2409
    %v2411 = vpop.f32.mrf.mxu0
    %v2412 = vadd.f32 0.0, %v2411
    %2413 = vmatmul.bf16.gmra.mxu0 %v2380
    %v2414 = vpop.f32.mrf.mxu0
    %v2415 = vadd.f32 0.0, %v2414
    %v2416 = vpop.f32.mrf.mxu0
    %v2417 = vadd.f32 0.0, %v2416
    %2418 = vmatmul.bf16.gmra.mxu0 %v2383
    %v2419 = vpop.f32.mrf.mxu0
    %v2420 = vadd.f32 0.0, %v2419
    %v2421 = vpop.f32.mrf.mxu0
    %v2422 = vadd.f32 0.0, %v2421
    %2423 = vmatmul.bf16.gmra.mxu0 %v2386
    %v2424 = vpop.f32.mrf.mxu0
    %v2425 = vadd.f32 0.0, %v2424
    %v2426 = vpop.f32.mrf.mxu0
    %v2427 = vadd.f32 0.0, %v2426
    %2428 = vmatmul.bf16.gmra.mxu0 %v2389
    %v2429 = vpop.f32.mrf.mxu0
    %v2430 = vadd.f32 0.0, %v2429
    %v2431 = vpop.f32.mrf.mxu0
    %v2432 = vadd.f32 0.0, %v2431
    %2433 = vmatmul.bf16.gmra.mxu0 %v2392
    %v2434 = vpop.f32.mrf.mxu0
    %v2435 = vadd.f32 0.0, %v2434
    %v2436 = vpop.f32.mrf.mxu0
    %v2437 = vadd.f32 0.0, %v2436
    %2438 = vmatmul.bf16.gmra.mxu0 %v2395
    %v2439 = vpop.f32.mrf.mxu0
    %v2440 = vadd.f32 0.0, %v2439
    %v2441 = vpop.f32.mrf.mxu0
    %v2442 = vadd.f32 0.0, %v2441
    %2443 = vmatmul.bf16.gmra.mxu0 %v2398
    %v2444 = vpop.f32.mrf.mxu0
    %v2445 = vadd.f32 0.0, %v2444
    %v2446 = vpop.f32.mrf.mxu0
    %v2447 = vadd.f32 0.0, %v2446
    %2448 = vdwg.mxu0
    %v2449 = vadd.f32 %v2274, %v2410
    %v2450 = vadd.f32 %v2275, %v2412
    %v2451 = vadd.f32 %v2276, %v2415
    %v2452 = vadd.f32 %v2277, %v2417
    %v2453 = vadd.f32 %v2278, %v2420
    %v2454 = vadd.f32 %v2279, %v2422
    %v2455 = vadd.f32 %v2280, %v2425
    %v2456 = vadd.f32 %v2281, %v2427
    %v2457 = vadd.f32 %v2282, %v2430
    %v2458 = vadd.f32 %v2283, %v2432
    %v2459 = vadd.f32 %v2284, %v2435
    %v2460 = vadd.f32 %v2285, %v2437
    %v2461 = vadd.f32 %v2286, %v2440
    %v2462 = vadd.f32 %v2287, %v2442
    %v2463 = vadd.f32 %v2288, %v2445
    %v2464 = vadd.f32 %v2289, %v2447
    %s2465 = sadd.s32 %s1797, 256
    %s2466 = sshra.s32 %s2465, 3
    %s2467 = sand.u32 %s2465, 7
    %s2468 = smul.addr %s2466, 4
    %s2469 = scalar_lea.vmem [#allocation3], %s2468
    %v2470 = vld [vmem:[%s2469] sm:$0xf]
    %v2471 = vld [vmem:[%s2469 + $0x4] sm:$0xf]
    %v2472 = vld [vmem:[%s2469 + $0x8] sm:$0xf]
    %v2473 = vld [vmem:[%s2469 + $0xc] sm:$0xf]
    %v2474 = vld [vmem:[%s2469 + $0x10] sm:$0xf]
    %v2475 = vld [vmem:[%s2469 + $0x14] sm:$0xf]
    %v2476 = vld [vmem:[%s2469 + $0x18] sm:$0xf]
    %v2477 = vld [vmem:[%s2469 + $0x1c] sm:$0xf]
    %v2478 = vld [vmem:[%s2469 + $0x20] sm:$0xf]
    %v2479 = vld [vmem:[%s2469 + $0x24] sm:$0xf]
    %v2480 = vld [vmem:[%s2469 + $0x28] sm:$0xf]
    %v2481 = vld [vmem:[%s2469 + $0x2c] sm:$0xf]
    %v2482 = vld [vmem:[%s2469 + $0x30] sm:$0xf]
    %v2483 = vld [vmem:[%s2469 + $0x34] sm:$0xf]
    %v2484 = vld [vmem:[%s2469 + $0x38] sm:$0xf]
    %v2485 = vld [vmem:[%s2469 + $0x3c] sm:$0xf]
    %s2486 = scalar_lea.vmem %s2, 96
    %v2487 = vld [vmem:[%s2486] sm:$0xf]
    %v2488 = vld [vmem:[%s2486 + $0x4] sm:$0xf]
    %v2489 = vld [vmem:[%s2486 + $0x8] sm:$0xf]
    %v2490 = vld [vmem:[%s2486 + $0xc] sm:$0xf]
    %v2491 = vld [vmem:[%s2486 + $0x10] sm:$0xf]
    %v2492 = vld [vmem:[%s2486 + $0x14] sm:$0xf]
    %v2509 = vunpack.c.l.b16 %v2470
    %v2510 = vunpack.c.l.b16 %v2471
    %v2511 = vunpack.c.l.b16 %v2472
    %v2512 = vunpack.c.l.b16 %v2473
    %v2513 = vunpack.c.l.b16 %v2474
    %v2514 = vunpack.c.l.b16 %v2475
    %v2515 = vunpack.c.l.b16 %v2476
    %v2516 = vunpack.c.l.b16 %v2477
    %v2517 = vunpack.c.l.b16 %v2478
    %v2518 = vunpack.c.l.b16 %v2479
    %v2519 = vunpack.c.l.b16 %v2480
    %v2520 = vunpack.c.l.b16 %v2481
    %v2521 = vunpack.c.l.b16 %v2482
    %v2522 = vunpack.c.l.b16 %v2483
    %v2523 = vunpack.c.l.b16 %v2484
    %v2524 = vunpack.c.l.b16 %v2485
    %v2525 = vpack.c.b16 %v2510, %v2509
    %v2526 = vpack.c.b16 %v2512, %v2511
    %v2527 = vpack.c.b16 %v2514, %v2513
    %v2528 = vpack.c.b16 %v2516, %v2515
    %v2529 = vpack.c.b16 %v2518, %v2517
    %v2530 = vpack.c.b16 %v2520, %v2519
    %v2531 = vpack.c.b16 %v2522, %v2521
    %v2532 = vpack.c.b16 %v2524, %v2523
    %v2539 = vunpack.c.l.b16 %v2487
    %v2540 = vunpack.c.l.b16 %v2488
    %v2541 = vunpack.c.l.b16 %v2489
    %v2542 = vunpack.c.l.b16 %v2490
    %v2543 = vunpack.c.l.b16 %v2491
    %v2544 = vunpack.c.l.b16 %v2492
    %v2545 = vpack.c.b16 %v2540, %v2539
    %v2546 = vpack.c.b16 %v2542, %v2541
    %v2547 = vpack.c.b16 %v2544, %v2543
    %v2552 = vsel %vm1910, %v2525, 0
    %v2555 = vsel %vm1910, %v2526, 0
    %v2558 = vsel %vm1910, %v2527, 0
    %v2561 = vsel %vm1910, %v2528, 0
    %v2564 = vsel %vm1910, %v2529, 0
    %v2567 = vsel %vm1910, %v2530, 0
    %v2570 = vsel %vm1910, %v2531, 0
    %v2573 = vsel %vm1910, %v2532, 0
    %2575 = vmatpush.bf16.msra.mxu0 0
    %2576 = vmatpush.bf16.msra.mxu0 0
    %2577 = vmatpush.bf16.msra.mxu0 0
    %2578 = vmatpush.bf16.msra.mxu0 0
    %2579 = vmatpush.bf16.msra.mxu0 0
    %2580 = vmatpush.bf16.msra.mxu0 %v2547
    %2581 = vmatpush.bf16.msra.mxu0 %v2546
    %2582 = vmatpush.bf16.msra.mxu0 %v2545
    %2583 = vmatmul.bf16.gmra.mxu0 %v2552
    %v2584 = vpop.f32.mrf.mxu0
    %v2585 = vadd.f32 0.0, %v2584
    %v2586 = vpop.f32.mrf.mxu0
    %v2587 = vadd.f32 0.0, %v2586
    %2588 = vmatmul.bf16.gmra.mxu0 %v2555
    %v2589 = vpop.f32.mrf.mxu0
    %v2590 = vadd.f32 0.0, %v2589
    %v2591 = vpop.f32.mrf.mxu0
    %v2592 = vadd.f32 0.0, %v2591
    %2593 = vmatmul.bf16.gmra.mxu0 %v2558
    %v2594 = vpop.f32.mrf.mxu0
    %v2595 = vadd.f32 0.0, %v2594
    %v2596 = vpop.f32.mrf.mxu0
    %v2597 = vadd.f32 0.0, %v2596
    %2598 = vmatmul.bf16.gmra.mxu0 %v2561
    %v2599 = vpop.f32.mrf.mxu0
    %v2600 = vadd.f32 0.0, %v2599
    %v2601 = vpop.f32.mrf.mxu0
    %v2602 = vadd.f32 0.0, %v2601
    %2603 = vmatmul.bf16.gmra.mxu0 %v2564
    %v2604 = vpop.f32.mrf.mxu0
    %v2605 = vadd.f32 0.0, %v2604
    %v2606 = vpop.f32.mrf.mxu0
    %v2607 = vadd.f32 0.0, %v2606
    %2608 = vmatmul.bf16.gmra.mxu0 %v2567
    %v2609 = vpop.f32.mrf.mxu0
    %v2610 = vadd.f32 0.0, %v2609
    %v2611 = vpop.f32.mrf.mxu0
    %v2612 = vadd.f32 0.0, %v2611
    %2613 = vmatmul.bf16.gmra.mxu0 %v2570
    %v2614 = vpop.f32.mrf.mxu0
    %v2615 = vadd.f32 0.0, %v2614
    %v2616 = vpop.f32.mrf.mxu0
    %v2617 = vadd.f32 0.0, %v2616
    %2618 = vmatmul.bf16.gmra.mxu0 %v2573
    %v2619 = vpop.f32.mrf.mxu0
    %v2620 = vadd.f32 0.0, %v2619
    %v2621 = vpop.f32.mrf.mxu0
    %v2622 = vadd.f32 0.0, %v2621
    %2623 = vdwg.mxu0
    %v2624 = vadd.f32 %v2449, %v2585
    %v2625 = vadd.f32 %v2450, %v2587
    %v2626 = vadd.f32 %v2451, %v2590
    %v2627 = vadd.f32 %v2452, %v2592
    %v2628 = vadd.f32 %v2453, %v2595
    %v2629 = vadd.f32 %v2454, %v2597
    %v2630 = vadd.f32 %v2455, %v2600
    %v2631 = vadd.f32 %v2456, %v2602
    %v2632 = vadd.f32 %v2457, %v2605
    %v2633 = vadd.f32 %v2458, %v2607
    %v2634 = vadd.f32 %v2459, %v2610
    %v2635 = vadd.f32 %v2460, %v2612
    %v2636 = vadd.f32 %v2461, %v2615
    %v2637 = vadd.f32 %v2462, %v2617
    %v2638 = vadd.f32 %v2463, %v2620
    %v2639 = vadd.f32 %v2464, %v2622
    %v2640 = vlaneseq
    %v2641 = vshrl.u32 %v2640, 7
    %v2642 = vadd.s32 %v2641, 8
    %v2643 = vadd.s32 %v2641, 16
    %v2644 = vadd.s32 %v2641, 24
    %v2645 = vadd.s32 %v2641, 32
    %v2646 = vadd.s32 %v2641, 40
    %v2647 = vadd.s32 %v2641, 48
    %v2648 = vadd.s32 %v2641, 56
    %v2649 = vadd.s32 %v2641, 64
    %v2650 = vadd.s32 %v2641, 72
    %v2651 = vadd.s32 %v2641, 80
    %v2652 = vadd.s32 %v2641, 88
    %v2653 = vadd.s32 %v2641, 96
    %v2654 = vadd.s32 %v2641, 104
    %v2655 = vadd.s32 %v2641, 112
    %v2656 = vadd.s32 %v2641, 120
    %v2657 = vstv %s1797
    %v2658 = vadd.s32 %v2657, %v2641
    %v2659 = vadd.s32 %v2657, %v2642
    %v2660 = vadd.s32 %v2657, %v2643
    %v2661 = vadd.s32 %v2657, %v2644
    %v2662 = vadd.s32 %v2657, %v2645
    %v2663 = vadd.s32 %v2657, %v2646
    %v2664 = vadd.s32 %v2657, %v2647
    %v2665 = vadd.s32 %v2657, %v2648
    %v2666 = vadd.s32 %v2657, %v2649
    %v2667 = vadd.s32 %v2657, %v2650
    %v2668 = vadd.s32 %v2657, %v2651
    %v2669 = vadd.s32 %v2657, %v2652
    %v2670 = vadd.s32 %v2657, %v2653
    %v2671 = vadd.s32 %v2657, %v2654
    %v2672 = vadd.s32 %v2657, %v2655
    %v2673 = vadd.s32 %v2657, %v2656
    %v2674 = vshra.s32 %v2658, 5
    %v2675 = vshra.s32 %v2659, 5
    %v2676 = vshra.s32 %v2660, 5
    %v2677 = vshra.s32 %v2661, 5
    %v2678 = vshra.s32 %v2662, 5
    %v2679 = vshra.s32 %v2663, 5
    %v2680 = vshra.s32 %v2664, 5
    %v2681 = vshra.s32 %v2665, 5
    %v2682 = vshra.s32 %v2666, 5
    %v2683 = vshra.s32 %v2667, 5
    %v2684 = vshra.s32 %v2668, 5
    %v2685 = vshra.s32 %v2669, 5
    %v2686 = vshra.s32 %v2670, 5
    %v2687 = vshra.s32 %v2671, 5
    %v2688 = vshra.s32 %v2672, 5
    %v2689 = vshra.s32 %v2673, 5
    %v2690 = vand.u32 %v2674, 31
    %v2691 = vand.u32 %v2675, 31
    %v2692 = vand.u32 %v2676, 31
    %v2693 = vand.u32 %v2677, 31
    %v2694 = vand.u32 %v2678, 31
    %v2695 = vand.u32 %v2679, 31
    %v2696 = vand.u32 %v2680, 31
    %v2697 = vand.u32 %v2681, 31
    %v2698 = vand.u32 %v2682, 31
    %v2699 = vand.u32 %v2683, 31
    %v2700 = vand.u32 %v2684, 31
    %v2701 = vand.u32 %v2685, 31
    %v2702 = vand.u32 %v2686, 31
    %v2703 = vand.u32 %v2687, 31
    %v2704 = vand.u32 %v2688, 31
    %v2705 = vand.u32 %v2689, 31
    %v2706 = vand.u32 %v2658, 31
    %v2707 = vand.u32 %v2659, 31
    %v2708 = vand.u32 %v2660, 31
    %v2709 = vand.u32 %v2661, 31
    %v2710 = vand.u32 %v2662, 31
    %v2711 = vand.u32 %v2663, 31
    %v2712 = vand.u32 %v2664, 31
    %v2713 = vand.u32 %v2665, 31
    %v2714 = vand.u32 %v2666, 31
    %v2715 = vand.u32 %v2667, 31
    %v2716 = vand.u32 %v2668, 31
    %v2717 = vand.u32 %v2669, 31
    %v2718 = vand.u32 %v2670, 31
    %v2719 = vand.u32 %v2671, 31
    %v2720 = vand.u32 %v2672, 31
    %v2721 = vand.u32 %v2673, 31
    %vm2722 = vcmp.lt.s32.totalorder %v2658, 4096
    %vm2723 = vcmp.lt.s32.totalorder %v2659, 4096
    %vm2724 = vcmp.lt.s32.totalorder %v2660, 4096
    %vm2725 = vcmp.lt.s32.totalorder %v2661, 4096
    %vm2726 = vcmp.lt.s32.totalorder %v2662, 4096
    %vm2727 = vcmp.lt.s32.totalorder %v2663, 4096
    %vm2728 = vcmp.lt.s32.totalorder %v2664, 4096
    %vm2729 = vcmp.lt.s32.totalorder %v2665, 4096
    %vm2730 = vcmp.lt.s32.totalorder %v2666, 4096
    %vm2731 = vcmp.lt.s32.totalorder %v2667, 4096
    %vm2732 = vcmp.lt.s32.totalorder %v2668, 4096
    %vm2733 = vcmp.lt.s32.totalorder %v2669, 4096
    %vm2734 = vcmp.lt.s32.totalorder %v2670, 4096
    %vm2735 = vcmp.lt.s32.totalorder %v2671, 4096
    %vm2736 = vcmp.lt.s32.totalorder %v2672, 4096
    %vm2737 = vcmp.lt.s32.totalorder %v2673, 4096
    %vm2738 = vcmp.lt.s32.totalorder %v2690, 20
    %vm2739 = vcmp.lt.s32.totalorder %v2691, 20
    %vm2740 = vcmp.lt.s32.totalorder %v2692, 20
    %vm2741 = vcmp.lt.s32.totalorder %v2693, 20
    %vm2742 = vcmp.lt.s32.totalorder %v2694, 20
    %vm2743 = vcmp.lt.s32.totalorder %v2695, 20
    %vm2744 = vcmp.lt.s32.totalorder %v2696, 20
    %vm2745 = vcmp.lt.s32.totalorder %v2697, 20
    %vm2746 = vcmp.lt.s32.totalorder %v2698, 20
    %vm2747 = vcmp.lt.s32.totalorder %v2699, 20
    %vm2748 = vcmp.lt.s32.totalorder %v2700, 20
    %vm2749 = vcmp.lt.s32.totalorder %v2701, 20
    %vm2750 = vcmp.lt.s32.totalorder %v2702, 20
    %vm2751 = vcmp.lt.s32.totalorder %v2703, 20
    %vm2752 = vcmp.lt.s32.totalorder %v2704, 20
    %vm2753 = vcmp.lt.s32.totalorder %v2705, 20
    %vm2754 = vmand %vm2722, %vm2738
    %vm2755 = vmand %vm2723, %vm2739
    %vm2756 = vmand %vm2724, %vm2740
    %vm2757 = vmand %vm2725, %vm2741
    %vm2758 = vmand %vm2726, %vm2742
    %vm2759 = vmand %vm2727, %vm2743
    %vm2760 = vmand %vm2728, %vm2744
    %vm2761 = vmand %vm2729, %vm2745
    %vm2762 = vmand %vm2730, %vm2746
    %vm2763 = vmand %vm2731, %vm2747
    %vm2764 = vmand %vm2732, %vm2748
    %vm2765 = vmand %vm2733, %vm2749
    %vm2766 = vmand %vm2734, %vm2750
    %vm2767 = vmand %vm2735, %vm2751
    %vm2768 = vmand %vm2736, %vm2752
    %vm2769 = vmand %vm2737, %vm2753
    %vm2770 = vcmp.lt.s32.totalorder %v2706, 20
    %vm2771 = vcmp.lt.s32.totalorder %v2707, 20
    %vm2772 = vcmp.lt.s32.totalorder %v2708, 20
    %vm2773 = vcmp.lt.s32.totalorder %v2709, 20
    %vm2774 = vcmp.lt.s32.totalorder %v2710, 20
    %vm2775 = vcmp.lt.s32.totalorder %v2711, 20
    %vm2776 = vcmp.lt.s32.totalorder %v2712, 20
    %vm2777 = vcmp.lt.s32.totalorder %v2713, 20
    %vm2778 = vcmp.lt.s32.totalorder %v2714, 20
    %vm2779 = vcmp.lt.s32.totalorder %v2715, 20
    %vm2780 = vcmp.lt.s32.totalorder %v2716, 20
    %vm2781 = vcmp.lt.s32.totalorder %v2717, 20
    %vm2782 = vcmp.lt.s32.totalorder %v2718, 20
    %vm2783 = vcmp.lt.s32.totalorder %v2719, 20
    %vm2784 = vcmp.lt.s32.totalorder %v2720, 20
    %vm2785 = vcmp.lt.s32.totalorder %v2721, 20
    %vm2786 = vmand %vm2754, %vm2770
    %vm2787 = vmand %vm2755, %vm2771
    %vm2788 = vmand %vm2756, %vm2772
    %vm2789 = vmand %vm2757, %vm2773
    %vm2790 = vmand %vm2758, %vm2774
    %vm2791 = vmand %vm2759, %vm2775
    %vm2792 = vmand %vm2760, %vm2776
    %vm2793 = vmand %vm2761, %vm2777
    %vm2794 = vmand %vm2762, %vm2778
    %vm2795 = vmand %vm2763, %vm2779
    %vm2796 = vmand %vm2764, %vm2780
    %vm2797 = vmand %vm2765, %vm2781
    %vm2798 = vmand %vm2766, %vm2782
    %vm2799 = vmand %vm2767, %vm2783
    %vm2800 = vmand %vm2768, %vm2784
    %vm2801 = vmand %vm2769, %vm2785
    %v2802 = vand.u32 %v2690, 1
    %v2803 = vand.u32 %v2691, 1
    %v2804 = vand.u32 %v2692, 1
    %v2805 = vand.u32 %v2693, 1
    %v2806 = vand.u32 %v2694, 1
    %v2807 = vand.u32 %v2695, 1
    %v2808 = vand.u32 %v2696, 1
    %v2809 = vand.u32 %v2697, 1
    %v2810 = vand.u32 %v2698, 1
    %v2811 = vand.u32 %v2699, 1
    %v2812 = vand.u32 %v2700, 1
    %v2813 = vand.u32 %v2701, 1
    %v2814 = vand.u32 %v2702, 1
    %v2815 = vand.u32 %v2703, 1
    %v2816 = vand.u32 %v2704, 1
    %v2817 = vand.u32 %v2705, 1
    %vm2818 = vcmp.eq.s32.totalorder %v2802, 0
    %vm2819 = vcmp.eq.s32.totalorder %v2803, 0
    %vm2820 = vcmp.eq.s32.totalorder %v2804, 0
    %vm2821 = vcmp.eq.s32.totalorder %v2805, 0
    %vm2822 = vcmp.eq.s32.totalorder %v2806, 0
    %vm2823 = vcmp.eq.s32.totalorder %v2807, 0
    %vm2824 = vcmp.eq.s32.totalorder %v2808, 0
    %vm2825 = vcmp.eq.s32.totalorder %v2809, 0
    %vm2826 = vcmp.eq.s32.totalorder %v2810, 0
    %vm2827 = vcmp.eq.s32.totalorder %v2811, 0
    %vm2828 = vcmp.eq.s32.totalorder %v2812, 0
    %vm2829 = vcmp.eq.s32.totalorder %v2813, 0
    %vm2830 = vcmp.eq.s32.totalorder %v2814, 0
    %vm2831 = vcmp.eq.s32.totalorder %v2815, 0
    %vm2832 = vcmp.eq.s32.totalorder %v2816, 0
    %vm2833 = vcmp.eq.s32.totalorder %v2817, 0
    %vm2834 = vmand %vm2786, %vm2818
    %vm2835 = vmand %vm2787, %vm2819
    %vm2836 = vmand %vm2788, %vm2820
    %vm2837 = vmand %vm2789, %vm2821
    %vm2838 = vmand %vm2790, %vm2822
    %vm2839 = vmand %vm2791, %vm2823
    %vm2840 = vmand %vm2792, %vm2824
    %vm2841 = vmand %vm2793, %vm2825
    %vm2842 = vmand %vm2794, %vm2826
    %vm2843 = vmand %vm2795, %vm2827
    %vm2844 = vmand %vm2796, %vm2828
    %vm2845 = vmand %vm2797, %vm2829
    %vm2846 = vmand %vm2798, %vm2830
    %vm2847 = vmand %vm2799, %vm2831
    %vm2848 = vmand %vm2800, %vm2832
    %vm2849 = vmand %vm2801, %vm2833
    %v2850 = vand.u32 %v2706, 1
    %v2851 = vand.u32 %v2707, 1
    %v2852 = vand.u32 %v2708, 1
    %v2853 = vand.u32 %v2709, 1
    %v2854 = vand.u32 %v2710, 1
    %v2855 = vand.u32 %v2711, 1
    %v2856 = vand.u32 %v2712, 1
    %v2857 = vand.u32 %v2713, 1
    %v2858 = vand.u32 %v2714, 1
    %v2859 = vand.u32 %v2715, 1
    %v2860 = vand.u32 %v2716, 1
    %v2861 = vand.u32 %v2717, 1
    %v2862 = vand.u32 %v2718, 1
    %v2863 = vand.u32 %v2719, 1
    %v2864 = vand.u32 %v2720, 1
    %v2865 = vand.u32 %v2721, 1
    %vm2866 = vcmp.eq.s32.totalorder %v2850, 0
    %vm2867 = vcmp.eq.s32.totalorder %v2851, 0
    %vm2868 = vcmp.eq.s32.totalorder %v2852, 0
    %vm2869 = vcmp.eq.s32.totalorder %v2853, 0
    %vm2870 = vcmp.eq.s32.totalorder %v2854, 0
    %vm2871 = vcmp.eq.s32.totalorder %v2855, 0
    %vm2872 = vcmp.eq.s32.totalorder %v2856, 0
    %vm2873 = vcmp.eq.s32.totalorder %v2857, 0
    %vm2874 = vcmp.eq.s32.totalorder %v2858, 0
    %vm2875 = vcmp.eq.s32.totalorder %v2859, 0
    %vm2876 = vcmp.eq.s32.totalorder %v2860, 0
    %vm2877 = vcmp.eq.s32.totalorder %v2861, 0
    %vm2878 = vcmp.eq.s32.totalorder %v2862, 0
    %vm2879 = vcmp.eq.s32.totalorder %v2863, 0
    %vm2880 = vcmp.eq.s32.totalorder %v2864, 0
    %vm2881 = vcmp.eq.s32.totalorder %v2865, 0
    %vm2882 = vmand %vm2834, %vm2866
    %vm2883 = vmand %vm2835, %vm2867
    %vm2884 = vmand %vm2836, %vm2868
    %vm2885 = vmand %vm2837, %vm2869
    %vm2886 = vmand %vm2838, %vm2870
    %vm2887 = vmand %vm2839, %vm2871
    %vm2888 = vmand %vm2840, %vm2872
    %vm2889 = vmand %vm2841, %vm2873
    %vm2890 = vmand %vm2842, %vm2874
    %vm2891 = vmand %vm2843, %vm2875
    %vm2892 = vmand %vm2844, %vm2876
    %vm2893 = vmand %vm2845, %vm2877
    %vm2894 = vmand %vm2846, %vm2878
    %vm2895 = vmand %vm2847, %vm2879
    %vm2896 = vmand %vm2848, %vm2880
    %vm2897 = vmand %vm2849, %vm2881
    %v2898 = vsel %vm2882, 1, 0
    %v2899 = vsel %vm2883, 1, 0
    %v2900 = vsel %vm2884, 1, 0
    %v2901 = vsel %vm2885, 1, 0
    %v2902 = vsel %vm2886, 1, 0
    %v2903 = vsel %vm2887, 1, 0
    %v2904 = vsel %vm2888, 1, 0
    %v2905 = vsel %vm2889, 1, 0
    %v2906 = vsel %vm2890, 1, 0
    %v2907 = vsel %vm2891, 1, 0
    %v2908 = vsel %vm2892, 1, 0
    %v2909 = vsel %vm2893, 1, 0
    %v2910 = vsel %vm2894, 1, 0
    %v2911 = vsel %vm2895, 1, 0
    %v2912 = vsel %vm2896, 1, 0
    %v2913 = vsel %vm2897, 1, 0
    %v2914 = vcvt.s32.f32 %v2898
    %v2915 = vcvt.s32.f32 %v2899
    %v2916 = vcvt.s32.f32 %v2900
    %v2917 = vcvt.s32.f32 %v2901
    %v2918 = vcvt.s32.f32 %v2902
    %v2919 = vcvt.s32.f32 %v2903
    %v2920 = vcvt.s32.f32 %v2904
    %v2921 = vcvt.s32.f32 %v2905
    %v2922 = vcvt.s32.f32 %v2906
    %v2923 = vcvt.s32.f32 %v2907
    %v2924 = vcvt.s32.f32 %v2908
    %v2925 = vcvt.s32.f32 %v2909
    %v2926 = vcvt.s32.f32 %v2910
    %v2927 = vcvt.s32.f32 %v2911
    %v2928 = vcvt.s32.f32 %v2912
    %v2929 = vcvt.s32.f32 %v2913
    %v2930 = vmul.f32 %v2624, %v2914
    %v2931 = vmul.f32 %v2625, %v2915
    %v2932 = vmul.f32 %v2626, %v2916
    %v2933 = vmul.f32 %v2627, %v2917
    %v2934 = vmul.f32 %v2628, %v2918
    %v2935 = vmul.f32 %v2629, %v2919
    %v2936 = vmul.f32 %v2630, %v2920
    %v2937 = vmul.f32 %v2631, %v2921
    %v2938 = vmul.f32 %v2632, %v2922
    %v2939 = vmul.f32 %v2633, %v2923
    %v2940 = vmul.f32 %v2634, %v2924
    %v2941 = vmul.f32 %v2635, %v2925
    %v2942 = vmul.f32 %v2636, %v2926
    %v2943 = vmul.f32 %v2637, %v2927
    %v2944 = vmul.f32 %v2638, %v2928
    %v2945 = vmul.f32 %v2639, %v2929
    %s2946 = scalar_lea.vmem [#allocation4], %s1797
    %vm2947 = vcmask 130048
    %2948 = vst.msk [vmem:[%s2946] sm:$0xff] %vm2947, %v2930
    %2949 = vst.msk [vmem:[%s2946 + $0x8] sm:$0xff] %vm2947, %v2931
    %2950 = vst.msk [vmem:[%s2946 + $0x10] sm:$0xff] %vm2947, %v2932
    %2951 = vst.msk [vmem:[%s2946 + $0x18] sm:$0xff] %vm2947, %v2933
    %2952 = vst.msk [vmem:[%s2946 + $0x20] sm:$0xff] %vm2947, %v2934
    %2953 = vst.msk [vmem:[%s2946 + $0x28] sm:$0xff] %vm2947, %v2935
    %2954 = vst.msk [vmem:[%s2946 + $0x30] sm:$0xff] %vm2947, %v2936
    %2955 = vst.msk [vmem:[%s2946 + $0x38] sm:$0xff] %vm2947, %v2937
    %2956 = vst.msk [vmem:[%s2946 + $0x40] sm:$0xff] %vm2947, %v2938
    %2957 = vst.msk [vmem:[%s2946 + $0x48] sm:$0xff] %vm2947, %v2939
    %2958 = vst.msk [vmem:[%s2946 + $0x50] sm:$0xff] %vm2947, %v2940
    %2959 = vst.msk [vmem:[%s2946 + $0x58] sm:$0xff] %vm2947, %v2941
    %2960 = vst.msk [vmem:[%s2946 + $0x60] sm:$0xff] %vm2947, %v2942
    %2961 = vst.msk [vmem:[%s2946 + $0x68] sm:$0xff] %vm2947, %v2943
    %2962 = vst.msk [vmem:[%s2946 + $0x70] sm:$0xff] %vm2947, %v2944
    %2963 = vst.msk [vmem:[%s2946 + $0x78] sm:$0xff] %vm2947, %v2945
    %v2964 = vsel %vm2947, %v2930, 0.0
    %v2965 = vsel %vm2947, %v2931, 0.0
    %v2966 = vadd.f32 %v2964, %v2965
    %v2967 = vsel %vm2947, %v2932, 0.0
    %v2968 = vadd.f32 %v2966, %v2967
    %v2969 = vsel %vm2947, %v2933, 0.0
    %v2970 = vadd.f32 %v2968, %v2969
    %v2971 = vsel %vm2947, %v2934, 0.0
    %v2972 = vadd.f32 %v2970, %v2971
    %v2973 = vsel %vm2947, %v2935, 0.0
    %v2974 = vadd.f32 %v2972, %v2973
    %v2975 = vsel %vm2947, %v2936, 0.0
    %v2976 = vadd.f32 %v2974, %v2975
    %v2977 = vsel %vm2947, %v2937, 0.0
    %v2978 = vadd.f32 %v2976, %v2977
    %v2979 = vsel %vm2947, %v2938, 0.0
    %v2980 = vadd.f32 %v2978, %v2979
    %v2981 = vsel %vm2947, %v2939, 0.0
    %v2982 = vadd.f32 %v2980, %v2981
    %v2983 = vsel %vm2947, %v2940, 0.0
    %v2984 = vadd.f32 %v2982, %v2983
    %v2985 = vsel %vm2947, %v2941, 0.0
    %v2986 = vadd.f32 %v2984, %v2985
    %v2987 = vsel %vm2947, %v2942, 0.0
    %v2988 = vadd.f32 %v2986, %v2987
    %v2989 = vsel %vm2947, %v2943, 0.0
    %v2990 = vadd.f32 %v2988, %v2989
    %v2991 = vsel %vm2947, %v2944, 0.0
    %v2992 = vadd.f32 %v2990, %v2991
    %v2993 = vsel %vm2947, %v2945, 0.0
    %v2994 = vadd.f32 %v2992, %v2993
    %v2995 = vrot.slane %v2994, 4
    %v2996 = vadd.f32 %v2994, %v2995
    %v2997 = vrot.slane %v2996, 2
    %v2998 = vadd.f32 %v2996, %v2997
    %v2999 = vrot.slane %v2998, 1
    %v3000 = vadd.f32 %v2998, %v2999
    %v3001 = vadd.f32 %v1795, %v3000
    %v3002 = vmul.f32 %v2930, %v2930
    %v3003 = vmul.f32 %v2931, %v2931
    %v3004 = vmul.f32 %v2932, %v2932
    %v3005 = vmul.f32 %v2933, %v2933
    %v3006 = vmul.f32 %v2934, %v2934
    %v3007 = vmul.f32 %v2935, %v2935
    %v3008 = vmul.f32 %v2936, %v2936
    %v3009 = vmul.f32 %v2937, %v2937
    %v3010 = vmul.f32 %v2938, %v2938
    %v3011 = vmul.f32 %v2939, %v2939
    %v3012 = vmul.f32 %v2940, %v2940
    %v3013 = vmul.f32 %v2941, %v2941
    %v3014 = vmul.f32 %v2942, %v2942
    %v3015 = vmul.f32 %v2943, %v2943
    %v3016 = vmul.f32 %v2944, %v2944
    %v3017 = vmul.f32 %v2945, %v2945
    %v3018 = vsel %vm2947, %v3002, 0.0
    %v3019 = vsel %vm2947, %v3003, 0.0
    %v3020 = vadd.f32 %v3018, %v3019
    %v3021 = vsel %vm2947, %v3004, 0.0
    %v3022 = vadd.f32 %v3020, %v3021
    %v3023 = vsel %vm2947, %v3005, 0.0
    %v3024 = vadd.f32 %v3022, %v3023
    %v3025 = vsel %vm2947, %v3006, 0.0
    %v3026 = vadd.f32 %v3024, %v3025
    %v3027 = vsel %vm2947, %v3007, 0.0
    %v3028 = vadd.f32 %v3026, %v3027
    %v3029 = vsel %vm2947, %v3008, 0.0
    %v3030 = vadd.f32 %v3028, %v3029
    %v3031 = vsel %vm2947, %v3009, 0.0
    %v3032 = vadd.f32 %v3030, %v3031
    %v3033 = vsel %vm2947, %v3010, 0.0
    %v3034 = vadd.f32 %v3032, %v3033
    %v3035 = vsel %vm2947, %v3011, 0.0
    %v3036 = vadd.f32 %v3034, %v3035
    %v3037 = vsel %vm2947, %v3012, 0.0
    %v3038 = vadd.f32 %v3036, %v3037
    %v3039 = vsel %vm2947, %v3013, 0.0
    %v3040 = vadd.f32 %v3038, %v3039
    %v3041 = vsel %vm2947, %v3014, 0.0
    %v3042 = vadd.f32 %v3040, %v3041
    %v3043 = vsel %vm2947, %v3015, 0.0
    %v3044 = vadd.f32 %v3042, %v3043
    %v3045 = vsel %vm2947, %v3016, 0.0
    %v3046 = vadd.f32 %v3044, %v3045
    %v3047 = vsel %vm2947, %v3017, 0.0
    %v3048 = vadd.f32 %v3046, %v3047
    %v3049 = vrot.slane %v3048, 4
    %v3050 = vadd.f32 %v3048, %v3049
    %v3051 = vrot.slane %v3050, 2
    %v3052 = vadd.f32 %v3050, %v3051
    %v3053 = vrot.slane %v3052, 1
    %v3054 = vadd.f32 %v3052, %v3053
    %v3055 = vadd.f32 %v1796, %v3054
  $region40: #{net_forward.2} parent=0 // loop_footer
    %s1794 = sadd.s32 1, %s1790
  $region41: #{net_forward.2} parent=0 // loop_footer_branch
    %1789 = sbr.rel target = $region37
  $region42: #{net_forward.2} parent=0 // loop_exit
    _
  %v3056 = vmul.f32 %v1795, 0.0025
  %v3057 = vmul.f32 %v1796, 0.0025
  %v3058 = vmul.f32 %v3056, %v3056
  %v3059 = vsub.f32 %v3057, %v3058
  %v3060 = vmax.f32 %v3059, 0.0
  %v3061 = vld [vmem:[%s4] sm:$0x1]
  %v3062 = vadd.f32 %v3060, 1e-05
  %v3063 = vrsqrt.pop %v3062
  %v3064 = vmul.f32 %v3063, %v3062
  %v3065 = vmul.f32 %v3064, %v3063
  %v3066 = vmul.f32 0.5, %v3065
  %v3067 = vsub.f32 1.5, %v3066
  %v3068 = vmul.f32 %v3063, %v3067
  %vm3069 = vweird.f32 %v3062
  %vm3070 = vweird.f32 %v3063
  %vm3071 = vmor %vm3069, %vm3070
  %v3072 = vsel %vm3071, %v3063, %v3068
  %v3073 = vmul.f32 %v3061, %v3072
  %v3074 = vld [vmem:[%s4 + $0x1] sm:$0x1]
  %v3075 = vmul.f32 %v3056, %v3073
  %v3076 = vsub.f32 %v3074, %v3075
  loop: start=0, step=1, limit=32
  $region43: #{net_forward.2} parent=0 // loop_pre_header
    _
  $region44: #{net_forward.2} parent=0 // loop_header
    %s3078 = sphi 0, %s3082
    %p3079 = scmp.ge.s32.totalorder %s3078, 32
  $region45: #{net_forward.2} parent=0 // loop_header_branch
    %3081 = sbr.rel (%p3079) target = $region49
  $region46: #{net_forward.2} parent=0 // loop_body
    %s3083 = smul.u32 %s3078, 128
    %s3084 = scalar_lea.vmem [#allocation4], %s3083
    %v3085 = vld [vmem:[%s3084] sm:$0xff]
    %v3086 = vld [vmem:[%s3084 + $0x8] sm:$0xff]
    %v3087 = vld [vmem:[%s3084 + $0x10] sm:$0xff]
    %v3088 = vld [vmem:[%s3084 + $0x18] sm:$0xff]
    %v3089 = vld [vmem:[%s3084 + $0x20] sm:$0xff]
    %v3090 = vld [vmem:[%s3084 + $0x28] sm:$0xff]
    %v3091 = vld [vmem:[%s3084 + $0x30] sm:$0xff]
    %v3092 = vld [vmem:[%s3084 + $0x38] sm:$0xff]
    %v3093 = vld [vmem:[%s3084 + $0x40] sm:$0xff]
    %v3094 = vld [vmem:[%s3084 + $0x48] sm:$0xff]
    %v3095 = vld [vmem:[%s3084 + $0x50] sm:$0xff]
    %v3096 = vld [vmem:[%s3084 + $0x58] sm:$0xff]
    %v3097 = vld [vmem:[%s3084 + $0x60] sm:$0xff]
    %v3098 = vld [vmem:[%s3084 + $0x68] sm:$0xff]
    %v3099 = vld [vmem:[%s3084 + $0x70] sm:$0xff]
    %v3100 = vld [vmem:[%s3084 + $0x78] sm:$0xff]
    %v3101 = vld [vmem:[%s3084 + $0x80] sm:$0xff]
    %v3102 = vld [vmem:[%s3084 + $0x88] sm:$0xff]
    %v3103 = vld [vmem:[%s3084 + $0x90] sm:$0xff]
    %v3104 = vld [vmem:[%s3084 + $0x98] sm:$0xff]
    %v3105 = vld [vmem:[%s3084 + $0xa0] sm:$0xff]
    %v3106 = vld [vmem:[%s3084 + $0xa8] sm:$0xff]
    %v3107 = vld [vmem:[%s3084 + $0xb0] sm:$0xff]
    %v3108 = vld [vmem:[%s3084 + $0xb8] sm:$0xff]
    %v3109 = vld [vmem:[%s3084 + $0xc0] sm:$0xff]
    %v3110 = vperm.slane %v3073, 0
    %v3111 = vmul.f32 %v3085, %v3110
    %v3112 = vmul.f32 %v3086, %v3110
    %v3113 = vmul.f32 %v3087, %v3110
    %v3114 = vmul.f32 %v3088, %v3110
    %v3115 = vmul.f32 %v3089, %v3110
    %v3116 = vmul.f32 %v3090, %v3110
    %v3117 = vmul.f32 %v3091, %v3110
    %v3118 = vmul.f32 %v3092, %v3110
    %v3119 = vmul.f32 %v3093, %v3110
    %v3120 = vmul.f32 %v3094, %v3110
    %v3121 = vmul.f32 %v3095, %v3110
    %v3122 = vmul.f32 %v3096, %v3110
    %v3123 = vmul.f32 %v3097, %v3110
    %v3124 = vmul.f32 %v3098, %v3110
    %v3125 = vmul.f32 %v3099, %v3110
    %v3126 = vmul.f32 %v3100, %v3110
    %v3127 = vmul.f32 %v3101, %v3110
    %v3128 = vmul.f32 %v3102, %v3110
    %v3129 = vmul.f32 %v3103, %v3110
    %v3130 = vmul.f32 %v3104, %v3110
    %v3131 = vmul.f32 %v3105, %v3110
    %v3132 = vmul.f32 %v3106, %v3110
    %v3133 = vmul.f32 %v3107, %v3110
    %v3134 = vmul.f32 %v3108, %v3110
    %v3135 = vmul.f32 %v3109, %v3110
    %v3136 = vperm.slane %v3076, 0
    %v3137 = vadd.f32 %v3111, %v3136
    %v3138 = vadd.f32 %v3112, %v3136
    %v3139 = vadd.f32 %v3113, %v3136
    %v3140 = vadd.f32 %v3114, %v3136
    %v3141 = vadd.f32 %v3115, %v3136
    %v3142 = vadd.f32 %v3116, %v3136
    %v3143 = vadd.f32 %v3117, %v3136
    %v3144 = vadd.f32 %v3118, %v3136
    %v3145 = vadd.f32 %v3119, %v3136
    %v3146 = vadd.f32 %v3120, %v3136
    %v3147 = vadd.f32 %v3121, %v3136
    %v3148 = vadd.f32 %v3122, %v3136
    %v3149 = vadd.f32 %v3123, %v3136
    %v3150 = vadd.f32 %v3124, %v3136
    %v3151 = vadd.f32 %v3125, %v3136
    %v3152 = vadd.f32 %v3126, %v3136
    %v3153 = vadd.f32 %v3127, %v3136
    %v3154 = vadd.f32 %v3128, %v3136
    %v3155 = vadd.f32 %v3129, %v3136
    %v3156 = vadd.f32 %v3130, %v3136
    %v3157 = vadd.f32 %v3131, %v3136
    %v3158 = vadd.f32 %v3132, %v3136
    %v3159 = vadd.f32 %v3133, %v3136
    %v3160 = vadd.f32 %v3134, %v3136
    %v3161 = vadd.f32 %v3135, %v3136
    %v3162 = vmax.f32 %v3137, 0.0
    %v3163 = vmax.f32 %v3138, 0.0
    %v3164 = vmax.f32 %v3139, 0.0
    %v3165 = vmax.f32 %v3140, 0.0
    %v3166 = vmax.f32 %v3141, 0.0
    %v3167 = vmax.f32 %v3142, 0.0
    %v3168 = vmax.f32 %v3143, 0.0
    %v3169 = vmax.f32 %v3144, 0.0
    %v3170 = vmax.f32 %v3145, 0.0
    %v3171 = vmax.f32 %v3146, 0.0
    %v3172 = vmax.f32 %v3147, 0.0
    %v3173 = vmax.f32 %v3148, 0.0
    %v3174 = vmax.f32 %v3149, 0.0
    %v3175 = vmax.f32 %v3150, 0.0
    %v3176 = vmax.f32 %v3151, 0.0
    %v3177 = vmax.f32 %v3152, 0.0
    %v3178 = vmax.f32 %v3153, 0.0
    %v3179 = vmax.f32 %v3154, 0.0
    %v3180 = vmax.f32 %v3155, 0.0
    %v3181 = vmax.f32 %v3156, 0.0
    %v3182 = vmax.f32 %v3157, 0.0
    %v3183 = vmax.f32 %v3158, 0.0
    %v3184 = vmax.f32 %v3159, 0.0
    %v3185 = vmax.f32 %v3160, 0.0
    %v3186 = vmax.f32 %v3161, 0.0
    %vm3204 = vcmask 1045504
    %v3205 = vrot.slane %v3162, 2
    %v3206 = vrot.slane %v3163, 2
    %v3207 = vsel %vm3204, %v3205, %v3206
    %v3208 = vrot.slane %v3164, 2
    %v3209 = vsel %vm3204, %v3206, %v3208
    %v3210 = vrot.slane %v3165, 2
    %v3211 = vsel %vm3204, %v3208, %v3210
    %v3212 = vrot.slane %v3166, 2
    %v3213 = vsel %vm3204, %v3210, %v3212
    %v3214 = vrot.slane %v3167, 2
    %v3215 = vsel %vm3204, %v3212, %v3214
    %v3216 = vrot.slane %v3168, 2
    %v3217 = vsel %vm3204, %v3214, %v3216
    %v3218 = vrot.slane %v3169, 2
    %v3219 = vsel %vm3204, %v3216, %v3218
    %v3220 = vrot.slane %v3170, 2
    %v3221 = vsel %vm3204, %v3218, %v3220
    %v3222 = vrot.slane %v3171, 2
    %v3223 = vsel %vm3204, %v3220, %v3222
    %v3224 = vrot.slane %v3172, 2
    %v3225 = vsel %vm3204, %v3222, %v3224
    %v3226 = vrot.slane %v3173, 2
    %v3227 = vsel %vm3204, %v3224, %v3226
    %v3228 = vrot.slane %v3174, 2
    %v3229 = vsel %vm3204, %v3226, %v3228
    %v3230 = vrot.slane %v3175, 2
    %v3231 = vsel %vm3204, %v3228, %v3230
    %v3232 = vrot.slane %v3176, 2
    %v3233 = vsel %vm3204, %v3230, %v3232
    %v3234 = vrot.slane %v3177, 2
    %v3235 = vsel %vm3204, %v3232, %v3234
    %v3236 = vrot.slane %v3178, 2
    %v3237 = vsel %vm3204, %v3234, %v3236
    %v3254 = vmax.f32 %v3162, %v3207
    %v3255 = vmax.f32 %v3163, %v3209
    %v3256 = vmax.f32 %v3164, %v3211
    %v3257 = vmax.f32 %v3165, %v3213
    %v3258 = vmax.f32 %v3166, %v3215
    %v3259 = vmax.f32 %v3167, %v3217
    %v3260 = vmax.f32 %v3168, %v3219
    %v3261 = vmax.f32 %v3169, %v3221
    %v3262 = vmax.f32 %v3170, %v3223
    %v3263 = vmax.f32 %v3171, %v3225
    %v3264 = vmax.f32 %v3172, %v3227
    %v3265 = vmax.f32 %v3173, %v3229
    %v3266 = vmax.f32 %v3174, %v3231
    %v3267 = vmax.f32 %v3175, %v3233
    %v3268 = vmax.f32 %v3176, %v3235
    %v3269 = vmax.f32 %v3177, %v3237
    %v3278 = vrot.slane %v3179, 2
    %v3279 = vsel %vm3204, %v3236, %v3278
    %v3280 = vrot.slane %v3180, 2
    %v3281 = vsel %vm3204, %v3278, %v3280
    %v3282 = vrot.slane %v3181, 2
    %v3283 = vsel %vm3204, %v3280, %v3282
    %v3284 = vrot.slane %v3182, 2
    %v3285 = vsel %vm3204, %v3282, %v3284
    %v3286 = vrot.slane %v3183, 2
    %v3287 = vsel %vm3204, %v3284, %v3286
    %v3288 = vrot.slane %v3184, 2
    %v3289 = vsel %vm3204, %v3286, %v3288
    %v3290 = vrot.slane %v3185, 2
    %v3291 = vsel %vm3204, %v3288, %v3290
    %v3292 = vrot.slane %v3186, 2
    %v3293 = vsel %vm3204, %v3290, %v3292
    %v3302 = vmax.f32 %v3178, %v3279
    %v3303 = vmax.f32 %v3179, %v3281
    %v3304 = vmax.f32 %v3180, %v3283
    %v3305 = vmax.f32 %v3181, %v3285
    %v3306 = vmax.f32 %v3182, %v3287
    %v3307 = vmax.f32 %v3183, %v3289
    %v3308 = vmax.f32 %v3184, %v3291
    %v3309 = vmax.f32 %v3185, %v3293
    %v3310 = vmax.f32 %v3254, %v3262
    %v3311 = vmax.f32 %v3255, %v3263
    %v3312 = vmax.f32 %v3256, %v3264
    %v3313 = vmax.f32 %v3257, %v3265
    %v3314 = vmax.f32 %v3258, %v3266
    %v3315 = vmax.f32 %v3259, %v3267
    %v3316 = vmax.f32 %v3260, %v3268
    %v3317 = vmax.f32 %v3261, %v3269
    %v3318 = vmax.f32 %v3262, %v3302
    %v3319 = vmax.f32 %v3263, %v3303
    %v3320 = vmax.f32 %v3264, %v3304
    %v3321 = vmax.f32 %v3265, %v3305
    %v3322 = vmax.f32 %v3266, %v3306
    %v3323 = vmax.f32 %v3267, %v3307
    %v3324 = vmax.f32 %v3268, %v3308
    %v3325 = vmax.f32 %v3269, %v3309
    %v3326 = vpack.c.bf16 %v3310, %v3310
    %v3327 = vpack.c.bf16 %v3311, %v3311
    %v3328 = vpack.c.bf16 %v3312, %v3312
    %v3329 = vpack.c.bf16 %v3313, %v3313
    %v3330 = vpack.c.bf16 %v3314, %v3314
    %v3331 = vpack.c.bf16 %v3315, %v3315
    %v3332 = vpack.c.bf16 %v3316, %v3316
    %v3333 = vpack.c.bf16 %v3317, %v3317
    %v3334 = vpack.c.bf16 %v3318, %v3318
    %v3335 = vpack.c.bf16 %v3319, %v3319
    %v3336 = vpack.c.bf16 %v3320, %v3320
    %v3337 = vpack.c.bf16 %v3321, %v3321
    %v3338 = vpack.c.bf16 %v3322, %v3322
    %v3339 = vpack.c.bf16 %v3323, %v3323
    %v3340 = vpack.c.bf16 %v3324, %v3324
    %v3341 = vpack.c.bf16 %v3325, %v3325
    %s3342 = sshra.s32 %s3083, 3
    %s3343 = sand.u32 %s3083, 7
    %s3344 = smul.addr %s3342, 4
    %s3345 = scalar_lea.vmem %s5, %s3344
    %vm3346 = vcmask 125952
    %3347 = vst.msk [vmem:[%s3345] sm:$0xf] %vm3346, %v3326
    %3348 = vst.msk [vmem:[%s3345 + $0x4] sm:$0xf] %vm3346, %v3327
    %3349 = vst.msk [vmem:[%s3345 + $0x8] sm:$0xf] %vm3346, %v3328
    %3350 = vst.msk [vmem:[%s3345 + $0xc] sm:$0xf] %vm3346, %v3329
    %3351 = vst.msk [vmem:[%s3345 + $0x10] sm:$0xf] %vm3346, %v3330
    %3352 = vst.msk [vmem:[%s3345 + $0x14] sm:$0xf] %vm3346, %v3331
    %3353 = vst.msk [vmem:[%s3345 + $0x18] sm:$0xf] %vm3346, %v3332
    %3354 = vst.msk [vmem:[%s3345 + $0x1c] sm:$0xf] %vm3346, %v3333
    %3355 = vst.msk [vmem:[%s3345 + $0x20] sm:$0xf] %vm3346, %v3334
    %3356 = vst.msk [vmem:[%s3345 + $0x24] sm:$0xf] %vm3346, %v3335
    %3357 = vst.msk [vmem:[%s3345 + $0x28] sm:$0xf] %vm3346, %v3336
    %3358 = vst.msk [vmem:[%s3345 + $0x2c] sm:$0xf] %vm3346, %v3337
    %3359 = vst.msk [vmem:[%s3345 + $0x30] sm:$0xf] %vm3346, %v3338
    %3360 = vst.msk [vmem:[%s3345 + $0x34] sm:$0xf] %vm3346, %v3339
    %3361 = vst.msk [vmem:[%s3345 + $0x38] sm:$0xf] %vm3346, %v3340
    %3362 = vst.msk [vmem:[%s3345 + $0x3c] sm:$0xf] %vm3346, %v3341
  $region47: #{net_forward.2} parent=0 // loop_footer
    %s3082 = sadd.s32 1, %s3078
  $region48: #{net_forward.2} parent=0 // loop_footer_branch
    %3077 = sbr.rel target = $region44
  $region49: #{net_forward.2} parent=0 // loop_exit
    _
  // Predicated region
  $region50: #{net_forward.2} parent=0 // pred_check
    _
  $region51: #{net_forward.2} parent=0 // pred_check_branch
    %3364 = sbr.rel (0) target = $region53
  $region52: #{net_forward.2} parent=0 // pred_region
    _
  $region53: #{net_forward.2} parent=0 // pred_fallthru
    _
  // Predicated region
  $region54: #{net_forward.2} parent=0 // pred_check
    _
  $region55: #{net_forward.2} parent=0 // pred_check_branch
    %3366 = sbr.rel (0) target = $region57
  $region56: #{net_forward.2} parent=0 // pred_region
    _
  $region57: #{net_forward.2} parent=0 // pred_fallthru
    _

</llo_original>
